<compile_context>
chip_gen: v5e
topology: v5e:2x2
jax: 0.10.0
libtpu: 0.0.40
codegen_flags: <defaults>
</compile_context>

<pallas_src>
import numpy as np
import jax
import jax.numpy as jnp
from jax.experimental import pallas as pl
from jax.experimental.pallas import tpu as pltpu


# ---------------------------------------------------------------------------
# Fused forward kernel: one grid step == one batch element.
#
# Activation layout inside the kernel: "extended flat rows"
#   ext buffer rows = [guard row | top halo row | H board rows | bottom halo
#   row | guard row], each of width WP = W + 2 (1 halo column per side),
#   flattened row-major to ((H+4)*WP, C).  A 3x3 conv then becomes 9 matmuls
#   over band slices shifted by (dy*WP + dx) in the flat index.
# ---------------------------------------------------------------------------

def _make_fused_kernel(H, W):
    WP = W + 2                      # padded board width
    BAND = H * WP                   # compute band: all board rows, all columns
    TOP = 2 * WP                    # band start offset inside the ext buffer
    NPAD_EXT = (H + 4) * WP         # total rows of the ext buffer
    SHIFTS = [(ky - 1) * WP + (kx - 1) for ky in range(3) for kx in range(3)]

    def conv3x3(read_slice, w_ref, b_ref):
        """9 shifted matmuls + bias + ReLU on the flat band layout."""
        cout = w_ref.shape[2]
        acc = jnp.zeros((BAND, cout), jnp.float32)
        for t, s in enumerate(SHIFTS):
            acc = acc + jnp.dot(read_slice(TOP + s), w_ref[t],
                                preferred_element_type=jnp.float32)
        return jnp.maximum(acc + b_ref[...], 0.0)

    def kernel(x_ref, mask_ref,
               w1_ref, b1_ref, w2_ref, b2_ref, w3_ref, b3_ref,
               wpv_ref, bpv_ref, wp_ref, bp_ref,
               wv1_ref, bv1_ref, wv2_ref, bv2_ref,
               act_ref, val_ref,
               s1_ref, s2_ref):
        mask = mask_ref[...]                                       # (BAND, 1)

        def store_padded(dst_ref, band):
            # write the band into the interior of a zero-halo ext buffer
            c = band.shape[1]
            dst_ref[0:TOP, :] = jnp.zeros((TOP, c), jnp.float32)
            dst_ref[TOP:TOP + BAND, :] = band * mask
            dst_ref[TOP + BAND:NPAD_EXT, :] = jnp.zeros((TOP, c), jnp.float32)

        # ---- conv trunk, entirely in VMEM ----
        band1 = conv3x3(lambda s: x_ref[0, s:s + BAND, :], w1_ref, b1_ref)
        store_padded(s1_ref, band1)
        band2 = conv3x3(lambda s: s1_ref[s:s + BAND, :], w2_ref, b2_ref)
        store_padded(s2_ref, band2)
        band3 = conv3x3(lambda s: s2_ref[s:s + BAND, :], w3_ref, b3_ref)

        # ---- fused 1x1 head convs: cols [0:4] policy, [4:6] value, rest pad ----
        pv = jnp.maximum(
            jnp.dot(band3, wpv_ref[...], preferred_element_type=jnp.float32)
            + bpv_ref[...], 0.0)                                    # (BAND, 8)

        # ---- policy head: act_fc1 consumes the band layout directly
        # (weights pre-permuted, zero at halo rows), then log_softmax ----
        n_pol = wp_ref.shape[0]                                     # 4
        zp = pv[:, 0:1] * wp_ref[0]
        for c in range(1, n_pol):
            zp = zp + pv[:, c:c + 1] * wp_ref[c]
        logits = jnp.sum(zp, axis=0, keepdims=True) + bp_ref[...]   # (1, H*W)
        m = jnp.max(logits, axis=-1, keepdims=True)
        sh = logits - m
        logp = sh - jnp.log(jnp.sum(jnp.exp(sh), axis=-1, keepdims=True))
        act_ref[0] = logp

        # ---- value head: val_fc1 (band layout) -> relu -> val_fc2 -> tanh ----
        n_val = wv1_ref.shape[0]                                    # 2
        zv = pv[:, n_pol:n_pol + 1] * wv1_ref[0]
        for c in range(1, n_val):
            zv = zv + pv[:, n_pol + c:n_pol + c + 1] * wv1_ref[c]
        h = jnp.maximum(jnp.sum(zv, axis=0, keepdims=True) + bv1_ref[...], 0.0)
        v = jnp.tanh(jnp.sum(h * wv2_ref[...], axis=-1, keepdims=True)
                     + bv2_ref[...])                                # (1, 1)
        val_ref[0] = v

    return kernel


# ---------------------------------------------------------------------------
# One-time weight re-layout (PyTorch layouts -> kernel layouts)
# ---------------------------------------------------------------------------

def prepare_params(params, board_height, board_width):
    H, W = board_height, board_width
    WP = W + 2
    BAND = H * WP
    f32 = jnp.float32

    def conv_taps(w, cin_pad):
        # (Cout, Cin, 3, 3) -> (9, cin_pad, Cout), tap-major (ky, kx)
        cout, cin = w.shape[0], w.shape[1]
        wt = jnp.transpose(w, (2, 3, 1, 0)).reshape(9, cin, cout).astype(f32)
        if cin_pad > cin:
            wt = jnp.pad(wt, ((0, 0), (0, cin_pad - cin), (0, 0)))
        return wt

    def fc_to_band(wt, channels):
        # torch Linear weight (out, channels*H*W) with NCHW-flatten input order
        # -> (channels, BAND, out), indexed by band row, zero at halo columns.
        out_dim = wt.shape[0]
        w4 = jnp.transpose(wt.reshape(out_dim, channels, H, W), (1, 2, 3, 0))
        wb = jnp.zeros((channels, H, WP, out_dim), f32)
        wb = wb.at[:, :, 1:W + 1, :].set(w4.astype(f32))
        return wb.reshape(channels, BAND, out_dim)

    # fused 1x1 head conv weight: [policy(4) | value(2) | zero pad(2)] -> (128, 8)
    wa = jnp.transpose(params["act_conv1_w"][:, :, 0, 0], (1, 0)).astype(f32)
    wv = jnp.transpose(params["val_conv1_w"][:, :, 0, 0], (1, 0)).astype(f32)
    wpv = jnp.concatenate([wa, wv, jnp.zeros((wa.shape[0], 2), f32)], axis=1)
    bpv = jnp.concatenate([params["act_conv1_b"].astype(f32),
                           params["val_conv1_b"].astype(f32),
                           jnp.zeros((2,), f32)]).reshape(1, -1)

    # mask that zeroes halo columns of the band before re-padding
    mask = np.ones((H, WP), np.float32)
    mask[:, 0] = 0.0
    mask[:, -1] = 0.0

    return {
        "mask": jnp.asarray(mask.reshape(BAND, 1)),
        "w1": conv_taps(params["conv1_w"], 8),
        "b1": params["conv1_b"].reshape(1, -1).astype(f32),
        "w2": conv_taps(params["conv2_w"], params["conv2_w"].shape[1]),
        "b2": params["conv2_b"].reshape(1, -1).astype(f32),
        "w3": conv_taps(params["conv3_w"], params["conv3_w"].shape[1]),
        "b3": params["conv3_b"].reshape(1, -1).astype(f32),
        "wpv": wpv, "bpv": bpv,
        "wp": fc_to_band(params["act_fc1_w"], 4),
        "bp": params["act_fc1_b"].reshape(1, -1).astype(f32),
        "wv1": fc_to_band(params["val_fc1_w"], 2),
        "bv1": params["val_fc1_b"].reshape(1, -1).astype(f32),
        "wv2": params["val_fc2_w"].reshape(1, -1).astype(f32),   # (1, 64)
        "bv2": params["val_fc2_b"].reshape(1, 1).astype(f32),    # (1, 1)
    }


_WEIGHT_ORDER = ("mask", "w1", "b1", "w2", "b2", "w3", "b3",
                 "wpv", "bpv", "wp", "bp", "wv1", "bv1", "wv2", "bv2")


# ---------------------------------------------------------------------------
# Forward pass (one pallas_call)
# ---------------------------------------------------------------------------

def ac_forward(prep, x_nchw):
    """x_nchw: (B, 5, H, W) f32 -> (log_probs (B, H*W), value (B, 1))."""
    B, Cin, H, W = x_nchw.shape
    WP = W + 2
    NPAD_EXT = (H + 4) * WP
    HWO = H * W
    C0P = prep["w1"].shape[1]
    C1 = prep["w1"].shape[2]
    C2 = prep["w2"].shape[2]

    # NCHW -> NHWC, pad channels 5->8, add conv halo + guard rows, flatten rows.
    x = jnp.transpose(x_nchw, (0, 2, 3, 1)).astype(jnp.float32)
    x = jnp.pad(x, ((0, 0), (2, 2), (1, 1), (0, C0P - Cin)))
    x_flat = x.reshape(B, NPAD_EXT, C0P)

    weights = [prep[k] for k in _WEIGHT_ORDER]

    def const_spec(a):
        zeros = (0,) * a.ndim
        return pl.BlockSpec(a.shape, lambda b: zeros)

    in_specs = ([pl.BlockSpec((1, NPAD_EXT, C0P), lambda b: (b, 0, 0))]
                + [const_spec(a) for a in weights])
    out_specs = [pl.BlockSpec((1, 1, HWO), lambda b: (b, 0, 0)),
                 pl.BlockSpec((1, 1, 1), lambda b: (b, 0, 0))]

    act, val = pl.pallas_call(
        _make_fused_kernel(H, W),
        out_shape=(jax.ShapeDtypeStruct((B, 1, HWO), jnp.float32),
                   jax.ShapeDtypeStruct((B, 1, 1), jnp.float32)),
        grid_spec=pltpu.PrefetchScalarGridSpec(
            num_scalar_prefetch=0,
            grid=(B,),
            in_specs=in_specs,
            out_specs=out_specs,
            scratch_shapes=[pltpu.VMEM((NPAD_EXT, C1), jnp.float32),
                            pltpu.VMEM((NPAD_EXT, C2), jnp.float32)]),
        compiler_params=pltpu.CompilerParams(
            dimension_semantics=("parallel",)),
    )(x_flat, *weights)

    return act.reshape(B, HWO), val.reshape(B, 1)


# ---------------------------------------------------------------------------
# Pure-JAX reference of the PyTorch AC module (correctness check only)
# ---------------------------------------------------------------------------

def ac_reference(params, x_nchw):
    def conv(x, w, b, pad):
        y = jax.lax.conv_general_dilated(
            x, w, (1, 1), pad, dimension_numbers=("NCHW", "OIHW", "NCHW"))
        return y + b.reshape(1, -1, 1, 1)

    B = x_nchw.shape[0]
    x = jax.nn.relu(conv(x_nchw, params["conv1_w"], params["conv1_b"], "SAME"))
    x = jax.nn.relu(conv(x, params["conv2_w"], params["conv2_b"], "SAME"))
    x = jax.nn.relu(conv(x, params["conv3_w"], params["conv3_b"], "SAME"))

    xa = jax.nn.relu(conv(x, params["act_conv1_w"], params["act_conv1_b"], "VALID"))
    xa = xa.reshape(B, -1)
    xa = jax.nn.log_softmax(xa @ params["act_fc1_w"].T + params["act_fc1_b"], axis=1)

    xv = jax.nn.relu(conv(x, params["val_conv1_w"], params["val_conv1_b"], "VALID"))
    xv = xv.reshape(B, -1)
    xv = jax.nn.relu(xv @ params["val_fc1_w"].T + params["val_fc1_b"])
    xv = jnp.tanh(xv @ params["val_fc2_w"].T + params["val_fc2_b"])
    return xa, xv


# ---------------------------------------------------------------------------

def init_params(key, board_width, board_height):
    """Deterministic synthetic parameters in PyTorch layouts."""
    ks = jax.random.split(key, 16)
    it = iter(range(16))

    def w(shape, scale):
        return jax.random.normal(ks[next(it)], shape, jnp.float32) * scale

    hw = board_width * board_height
    return {
        "conv1_w": w((32, 5, 3, 3), 0.15), "conv1_b": w((32,), 0.05),
        "conv2_w": w((64, 32, 3, 3), 0.06), "conv2_b": w((64,), 0.05),
        "conv3_w": w((128, 64, 3, 3), 0.04), "conv3_b": w((128,), 0.05),
        "act_conv1_w": w((4, 128, 1, 1), 0.09), "act_conv1_b": w((4,), 0.05),
        "act_fc1_w": w((hw, 4 * hw), 0.06), "act_fc1_b": w((hw,), 0.05),
        "val_conv1_w": w((2, 128, 1, 1), 0.09), "val_conv1_b": w((2,), 0.05),
        "val_fc1_w": w((64, 2 * hw), 0.09), "val_fc1_b": w((64,), 0.05),
        "val_fc2_w": w((1, 64), 0.12), "val_fc2_b": w((1,), 0.05),
    }


if __name__ == "__main__":
    board_width = 8
    board_height = 8
    batch = 2

    key = jax.random.PRNGKey(0)
    k_params, k_input = jax.random.split(key)
    params = init_params(k_params, board_width, board_height)
    state_input = jax.random.normal(
        k_input, (batch, 5, board_height, board_width), jnp.float32)

    # one-time weight re-layout (kept out of the hot path)
    prep = prepare_params(params, board_height, board_width)

    fwd = jax.jit(ac_forward)
    x_act, x_val = fwd(prep, state_input)
    jax.block_until_ready((x_act, x_val))

    # correctness check against a pure-JAX reference of the PyTorch module
    ref_act, ref_val = jax.jit(ac_reference)(params, state_input)
    assert x_act.shape == (batch, board_width * board_height)
    assert x_val.shape == (batch, 1)
    np.testing.assert_allclose(np.asarray(x_act), np.asarray(ref_act),
                               rtol=1e-3, atol=1e-4)
    np.testing.assert_allclose(np.asarray(x_val), np.asarray(ref_val),
                               rtol=1e-3, atol=1e-4)

    print("KERNEL_OK")
</pallas_src>

<mosaic_0001>
module attributes {stable_mosaic.version = 11 : i64} {
  func.func @kernel(%arg0: i32, %arg1: memref<1x120x8xf32, #tpu.memory_space<vmem>>, %arg2: memref<80x1xf32, #tpu.memory_space<vmem>>, %arg3: memref<9x8x32xf32, #tpu.memory_space<vmem>>, %arg4: memref<1x32xf32, #tpu.memory_space<vmem>>, %arg5: memref<9x32x64xf32, #tpu.memory_space<vmem>>, %arg6: memref<1x64xf32, #tpu.memory_space<vmem>>, %arg7: memref<9x64x128xf32, #tpu.memory_space<vmem>>, %arg8: memref<1x128xf32, #tpu.memory_space<vmem>>, %arg9: memref<128x8xf32, #tpu.memory_space<vmem>>, %arg10: memref<1x8xf32, #tpu.memory_space<vmem>>, %arg11: memref<4x80x64xf32, #tpu.memory_space<vmem>>, %arg12: memref<1x64xf32, #tpu.memory_space<vmem>>, %arg13: memref<2x80x64xf32, #tpu.memory_space<vmem>>, %arg14: memref<1x64xf32, #tpu.memory_space<vmem>>, %arg15: memref<1x64xf32, #tpu.memory_space<vmem>>, %arg16: memref<1x1xf32, #tpu.memory_space<vmem>>, %arg17: memref<1x1x64xf32, #tpu.memory_space<vmem>>, %arg18: memref<1x1x1xf32, #tpu.memory_space<vmem>>, %arg19: memref<120x32xf32, #tpu.memory_space<vmem>>, %arg20: memref<120x64xf32, #tpu.memory_space<vmem>>) attributes {dimension_semantics = [#tpu.dimension_semantics<parallel>], iteration_bounds = array<i64: 2>, scalar_prefetch = 0 : i64, scratch_operands = 2 : i64, tpu.core_type = #tpu.core_type<tc>, window_params = [{transform_indices = @transform_0, window_bounds = array<i64: 1, 120, 8>}, {pipeline_mode = #tpu.pipeline_mode<synchronous>, transform_indices = @transform_1, window_bounds = array<i64: 80, 1>}, {pipeline_mode = #tpu.pipeline_mode<synchronous>, transform_indices = @transform_2, window_bounds = array<i64: 9, 8, 32>}, {pipeline_mode = #tpu.pipeline_mode<synchronous>, transform_indices = @transform_3, window_bounds = array<i64: 1, 32>}, {pipeline_mode = #tpu.pipeline_mode<synchronous>, transform_indices = @transform_4, window_bounds = array<i64: 9, 32, 64>}, {pipeline_mode = #tpu.pipeline_mode<synchronous>, transform_indices = @transform_5, window_bounds = array<i64: 1, 64>}, {pipeline_mode = #tpu.pipeline_mode<synchronous>, transform_indices = @transform_6, window_bounds = array<i64: 9, 64, 128>}, {pipeline_mode = #tpu.pipeline_mode<synchronous>, transform_indices = @transform_7, window_bounds = array<i64: 1, 128>}, {pipeline_mode = #tpu.pipeline_mode<synchronous>, transform_indices = @transform_8, window_bounds = array<i64: 128, 8>}, {pipeline_mode = #tpu.pipeline_mode<synchronous>, transform_indices = @transform_9, window_bounds = array<i64: 1, 8>}, {pipeline_mode = #tpu.pipeline_mode<synchronous>, transform_indices = @transform_10, window_bounds = array<i64: 4, 80, 64>}, {pipeline_mode = #tpu.pipeline_mode<synchronous>, transform_indices = @transform_11, window_bounds = array<i64: 1, 64>}, {pipeline_mode = #tpu.pipeline_mode<synchronous>, transform_indices = @transform_12, window_bounds = array<i64: 2, 80, 64>}, {pipeline_mode = #tpu.pipeline_mode<synchronous>, transform_indices = @transform_13, window_bounds = array<i64: 1, 64>}, {pipeline_mode = #tpu.pipeline_mode<synchronous>, transform_indices = @transform_14, window_bounds = array<i64: 1, 64>}, {pipeline_mode = #tpu.pipeline_mode<synchronous>, transform_indices = @transform_15, window_bounds = array<i64: 1, 1>}, {transform_indices = @transform_16, window_bounds = array<i64: 1, 1, 64>}, {transform_indices = @transform_17, window_bounds = array<i64: 1, 1, 1>}]} {
    %c0 = arith.constant 0 : index
    %c0_0 = arith.constant 0 : index
    %0 = vector.load %arg2[%c0, %c0_0] : memref<80x1xf32, #tpu.memory_space<vmem>>, vector<80x1xf32>
    %cst = arith.constant 0.000000e+00 : f32
    %1 = vector.broadcast %cst : f32 to vector<80x32xf32>
    %c0_1 = arith.constant 0 : index
    %c9 = arith.constant 9 : index
    %c0_2 = arith.constant 0 : index
    %2 = vector.load %arg1[%c0_1, %c9, %c0_2] : memref<1x120x8xf32, #tpu.memory_space<vmem>>, vector<1x80x8xf32>
    %3 = vector.shape_cast %2 : vector<1x80x8xf32> to vector<80x8xf32>
    %c0_3 = arith.constant 0 : index
    %c0_4 = arith.constant 0 : index
    %c0_5 = arith.constant 0 : index
    %4 = vector.load %arg3[%c0_3, %c0_4, %c0_5] : memref<9x8x32xf32, #tpu.memory_space<vmem>>, vector<1x8x32xf32>
    %5 = vector.shape_cast %4 : vector<1x8x32xf32> to vector<8x32xf32>
    %cst_6 = arith.constant dense<0.000000e+00> : vector<80x32xf32>
    %6 = tpu.matmul %3, %5, %cst_6 {dimension_numbers = #tpu.dot_dimension_numbers<[1], [0], [0], [1], [0, 0, 1, 1], [], []>} : vector<80x8xf32>, vector<8x32xf32>, vector<80x32xf32> -> vector<80x32xf32>
    %7 = arith.addf %1, %6 : vector<80x32xf32>
    %c0_7 = arith.constant 0 : index
    %c10 = arith.constant 10 : index
    %c0_8 = arith.constant 0 : index
    %8 = vector.load %arg1[%c0_7, %c10, %c0_8] : memref<1x120x8xf32, #tpu.memory_space<vmem>>, vector<1x80x8xf32>
    %9 = vector.shape_cast %8 : vector<1x80x8xf32> to vector<80x8xf32>
    %c1 = arith.constant 1 : index
    %c0_9 = arith.constant 0 : index
    %c0_10 = arith.constant 0 : index
    %10 = vector.load %arg3[%c1, %c0_9, %c0_10] : memref<9x8x32xf32, #tpu.memory_space<vmem>>, vector<1x8x32xf32>
    %11 = vector.shape_cast %10 : vector<1x8x32xf32> to vector<8x32xf32>
    %cst_11 = arith.constant dense<0.000000e+00> : vector<80x32xf32>
    %12 = tpu.matmul %9, %11, %cst_11 {dimension_numbers = #tpu.dot_dimension_numbers<[1], [0], [0], [1], [0, 0, 1, 1], [], []>} : vector<80x8xf32>, vector<8x32xf32>, vector<80x32xf32> -> vector<80x32xf32>
    %13 = arith.addf %7, %12 : vector<80x32xf32>
    %c0_12 = arith.constant 0 : index
    %c11 = arith.constant 11 : index
    %c0_13 = arith.constant 0 : index
    %14 = vector.load %arg1[%c0_12, %c11, %c0_13] : memref<1x120x8xf32, #tpu.memory_space<vmem>>, vector<1x80x8xf32>
    %15 = vector.shape_cast %14 : vector<1x80x8xf32> to vector<80x8xf32>
    %c2 = arith.constant 2 : index
    %c0_14 = arith.constant 0 : index
    %c0_15 = arith.constant 0 : index
    %16 = vector.load %arg3[%c2, %c0_14, %c0_15] : memref<9x8x32xf32, #tpu.memory_space<vmem>>, vector<1x8x32xf32>
    %17 = vector.shape_cast %16 : vector<1x8x32xf32> to vector<8x32xf32>
    %cst_16 = arith.constant dense<0.000000e+00> : vector<80x32xf32>
    %18 = tpu.matmul %15, %17, %cst_16 {dimension_numbers = #tpu.dot_dimension_numbers<[1], [0], [0], [1], [0, 0, 1, 1], [], []>} : vector<80x8xf32>, vector<8x32xf32>, vector<80x32xf32> -> vector<80x32xf32>
    %19 = arith.addf %13, %18 : vector<80x32xf32>
    %c0_17 = arith.constant 0 : index
    %c19 = arith.constant 19 : index
    %c0_18 = arith.constant 0 : index
    %20 = vector.load %arg1[%c0_17, %c19, %c0_18] : memref<1x120x8xf32, #tpu.memory_space<vmem>>, vector<1x80x8xf32>
    %21 = vector.shape_cast %20 : vector<1x80x8xf32> to vector<80x8xf32>
    %c3 = arith.constant 3 : index
    %c0_19 = arith.constant 0 : index
    %c0_20 = arith.constant 0 : index
    %22 = vector.load %arg3[%c3, %c0_19, %c0_20] : memref<9x8x32xf32, #tpu.memory_space<vmem>>, vector<1x8x32xf32>
    %23 = vector.shape_cast %22 : vector<1x8x32xf32> to vector<8x32xf32>
    %cst_21 = arith.constant dense<0.000000e+00> : vector<80x32xf32>
    %24 = tpu.matmul %21, %23, %cst_21 {dimension_numbers = #tpu.dot_dimension_numbers<[1], [0], [0], [1], [0, 0, 1, 1], [], []>} : vector<80x8xf32>, vector<8x32xf32>, vector<80x32xf32> -> vector<80x32xf32>
    %25 = arith.addf %19, %24 : vector<80x32xf32>
    %c0_22 = arith.constant 0 : index
    %c20 = arith.constant 20 : index
    %c0_23 = arith.constant 0 : index
    %26 = vector.load %arg1[%c0_22, %c20, %c0_23] : memref<1x120x8xf32, #tpu.memory_space<vmem>>, vector<1x80x8xf32>
    %27 = vector.shape_cast %26 : vector<1x80x8xf32> to vector<80x8xf32>
    %c4 = arith.constant 4 : index
    %c0_24 = arith.constant 0 : index
    %c0_25 = arith.constant 0 : index
    %28 = vector.load %arg3[%c4, %c0_24, %c0_25] : memref<9x8x32xf32, #tpu.memory_space<vmem>>, vector<1x8x32xf32>
    %29 = vector.shape_cast %28 : vector<1x8x32xf32> to vector<8x32xf32>
    %cst_26 = arith.constant dense<0.000000e+00> : vector<80x32xf32>
    %30 = tpu.matmul %27, %29, %cst_26 {dimension_numbers = #tpu.dot_dimension_numbers<[1], [0], [0], [1], [0, 0, 1, 1], [], []>} : vector<80x8xf32>, vector<8x32xf32>, vector<80x32xf32> -> vector<80x32xf32>
    %31 = arith.addf %25, %30 : vector<80x32xf32>
    %c0_27 = arith.constant 0 : index
    %c21 = arith.constant 21 : index
    %c0_28 = arith.constant 0 : index
    %32 = vector.load %arg1[%c0_27, %c21, %c0_28] : memref<1x120x8xf32, #tpu.memory_space<vmem>>, vector<1x80x8xf32>
    %33 = vector.shape_cast %32 : vector<1x80x8xf32> to vector<80x8xf32>
    %c5 = arith.constant 5 : index
    %c0_29 = arith.constant 0 : index
    %c0_30 = arith.constant 0 : index
    %34 = vector.load %arg3[%c5, %c0_29, %c0_30] : memref<9x8x32xf32, #tpu.memory_space<vmem>>, vector<1x8x32xf32>
    %35 = vector.shape_cast %34 : vector<1x8x32xf32> to vector<8x32xf32>
    %cst_31 = arith.constant dense<0.000000e+00> : vector<80x32xf32>
    %36 = tpu.matmul %33, %35, %cst_31 {dimension_numbers = #tpu.dot_dimension_numbers<[1], [0], [0], [1], [0, 0, 1, 1], [], []>} : vector<80x8xf32>, vector<8x32xf32>, vector<80x32xf32> -> vector<80x32xf32>
    %37 = arith.addf %31, %36 : vector<80x32xf32>
    %c0_32 = arith.constant 0 : index
    %c29 = arith.constant 29 : index
    %c0_33 = arith.constant 0 : index
    %38 = vector.load %arg1[%c0_32, %c29, %c0_33] : memref<1x120x8xf32, #tpu.memory_space<vmem>>, vector<1x80x8xf32>
    %39 = vector.shape_cast %38 : vector<1x80x8xf32> to vector<80x8xf32>
    %c6 = arith.constant 6 : index
    %c0_34 = arith.constant 0 : index
    %c0_35 = arith.constant 0 : index
    %40 = vector.load %arg3[%c6, %c0_34, %c0_35] : memref<9x8x32xf32, #tpu.memory_space<vmem>>, vector<1x8x32xf32>
    %41 = vector.shape_cast %40 : vector<1x8x32xf32> to vector<8x32xf32>
    %cst_36 = arith.constant dense<0.000000e+00> : vector<80x32xf32>
    %42 = tpu.matmul %39, %41, %cst_36 {dimension_numbers = #tpu.dot_dimension_numbers<[1], [0], [0], [1], [0, 0, 1, 1], [], []>} : vector<80x8xf32>, vector<8x32xf32>, vector<80x32xf32> -> vector<80x32xf32>
    %43 = arith.addf %37, %42 : vector<80x32xf32>
    %c0_37 = arith.constant 0 : index
    %c30 = arith.constant 30 : index
    %c0_38 = arith.constant 0 : index
    %44 = vector.load %arg1[%c0_37, %c30, %c0_38] : memref<1x120x8xf32, #tpu.memory_space<vmem>>, vector<1x80x8xf32>
    %45 = vector.shape_cast %44 : vector<1x80x8xf32> to vector<80x8xf32>
    %c7 = arith.constant 7 : index
    %c0_39 = arith.constant 0 : index
    %c0_40 = arith.constant 0 : index
    %46 = vector.load %arg3[%c7, %c0_39, %c0_40] : memref<9x8x32xf32, #tpu.memory_space<vmem>>, vector<1x8x32xf32>
    %47 = vector.shape_cast %46 : vector<1x8x32xf32> to vector<8x32xf32>
    %cst_41 = arith.constant dense<0.000000e+00> : vector<80x32xf32>
    %48 = tpu.matmul %45, %47, %cst_41 {dimension_numbers = #tpu.dot_dimension_numbers<[1], [0], [0], [1], [0, 0, 1, 1], [], []>} : vector<80x8xf32>, vector<8x32xf32>, vector<80x32xf32> -> vector<80x32xf32>
    %49 = arith.addf %43, %48 : vector<80x32xf32>
    %c0_42 = arith.constant 0 : index
    %c31 = arith.constant 31 : index
    %c0_43 = arith.constant 0 : index
    %50 = vector.load %arg1[%c0_42, %c31, %c0_43] : memref<1x120x8xf32, #tpu.memory_space<vmem>>, vector<1x80x8xf32>
    %51 = vector.shape_cast %50 : vector<1x80x8xf32> to vector<80x8xf32>
    %c8 = arith.constant 8 : index
    %c0_44 = arith.constant 0 : index
    %c0_45 = arith.constant 0 : index
    %52 = vector.load %arg3[%c8, %c0_44, %c0_45] : memref<9x8x32xf32, #tpu.memory_space<vmem>>, vector<1x8x32xf32>
    %53 = vector.shape_cast %52 : vector<1x8x32xf32> to vector<8x32xf32>
    %cst_46 = arith.constant dense<0.000000e+00> : vector<80x32xf32>
    %54 = tpu.matmul %51, %53, %cst_46 {dimension_numbers = #tpu.dot_dimension_numbers<[1], [0], [0], [1], [0, 0, 1, 1], [], []>} : vector<80x8xf32>, vector<8x32xf32>, vector<80x32xf32> -> vector<80x32xf32>
    %55 = arith.addf %49, %54 : vector<80x32xf32>
    %c0_47 = arith.constant 0 : index
    %c0_48 = arith.constant 0 : index
    %56 = vector.load %arg4[%c0_47, %c0_48] : memref<1x32xf32, #tpu.memory_space<vmem>>, vector<1x32xf32>
    %57 = vector.broadcast %56 : vector<1x32xf32> to vector<80x32xf32>
    %58 = arith.addf %55, %57 : vector<80x32xf32>
    %cst_49 = arith.constant 0.000000e+00 : f32
    %59 = vector.broadcast %cst_49 : f32 to vector<80x32xf32>
    %60 = arith.maximumf %58, %59 : vector<80x32xf32>
    %cst_50 = arith.constant 0.000000e+00 : f32
    %61 = vector.broadcast %cst_50 : f32 to vector<20x32xf32>
    %c0_51 = arith.constant 0 : index
    %c0_52 = arith.constant 0 : index
    %62 = vector.load %arg19[%c0_51, %c0_52] : memref<120x32xf32, #tpu.memory_space<vmem>>, vector<20x32xf32>
    tpu.vector_store %arg19[%c0_51, %c0_52], %61 {strides = array<i32>} : memref<120x32xf32, #tpu.memory_space<vmem>>, vector<20x32xf32>,
    %63 = vector.broadcast %0 : vector<80x1xf32> to vector<80x32xf32>
    %64 = arith.mulf %60, %63 : vector<80x32xf32>
    %c20_53 = arith.constant 20 : index
    %c0_54 = arith.constant 0 : index
    %65 = vector.load %arg19[%c20_53, %c0_54] : memref<120x32xf32, #tpu.memory_space<vmem>>, vector<80x32xf32>
    tpu.vector_store %arg19[%c20_53, %c0_54], %64 {strides = array<i32>} : memref<120x32xf32, #tpu.memory_space<vmem>>, vector<80x32xf32>,
    %cst_55 = arith.constant 0.000000e+00 : f32
    %66 = vector.broadcast %cst_55 : f32 to vector<20x32xf32>
    %c100 = arith.constant 100 : index
    %c0_56 = arith.constant 0 : index
    %67 = vector.load %arg19[%c100, %c0_56] : memref<120x32xf32, #tpu.memory_space<vmem>>, vector<20x32xf32>
    tpu.vector_store %arg19[%c100, %c0_56], %66 {strides = array<i32>} : memref<120x32xf32, #tpu.memory_space<vmem>>, vector<20x32xf32>,
    %cst_57 = arith.constant 0.000000e+00 : f32
    %68 = vector.broadcast %cst_57 : f32 to vector<80x64xf32>
    %c9_58 = arith.constant 9 : index
    %c0_59 = arith.constant 0 : index
    %69 = vector.load %arg19[%c9_58, %c0_59] : memref<120x32xf32, #tpu.memory_space<vmem>>, vector<80x32xf32>
    %c0_60 = arith.constant 0 : index
    %c0_61 = arith.constant 0 : index
    %c0_62 = arith.constant 0 : index
    %70 = vector.load %arg5[%c0_60, %c0_61, %c0_62] : memref<9x32x64xf32, #tpu.memory_space<vmem>>, vector<1x32x64xf32>
    %71 = vector.shape_cast %70 : vector<1x32x64xf32> to vector<32x64xf32>
    %cst_63 = arith.constant dense<0.000000e+00> : vector<80x64xf32>
    %72 = tpu.matmul %69, %71, %cst_63 {dimension_numbers = #tpu.dot_dimension_numbers<[1], [0], [0], [1], [0, 0, 1, 1], [], []>} : vector<80x32xf32>, vector<32x64xf32>, vector<80x64xf32> -> vector<80x64xf32>
    %73 = arith.addf %68, %72 : vector<80x64xf32>
    %c10_64 = arith.constant 10 : index
    %c0_65 = arith.constant 0 : index
    %74 = vector.load %arg19[%c10_64, %c0_65] : memref<120x32xf32, #tpu.memory_space<vmem>>, vector<80x32xf32>
    %c1_66 = arith.constant 1 : index
    %c0_67 = arith.constant 0 : index
    %c0_68 = arith.constant 0 : index
    %75 = vector.load %arg5[%c1_66, %c0_67, %c0_68] : memref<9x32x64xf32, #tpu.memory_space<vmem>>, vector<1x32x64xf32>
    %76 = vector.shape_cast %75 : vector<1x32x64xf32> to vector<32x64xf32>
    %cst_69 = arith.constant dense<0.000000e+00> : vector<80x64xf32>
    %77 = tpu.matmul %74, %76, %cst_69 {dimension_numbers = #tpu.dot_dimension_numbers<[1], [0], [0], [1], [0, 0, 1, 1], [], []>} : vector<80x32xf32>, vector<32x64xf32>, vector<80x64xf32> -> vector<80x64xf32>
    %78 = arith.addf %73, %77 : vector<80x64xf32>
    %c11_70 = arith.constant 11 : index
    %c0_71 = arith.constant 0 : index
    %79 = vector.load %arg19[%c11_70, %c0_71] : memref<120x32xf32, #tpu.memory_space<vmem>>, vector<80x32xf32>
    %c2_72 = arith.constant 2 : index
    %c0_73 = arith.constant 0 : index
    %c0_74 = arith.constant 0 : index
    %80 = vector.load %arg5[%c2_72, %c0_73, %c0_74] : memref<9x32x64xf32, #tpu.memory_space<vmem>>, vector<1x32x64xf32>
    %81 = vector.shape_cast %80 : vector<1x32x64xf32> to vector<32x64xf32>
    %cst_75 = arith.constant dense<0.000000e+00> : vector<80x64xf32>
    %82 = tpu.matmul %79, %81, %cst_75 {dimension_numbers = #tpu.dot_dimension_numbers<[1], [0], [0], [1], [0, 0, 1, 1], [], []>} : vector<80x32xf32>, vector<32x64xf32>, vector<80x64xf32> -> vector<80x64xf32>
    %83 = arith.addf %78, %82 : vector<80x64xf32>
    %c19_76 = arith.constant 19 : index
    %c0_77 = arith.constant 0 : index
    %84 = vector.load %arg19[%c19_76, %c0_77] : memref<120x32xf32, #tpu.memory_space<vmem>>, vector<80x32xf32>
    %c3_78 = arith.constant 3 : index
    %c0_79 = arith.constant 0 : index
    %c0_80 = arith.constant 0 : index
    %85 = vector.load %arg5[%c3_78, %c0_79, %c0_80] : memref<9x32x64xf32, #tpu.memory_space<vmem>>, vector<1x32x64xf32>
    %86 = vector.shape_cast %85 : vector<1x32x64xf32> to vector<32x64xf32>
    %cst_81 = arith.constant dense<0.000000e+00> : vector<80x64xf32>
    %87 = tpu.matmul %84, %86, %cst_81 {dimension_numbers = #tpu.dot_dimension_numbers<[1], [0], [0], [1], [0, 0, 1, 1], [], []>} : vector<80x32xf32>, vector<32x64xf32>, vector<80x64xf32> -> vector<80x64xf32>
    %88 = arith.addf %83, %87 : vector<80x64xf32>
    %c20_82 = arith.constant 20 : index
    %c0_83 = arith.constant 0 : index
    %89 = vector.load %arg19[%c20_82, %c0_83] : memref<120x32xf32, #tpu.memory_space<vmem>>, vector<80x32xf32>
    %c4_84 = arith.constant 4 : index
    %c0_85 = arith.constant 0 : index
    %c0_86 = arith.constant 0 : index
    %90 = vector.load %arg5[%c4_84, %c0_85, %c0_86] : memref<9x32x64xf32, #tpu.memory_space<vmem>>, vector<1x32x64xf32>
    %91 = vector.shape_cast %90 : vector<1x32x64xf32> to vector<32x64xf32>
    %cst_87 = arith.constant dense<0.000000e+00> : vector<80x64xf32>
    %92 = tpu.matmul %89, %91, %cst_87 {dimension_numbers = #tpu.dot_dimension_numbers<[1], [0], [0], [1], [0, 0, 1, 1], [], []>} : vector<80x32xf32>, vector<32x64xf32>, vector<80x64xf32> -> vector<80x64xf32>
    %93 = arith.addf %88, %92 : vector<80x64xf32>
    %c21_88 = arith.constant 21 : index
    %c0_89 = arith.constant 0 : index
    %94 = vector.load %arg19[%c21_88, %c0_89] : memref<120x32xf32, #tpu.memory_space<vmem>>, vector<80x32xf32>
    %c5_90 = arith.constant 5 : index
    %c0_91 = arith.constant 0 : index
    %c0_92 = arith.constant 0 : index
    %95 = vector.load %arg5[%c5_90, %c0_91, %c0_92] : memref<9x32x64xf32, #tpu.memory_space<vmem>>, vector<1x32x64xf32>
    %96 = vector.shape_cast %95 : vector<1x32x64xf32> to vector<32x64xf32>
    %cst_93 = arith.constant dense<0.000000e+00> : vector<80x64xf32>
    %97 = tpu.matmul %94, %96, %cst_93 {dimension_numbers = #tpu.dot_dimension_numbers<[1], [0], [0], [1], [0, 0, 1, 1], [], []>} : vector<80x32xf32>, vector<32x64xf32>, vector<80x64xf32> -> vector<80x64xf32>
    %98 = arith.addf %93, %97 : vector<80x64xf32>
    %c29_94 = arith.constant 29 : index
    %c0_95 = arith.constant 0 : index
    %99 = vector.load %arg19[%c29_94, %c0_95] : memref<120x32xf32, #tpu.memory_space<vmem>>, vector<80x32xf32>
    %c6_96 = arith.constant 6 : index
    %c0_97 = arith.constant 0 : index
    %c0_98 = arith.constant 0 : index
    %100 = vector.load %arg5[%c6_96, %c0_97, %c0_98] : memref<9x32x64xf32, #tpu.memory_space<vmem>>, vector<1x32x64xf32>
    %101 = vector.shape_cast %100 : vector<1x32x64xf32> to vector<32x64xf32>
    %cst_99 = arith.constant dense<0.000000e+00> : vector<80x64xf32>
    %102 = tpu.matmul %99, %101, %cst_99 {dimension_numbers = #tpu.dot_dimension_numbers<[1], [0], [0], [1], [0, 0, 1, 1], [], []>} : vector<80x32xf32>, vector<32x64xf32>, vector<80x64xf32> -> vector<80x64xf32>
    %103 = arith.addf %98, %102 : vector<80x64xf32>
    %c30_100 = arith.constant 30 : index
    %c0_101 = arith.constant 0 : index
    %104 = vector.load %arg19[%c30_100, %c0_101] : memref<120x32xf32, #tpu.memory_space<vmem>>, vector<80x32xf32>
    %c7_102 = arith.constant 7 : index
    %c0_103 = arith.constant 0 : index
    %c0_104 = arith.constant 0 : index
    %105 = vector.load %arg5[%c7_102, %c0_103, %c0_104] : memref<9x32x64xf32, #tpu.memory_space<vmem>>, vector<1x32x64xf32>
    %106 = vector.shape_cast %105 : vector<1x32x64xf32> to vector<32x64xf32>
    %cst_105 = arith.constant dense<0.000000e+00> : vector<80x64xf32>
    %107 = tpu.matmul %104, %106, %cst_105 {dimension_numbers = #tpu.dot_dimension_numbers<[1], [0], [0], [1], [0, 0, 1, 1], [], []>} : vector<80x32xf32>, vector<32x64xf32>, vector<80x64xf32> -> vector<80x64xf32>
    %108 = arith.addf %103, %107 : vector<80x64xf32>
    %c31_106 = arith.constant 31 : index
    %c0_107 = arith.constant 0 : index
    %109 = vector.load %arg19[%c31_106, %c0_107] : memref<120x32xf32, #tpu.memory_space<vmem>>, vector<80x32xf32>
    %c8_108 = arith.constant 8 : index
    %c0_109 = arith.constant 0 : index
    %c0_110 = arith.constant 0 : index
    %110 = vector.load %arg5[%c8_108, %c0_109, %c0_110] : memref<9x32x64xf32, #tpu.memory_space<vmem>>, vector<1x32x64xf32>
    %111 = vector.shape_cast %110 : vector<1x32x64xf32> to vector<32x64xf32>
    %cst_111 = arith.constant dense<0.000000e+00> : vector<80x64xf32>
    %112 = tpu.matmul %109, %111, %cst_111 {dimension_numbers = #tpu.dot_dimension_numbers<[1], [0], [0], [1], [0, 0, 1, 1], [], []>} : vector<80x32xf32>, vector<32x64xf32>, vector<80x64xf32> -> vector<80x64xf32>
    %113 = arith.addf %108, %112 : vector<80x64xf32>
    %c0_112 = arith.constant 0 : index
    %c0_113 = arith.constant 0 : index
    %114 = vector.load %arg6[%c0_112, %c0_113] : memref<1x64xf32, #tpu.memory_space<vmem>>, vector<1x64xf32>
    %115 = vector.broadcast %114 : vector<1x64xf32> to vector<80x64xf32>
    %116 = arith.addf %113, %115 : vector<80x64xf32>
    %cst_114 = arith.constant 0.000000e+00 : f32
    %117 = vector.broadcast %cst_114 : f32 to vector<80x64xf32>
    %118 = arith.maximumf %116, %117 : vector<80x64xf32>
    %cst_115 = arith.constant 0.000000e+00 : f32
    %119 = vector.broadcast %cst_115 : f32 to vector<20x64xf32>
    %c0_116 = arith.constant 0 : index
    %c0_117 = arith.constant 0 : index
    %120 = vector.load %arg20[%c0_116, %c0_117] : memref<120x64xf32, #tpu.memory_space<vmem>>, vector<20x64xf32>
    tpu.vector_store %arg20[%c0_116, %c0_117], %119 {strides = array<i32>} : memref<120x64xf32, #tpu.memory_space<vmem>>, vector<20x64xf32>,
    %121 = vector.broadcast %0 : vector<80x1xf32> to vector<80x64xf32>
    %122 = arith.mulf %118, %121 : vector<80x64xf32>
    %c20_118 = arith.constant 20 : index
    %c0_119 = arith.constant 0 : index
    %123 = vector.load %arg20[%c20_118, %c0_119] : memref<120x64xf32, #tpu.memory_space<vmem>>, vector<80x64xf32>
    tpu.vector_store %arg20[%c20_118, %c0_119], %122 {strides = array<i32>} : memref<120x64xf32, #tpu.memory_space<vmem>>, vector<80x64xf32>,
    %cst_120 = arith.constant 0.000000e+00 : f32
    %124 = vector.broadcast %cst_120 : f32 to vector<20x64xf32>
    %c100_121 = arith.constant 100 : index
    %c0_122 = arith.constant 0 : index
    %125 = vector.load %arg20[%c100_121, %c0_122] : memref<120x64xf32, #tpu.memory_space<vmem>>, vector<20x64xf32>
    tpu.vector_store %arg20[%c100_121, %c0_122], %124 {strides = array<i32>} : memref<120x64xf32, #tpu.memory_space<vmem>>, vector<20x64xf32>,
    %cst_123 = arith.constant 0.000000e+00 : f32
    %126 = vector.broadcast %cst_123 : f32 to vector<80x128xf32>
    %c9_124 = arith.constant 9 : index
    %c0_125 = arith.constant 0 : index
    %127 = vector.load %arg20[%c9_124, %c0_125] : memref<120x64xf32, #tpu.memory_space<vmem>>, vector<80x64xf32>
    %c0_126 = arith.constant 0 : index
    %c0_127 = arith.constant 0 : index
    %c0_128 = arith.constant 0 : index
    %128 = vector.load %arg7[%c0_126, %c0_127, %c0_128] : memref<9x64x128xf32, #tpu.memory_space<vmem>>, vector<1x64x128xf32>
    %129 = vector.shape_cast %128 : vector<1x64x128xf32> to vector<64x128xf32>
    %cst_129 = arith.constant dense<0.000000e+00> : vector<80x128xf32>
    %130 = tpu.matmul %127, %129, %cst_129 {dimension_numbers = #tpu.dot_dimension_numbers<[1], [0], [0], [1], [0, 0, 1, 1], [], []>} : vector<80x64xf32>, vector<64x128xf32>, vector<80x128xf32> -> vector<80x128xf32>
    %131 = arith.addf %126, %130 : vector<80x128xf32>
    %c10_130 = arith.constant 10 : index
    %c0_131 = arith.constant 0 : index
    %132 = vector.load %arg20[%c10_130, %c0_131] : memref<120x64xf32, #tpu.memory_space<vmem>>, vector<80x64xf32>
    %c1_132 = arith.constant 1 : index
    %c0_133 = arith.constant 0 : index
    %c0_134 = arith.constant 0 : index
    %133 = vector.load %arg7[%c1_132, %c0_133, %c0_134] : memref<9x64x128xf32, #tpu.memory_space<vmem>>, vector<1x64x128xf32>
    %134 = vector.shape_cast %133 : vector<1x64x128xf32> to vector<64x128xf32>
    %cst_135 = arith.constant dense<0.000000e+00> : vector<80x128xf32>
    %135 = tpu.matmul %132, %134, %cst_135 {dimension_numbers = #tpu.dot_dimension_numbers<[1], [0], [0], [1], [0, 0, 1, 1], [], []>} : vector<80x64xf32>, vector<64x128xf32>, vector<80x128xf32> -> vector<80x128xf32>
    %136 = arith.addf %131, %135 : vector<80x128xf32>
    %c11_136 = arith.constant 11 : index
    %c0_137 = arith.constant 0 : index
    %137 = vector.load %arg20[%c11_136, %c0_137] : memref<120x64xf32, #tpu.memory_space<vmem>>, vector<80x64xf32>
    %c2_138 = arith.constant 2 : index
    %c0_139 = arith.constant 0 : index
    %c0_140 = arith.constant 0 : index
    %138 = vector.load %arg7[%c2_138, %c0_139, %c0_140] : memref<9x64x128xf32, #tpu.memory_space<vmem>>, vector<1x64x128xf32>
    %139 = vector.shape_cast %138 : vector<1x64x128xf32> to vector<64x128xf32>
    %cst_141 = arith.constant dense<0.000000e+00> : vector<80x128xf32>
    %140 = tpu.matmul %137, %139, %cst_141 {dimension_numbers = #tpu.dot_dimension_numbers<[1], [0], [0], [1], [0, 0, 1, 1], [], []>} : vector<80x64xf32>, vector<64x128xf32>, vector<80x128xf32> -> vector<80x128xf32>
    %141 = arith.addf %136, %140 : vector<80x128xf32>
    %c19_142 = arith.constant 19 : index
    %c0_143 = arith.constant 0 : index
    %142 = vector.load %arg20[%c19_142, %c0_143] : memref<120x64xf32, #tpu.memory_space<vmem>>, vector<80x64xf32>
    %c3_144 = arith.constant 3 : index
    %c0_145 = arith.constant 0 : index
    %c0_146 = arith.constant 0 : index
    %143 = vector.load %arg7[%c3_144, %c0_145, %c0_146] : memref<9x64x128xf32, #tpu.memory_space<vmem>>, vector<1x64x128xf32>
    %144 = vector.shape_cast %143 : vector<1x64x128xf32> to vector<64x128xf32>
    %cst_147 = arith.constant dense<0.000000e+00> : vector<80x128xf32>
    %145 = tpu.matmul %142, %144, %cst_147 {dimension_numbers = #tpu.dot_dimension_numbers<[1], [0], [0], [1], [0, 0, 1, 1], [], []>} : vector<80x64xf32>, vector<64x128xf32>, vector<80x128xf32> -> vector<80x128xf32>
    %146 = arith.addf %141, %145 : vector<80x128xf32>
    %c20_148 = arith.constant 20 : index
    %c0_149 = arith.constant 0 : index
    %147 = vector.load %arg20[%c20_148, %c0_149] : memref<120x64xf32, #tpu.memory_space<vmem>>, vector<80x64xf32>
    %c4_150 = arith.constant 4 : index
    %c0_151 = arith.constant 0 : index
    %c0_152 = arith.constant 0 : index
    %148 = vector.load %arg7[%c4_150, %c0_151, %c0_152] : memref<9x64x128xf32, #tpu.memory_space<vmem>>, vector<1x64x128xf32>
    %149 = vector.shape_cast %148 : vector<1x64x128xf32> to vector<64x128xf32>
    %cst_153 = arith.constant dense<0.000000e+00> : vector<80x128xf32>
    %150 = tpu.matmul %147, %149, %cst_153 {dimension_numbers = #tpu.dot_dimension_numbers<[1], [0], [0], [1], [0, 0, 1, 1], [], []>} : vector<80x64xf32>, vector<64x128xf32>, vector<80x128xf32> -> vector<80x128xf32>
    %151 = arith.addf %146, %150 : vector<80x128xf32>
    %c21_154 = arith.constant 21 : index
    %c0_155 = arith.constant 0 : index
    %152 = vector.load %arg20[%c21_154, %c0_155] : memref<120x64xf32, #tpu.memory_space<vmem>>, vector<80x64xf32>
    %c5_156 = arith.constant 5 : index
    %c0_157 = arith.constant 0 : index
    %c0_158 = arith.constant 0 : index
    %153 = vector.load %arg7[%c5_156, %c0_157, %c0_158] : memref<9x64x128xf32, #tpu.memory_space<vmem>>, vector<1x64x128xf32>
    %154 = vector.shape_cast %153 : vector<1x64x128xf32> to vector<64x128xf32>
    %cst_159 = arith.constant dense<0.000000e+00> : vector<80x128xf32>
    %155 = tpu.matmul %152, %154, %cst_159 {dimension_numbers = #tpu.dot_dimension_numbers<[1], [0], [0], [1], [0, 0, 1, 1], [], []>} : vector<80x64xf32>, vector<64x128xf32>, vector<80x128xf32> -> vector<80x128xf32>
    %156 = arith.addf %151, %155 : vector<80x128xf32>
    %c29_160 = arith.constant 29 : index
    %c0_161 = arith.constant 0 : index
    %157 = vector.load %arg20[%c29_160, %c0_161] : memref<120x64xf32, #tpu.memory_space<vmem>>, vector<80x64xf32>
    %c6_162 = arith.constant 6 : index
    %c0_163 = arith.constant 0 : index
    %c0_164 = arith.constant 0 : index
    %158 = vector.load %arg7[%c6_162, %c0_163, %c0_164] : memref<9x64x128xf32, #tpu.memory_space<vmem>>, vector<1x64x128xf32>
    %159 = vector.shape_cast %158 : vector<1x64x128xf32> to vector<64x128xf32>
    %cst_165 = arith.constant dense<0.000000e+00> : vector<80x128xf32>
    %160 = tpu.matmul %157, %159, %cst_165 {dimension_numbers = #tpu.dot_dimension_numbers<[1], [0], [0], [1], [0, 0, 1, 1], [], []>} : vector<80x64xf32>, vector<64x128xf32>, vector<80x128xf32> -> vector<80x128xf32>
    %161 = arith.addf %156, %160 : vector<80x128xf32>
    %c30_166 = arith.constant 30 : index
    %c0_167 = arith.constant 0 : index
    %162 = vector.load %arg20[%c30_166, %c0_167] : memref<120x64xf32, #tpu.memory_space<vmem>>, vector<80x64xf32>
    %c7_168 = arith.constant 7 : index
    %c0_169 = arith.constant 0 : index
    %c0_170 = arith.constant 0 : index
    %163 = vector.load %arg7[%c7_168, %c0_169, %c0_170] : memref<9x64x128xf32, #tpu.memory_space<vmem>>, vector<1x64x128xf32>
    %164 = vector.shape_cast %163 : vector<1x64x128xf32> to vector<64x128xf32>
    %cst_171 = arith.constant dense<0.000000e+00> : vector<80x128xf32>
    %165 = tpu.matmul %162, %164, %cst_171 {dimension_numbers = #tpu.dot_dimension_numbers<[1], [0], [0], [1], [0, 0, 1, 1], [], []>} : vector<80x64xf32>, vector<64x128xf32>, vector<80x128xf32> -> vector<80x128xf32>
    %166 = arith.addf %161, %165 : vector<80x128xf32>
    %c31_172 = arith.constant 31 : index
    %c0_173 = arith.constant 0 : index
    %167 = vector.load %arg20[%c31_172, %c0_173] : memref<120x64xf32, #tpu.memory_space<vmem>>, vector<80x64xf32>
    %c8_174 = arith.constant 8 : index
    %c0_175 = arith.constant 0 : index
    %c0_176 = arith.constant 0 : index
    %168 = vector.load %arg7[%c8_174, %c0_175, %c0_176] : memref<9x64x128xf32, #tpu.memory_space<vmem>>, vector<1x64x128xf32>
    %169 = vector.shape_cast %168 : vector<1x64x128xf32> to vector<64x128xf32>
    %cst_177 = arith.constant dense<0.000000e+00> : vector<80x128xf32>
    %170 = tpu.matmul %167, %169, %cst_177 {dimension_numbers = #tpu.dot_dimension_numbers<[1], [0], [0], [1], [0, 0, 1, 1], [], []>} : vector<80x64xf32>, vector<64x128xf32>, vector<80x128xf32> -> vector<80x128xf32>
    %171 = arith.addf %166, %170 : vector<80x128xf32>
    %c0_178 = arith.constant 0 : index
    %c0_179 = arith.constant 0 : index
    %172 = vector.load %arg8[%c0_178, %c0_179] : memref<1x128xf32, #tpu.memory_space<vmem>>, vector<1x128xf32>
    %173 = vector.broadcast %172 : vector<1x128xf32> to vector<80x128xf32>
    %174 = arith.addf %171, %173 : vector<80x128xf32>
    %cst_180 = arith.constant 0.000000e+00 : f32
    %175 = vector.broadcast %cst_180 : f32 to vector<80x128xf32>
    %176 = arith.maximumf %174, %175 : vector<80x128xf32>
    %c0_181 = arith.constant 0 : index
    %c0_182 = arith.constant 0 : index
    %177 = vector.load %arg9[%c0_181, %c0_182] : memref<128x8xf32, #tpu.memory_space<vmem>>, vector<128x8xf32>
    %cst_183 = arith.constant dense<0.000000e+00> : vector<80x8xf32>
    %178 = tpu.matmul %176, %177, %cst_183 {dimension_numbers = #tpu.dot_dimension_numbers<[1], [0], [0], [1], [0, 0, 1, 1], [], []>} : vector<80x128xf32>, vector<128x8xf32>, vector<80x8xf32> -> vector<80x8xf32>
    %c0_184 = arith.constant 0 : index
    %c0_185 = arith.constant 0 : index
    %179 = vector.load %arg10[%c0_184, %c0_185] : memref<1x8xf32, #tpu.memory_space<vmem>>, vector<1x8xf32>
    %180 = vector.broadcast %179 : vector<1x8xf32> to vector<80x8xf32>
    %181 = arith.addf %178, %180 : vector<80x8xf32>
    %cst_186 = arith.constant 0.000000e+00 : f32
    %182 = vector.broadcast %cst_186 : f32 to vector<80x8xf32>
    %183 = arith.maximumf %181, %182 : vector<80x8xf32>
    %184 = vector.extract_strided_slice %183 {offsets = [0, 0], sizes = [80, 1], strides = [1, 1]} : vector<80x8xf32> to vector<80x1xf32>
    %c0_187 = arith.constant 0 : index
    %c0_188 = arith.constant 0 : index
    %c0_189 = arith.constant 0 : index
    %185 = vector.load %arg11[%c0_187, %c0_188, %c0_189] : memref<4x80x64xf32, #tpu.memory_space<vmem>>, vector<1x80x64xf32>
    %186 = vector.shape_cast %185 : vector<1x80x64xf32> to vector<80x64xf32>
    %187 = vector.broadcast %184 : vector<80x1xf32> to vector<80x64xf32>
    %188 = arith.mulf %187, %186 : vector<80x64xf32>
    %189 = vector.extract_strided_slice %183 {offsets = [0, 1], sizes = [80, 1], strides = [1, 1]} : vector<80x8xf32> to vector<80x1xf32>
    %c1_190 = arith.constant 1 : index
    %c0_191 = arith.constant 0 : index
    %c0_192 = arith.constant 0 : index
    %190 = vector.load %arg11[%c1_190, %c0_191, %c0_192] : memref<4x80x64xf32, #tpu.memory_space<vmem>>, vector<1x80x64xf32>
    %191 = vector.shape_cast %190 : vector<1x80x64xf32> to vector<80x64xf32>
    %192 = vector.broadcast %189 : vector<80x1xf32> to vector<80x64xf32>
    %193 = arith.mulf %192, %191 : vector<80x64xf32>
    %194 = arith.addf %188, %193 : vector<80x64xf32>
    %195 = vector.extract_strided_slice %183 {offsets = [0, 2], sizes = [80, 1], strides = [1, 1]} : vector<80x8xf32> to vector<80x1xf32>
    %c2_193 = arith.constant 2 : index
    %c0_194 = arith.constant 0 : index
    %c0_195 = arith.constant 0 : index
    %196 = vector.load %arg11[%c2_193, %c0_194, %c0_195] : memref<4x80x64xf32, #tpu.memory_space<vmem>>, vector<1x80x64xf32>
    %197 = vector.shape_cast %196 : vector<1x80x64xf32> to vector<80x64xf32>
    %198 = vector.broadcast %195 : vector<80x1xf32> to vector<80x64xf32>
    %199 = arith.mulf %198, %197 : vector<80x64xf32>
    %200 = arith.addf %194, %199 : vector<80x64xf32>
    %201 = vector.extract_strided_slice %183 {offsets = [0, 3], sizes = [80, 1], strides = [1, 1]} : vector<80x8xf32> to vector<80x1xf32>
    %c3_196 = arith.constant 3 : index
    %c0_197 = arith.constant 0 : index
    %c0_198 = arith.constant 0 : index
    %202 = vector.load %arg11[%c3_196, %c0_197, %c0_198] : memref<4x80x64xf32, #tpu.memory_space<vmem>>, vector<1x80x64xf32>
    %203 = vector.shape_cast %202 : vector<1x80x64xf32> to vector<80x64xf32>
    %204 = vector.broadcast %201 : vector<80x1xf32> to vector<80x64xf32>
    %205 = arith.mulf %204, %203 : vector<80x64xf32>
    %206 = arith.addf %200, %205 : vector<80x64xf32>
    %cst_199 = arith.constant dense<0.000000e+00> : vector<64xf32>
    %207 = vector.multi_reduction <add>, %206, %cst_199 [0] : vector<80x64xf32> to vector<64xf32>
    %208 = vector.shape_cast %207 : vector<64xf32> to vector<1x64xf32>
    %c0_200 = arith.constant 0 : index
    %c0_201 = arith.constant 0 : index
    %209 = vector.load %arg12[%c0_200, %c0_201] : memref<1x64xf32, #tpu.memory_space<vmem>>, vector<1x64xf32>
    %210 = arith.addf %208, %209 : vector<1x64xf32>
    %cst_202 = arith.constant dense<0xFF800000> : vector<1xf32>
    %211 = vector.multi_reduction <maximumf>, %210, %cst_202 [1] : vector<1x64xf32> to vector<1xf32>
    %212 = vector.shape_cast %211 : vector<1xf32> to vector<1x1xf32>
    %213 = vector.broadcast %212 : vector<1x1xf32> to vector<1x64xf32>
    %214 = arith.subf %210, %213 : vector<1x64xf32>
    %215 = math.exp %214 : vector<1x64xf32>
    %cst_203 = arith.constant dense<0.000000e+00> : vector<1xf32>
    %216 = vector.multi_reduction <add>, %215, %cst_203 [1] : vector<1x64xf32> to vector<1xf32>
    %217 = vector.shape_cast %216 : vector<1xf32> to vector<1x1xf32>
    %218 = math.log %217 : vector<1x1xf32>
    %219 = vector.broadcast %218 : vector<1x1xf32> to vector<1x64xf32>
    %220 = arith.subf %214, %219 : vector<1x64xf32>
    %c0_204 = arith.constant 0 : index
    %c0_205 = arith.constant 0 : index
    %c0_206 = arith.constant 0 : index
    %221 = vector.load %arg17[%c0_204, %c0_205, %c0_206] : memref<1x1x64xf32, #tpu.memory_space<vmem>>, vector<1x1x64xf32>
    %222 = vector.shape_cast %221 : vector<1x1x64xf32> to vector<1x64xf32>
    %223 = vector.shape_cast %220 : vector<1x64xf32> to vector<1x1x64xf32>
    tpu.vector_store %arg17[%c0_204, %c0_205, %c0_206], %223 {strides = array<i32>} : memref<1x1x64xf32, #tpu.memory_space<vmem>>, vector<1x1x64xf32>,
    %224 = vector.extract_strided_slice %183 {offsets = [0, 4], sizes = [80, 1], strides = [1, 1]} : vector<80x8xf32> to vector<80x1xf32>
    %c0_207 = arith.constant 0 : index
    %c0_208 = arith.constant 0 : index
    %c0_209 = arith.constant 0 : index
    %225 = vector.load %arg13[%c0_207, %c0_208, %c0_209] : memref<2x80x64xf32, #tpu.memory_space<vmem>>, vector<1x80x64xf32>
    %226 = vector.shape_cast %225 : vector<1x80x64xf32> to vector<80x64xf32>
    %227 = vector.broadcast %224 : vector<80x1xf32> to vector<80x64xf32>
    %228 = arith.mulf %227, %226 : vector<80x64xf32>
    %229 = vector.extract_strided_slice %183 {offsets = [0, 5], sizes = [80, 1], strides = [1, 1]} : vector<80x8xf32> to vector<80x1xf32>
    %c1_210 = arith.constant 1 : index
    %c0_211 = arith.constant 0 : index
    %c0_212 = arith.constant 0 : index
    %230 = vector.load %arg13[%c1_210, %c0_211, %c0_212] : memref<2x80x64xf32, #tpu.memory_space<vmem>>, vector<1x80x64xf32>
    %231 = vector.shape_cast %230 : vector<1x80x64xf32> to vector<80x64xf32>
    %232 = vector.broadcast %229 : vector<80x1xf32> to vector<80x64xf32>
    %233 = arith.mulf %232, %231 : vector<80x64xf32>
    %234 = arith.addf %228, %233 : vector<80x64xf32>
    %cst_213 = arith.constant dense<0.000000e+00> : vector<64xf32>
    %235 = vector.multi_reduction <add>, %234, %cst_213 [0] : vector<80x64xf32> to vector<64xf32>
    %236 = vector.shape_cast %235 : vector<64xf32> to vector<1x64xf32>
    %c0_214 = arith.constant 0 : index
    %c0_215 = arith.constant 0 : index
    %237 = vector.load %arg14[%c0_214, %c0_215] : memref<1x64xf32, #tpu.memory_space<vmem>>, vector<1x64xf32>
    %238 = arith.addf %236, %237 : vector<1x64xf32>
    %cst_216 = arith.constant 0.000000e+00 : f32
    %239 = vector.broadcast %cst_216 : f32 to vector<1x64xf32>
    %240 = arith.maximumf %238, %239 : vector<1x64xf32>
    %c0_217 = arith.constant 0 : index
    %c0_218 = arith.constant 0 : index
    %241 = vector.load %arg15[%c0_217, %c0_218] : memref<1x64xf32, #tpu.memory_space<vmem>>, vector<1x64xf32>
    %242 = arith.mulf %240, %241 : vector<1x64xf32>
    %cst_219 = arith.constant dense<0.000000e+00> : vector<1xf32>
    %243 = vector.multi_reduction <add>, %242, %cst_219 [1] : vector<1x64xf32> to vector<1xf32>
    %244 = vector.shape_cast %243 : vector<1xf32> to vector<1x1xf32>
    %c0_220 = arith.constant 0 : index
    %c0_221 = arith.constant 0 : index
    %245 = vector.load %arg16[%c0_220, %c0_221] : memref<1x1xf32, #tpu.memory_space<vmem>>, vector<1x1xf32>
    %246 = arith.addf %244, %245 : vector<1x1xf32>
    %247 = math.tanh %246 : vector<1x1xf32>
    %c0_222 = arith.constant 0 : index
    %c0_223 = arith.constant 0 : index
    %c0_224 = arith.constant 0 : index
    %248 = vector.load %arg18[%c0_222, %c0_223, %c0_224] : memref<1x1x1xf32, #tpu.memory_space<vmem>>, vector<1x1x1xf32>
    %249 = vector.shape_cast %248 : vector<1x1x1xf32> to vector<1x1xf32>
    %250 = vector.shape_cast %247 : vector<1x1xf32> to vector<1x1x1xf32>
    tpu.vector_store %arg18[%c0_222, %c0_223, %c0_224], %250 {strides = array<i32>} : memref<1x1x1xf32, #tpu.memory_space<vmem>>, vector<1x1x1xf32>,
    return
  }
  func.func @transform_0(%arg0: i32) -> (i32, i32, i32) {
    %c0_i32 = arith.constant 0 : i32
    %c0_i32_0 = arith.constant 0 : i32
    %c0_i32_1 = arith.constant 0 : i32
    return %arg0, %c0_i32, %c0_i32_0 : i32, i32, i32
  }
  func.func @transform_1(%arg0: i32) -> (i32, i32) {
    %c0_i32 = arith.constant 0 : i32
    %c0_i32_0 = arith.constant 0 : i32
    %c0_i32_1 = arith.constant 0 : i32
    return %c0_i32, %c0_i32_0 : i32, i32
  }
  func.func @transform_2(%arg0: i32) -> (i32, i32, i32) {
    %c0_i32 = arith.constant 0 : i32
    %c0_i32_0 = arith.constant 0 : i32
    %c0_i32_1 = arith.constant 0 : i32
    %c0_i32_2 = arith.constant 0 : i32
    return %c0_i32, %c0_i32_0, %c0_i32_1 : i32, i32, i32
  }
  func.func @transform_3(%arg0: i32) -> (i32, i32) {
    %c0_i32 = arith.constant 0 : i32
    %c0_i32_0 = arith.constant 0 : i32
    %c0_i32_1 = arith.constant 0 : i32
    return %c0_i32, %c0_i32_0 : i32, i32
  }
  func.func @transform_4(%arg0: i32) -> (i32, i32, i32) {
    %c0_i32 = arith.constant 0 : i32
    %c0_i32_0 = arith.constant 0 : i32
    %c0_i32_1 = arith.constant 0 : i32
    %c0_i32_2 = arith.constant 0 : i32
    return %c0_i32, %c0_i32_0, %c0_i32_1 : i32, i32, i32
  }
  func.func @transform_5(%arg0: i32) -> (i32, i32) {
    %c0_i32 = arith.constant 0 : i32
    %c0_i32_0 = arith.constant 0 : i32
    %c0_i32_1 = arith.constant 0 : i32
    return %c0_i32, %c0_i32_0 : i32, i32
  }
  func.func @transform_6(%arg0: i32) -> (i32, i32, i32) {
    %c0_i32 = arith.constant 0 : i32
    %c0_i32_0 = arith.constant 0 : i32
    %c0_i32_1 = arith.constant 0 : i32
    %c0_i32_2 = arith.constant 0 : i32
    return %c0_i32, %c0_i32_0, %c0_i32_1 : i32, i32, i32
  }
  func.func @transform_7(%arg0: i32) -> (i32, i32) {
    %c0_i32 = arith.constant 0 : i32
    %c0_i32_0 = arith.constant 0 : i32
    %c0_i32_1 = arith.constant 0 : i32
    return %c0_i32, %c0_i32_0 : i32, i32
  }
  func.func @transform_8(%arg0: i32) -> (i32, i32) {
    %c0_i32 = arith.constant 0 : i32
    %c0_i32_0 = arith.constant 0 : i32
    %c0_i32_1 = arith.constant 0 : i32
    return %c0_i32, %c0_i32_0 : i32, i32
  }
  func.func @transform_9(%arg0: i32) -> (i32, i32) {
    %c0_i32 = arith.constant 0 : i32
    %c0_i32_0 = arith.constant 0 : i32
    %c0_i32_1 = arith.constant 0 : i32
    return %c0_i32, %c0_i32_0 : i32, i32
  }
  func.func @transform_10(%arg0: i32) -> (i32, i32, i32) {
    %c0_i32 = arith.constant 0 : i32
    %c0_i32_0 = arith.constant 0 : i32
    %c0_i32_1 = arith.constant 0 : i32
    %c0_i32_2 = arith.constant 0 : i32
    return %c0_i32, %c0_i32_0, %c0_i32_1 : i32, i32, i32
  }
  func.func @transform_11(%arg0: i32) -> (i32, i32) {
    %c0_i32 = arith.constant 0 : i32
    %c0_i32_0 = arith.constant 0 : i32
    %c0_i32_1 = arith.constant 0 : i32
    return %c0_i32, %c0_i32_0 : i32, i32
  }
  func.func @transform_12(%arg0: i32) -> (i32, i32, i32) {
    %c0_i32 = arith.constant 0 : i32
    %c0_i32_0 = arith.constant 0 : i32
    %c0_i32_1 = arith.constant 0 : i32
    %c0_i32_2 = arith.constant 0 : i32
    return %c0_i32, %c0_i32_0, %c0_i32_1 : i32, i32, i32
  }
  func.func @transform_13(%arg0: i32) -> (i32, i32) {
    %c0_i32 = arith.constant 0 : i32
    %c0_i32_0 = arith.constant 0 : i32
    %c0_i32_1 = arith.constant 0 : i32
    return %c0_i32, %c0_i32_0 : i32, i32
  }
  func.func @transform_14(%arg0: i32) -> (i32, i32) {
    %c0_i32 = arith.constant 0 : i32
    %c0_i32_0 = arith.constant 0 : i32
    %c0_i32_1 = arith.constant 0 : i32
    return %c0_i32, %c0_i32_0 : i32, i32
  }
  func.func @transform_15(%arg0: i32) -> (i32, i32) {
    %c0_i32 = arith.constant 0 : i32
    %c0_i32_0 = arith.constant 0 : i32
    %c0_i32_1 = arith.constant 0 : i32
    return %c0_i32, %c0_i32_0 : i32, i32
  }
  func.func @transform_16(%arg0: i32) -> (i32, i32, i32) {
    %c0_i32 = arith.constant 0 : i32
    %c0_i32_0 = arith.constant 0 : i32
    %c0_i32_1 = arith.constant 0 : i32
    return %arg0, %c0_i32, %c0_i32_0 : i32, i32, i32
  }
  func.func @transform_17(%arg0: i32) -> (i32, i32, i32) {
    %c0_i32 = arith.constant 0 : i32
    %c0_i32_0 = arith.constant 0 : i32
    %c0_i32_1 = arith.constant 0 : i32
    return %arg0, %c0_i32, %c0_i32_0 : i32, i32, i32
  }
}

</mosaic_0001>

<llo_original>
// kernel: ac_forward.1
$region0: #{ac_forward.1}
  #allocation0 [shape = 'u32[]', space=smem, size = 0x4, offset = 0x4, fixed_abs, tag = 'smem constant byte address 0x4 - core index']
  #allocation1 [shape = 'u32[72,128]{1,0:T(1,128)}', space=vmem, size = 0x9000, scoped, tag = 'internal scratch']
  #allocation2 [shape = 'f32[120,32]{1,0:T(8,128)}', space=vmem, size = 0xf000, scoped, tag = 'scratch operand']
  #allocation3 [shape = 'f32[120,64]{1,0:T(8,128)}', space=vmem, size = 0xf000, scoped, tag = 'scratch operand']
  #allocation4 [shape = 'f32[1,1]{1,0:T(1,128)S(1)}', space=vmem, size = 0x200, scoped, tag = 'scoped memory for ac_forward.1']
  %s0 = inlined_call_operand.vmem [shape: f32[2,120,8], index: 0, kind: input, shape index: {}]
  %s1 = inlined_call_operand.vmem [shape: f32[80,1], index: 1, kind: input, shape index: {}]
  %s2 = inlined_call_operand.vmem [shape: f32[9,8,32], index: 2, kind: input, shape index: {}]
  %s3 = inlined_call_operand.vmem [shape: f32[1,32], index: 3, kind: input, shape index: {}]
  %s4 = inlined_call_operand.vmem [shape: f32[9,32,64], index: 4, kind: input, shape index: {}]
  %s5 = inlined_call_operand.vmem [shape: f32[1,64], index: 5, kind: input, shape index: {}]
  %s6 = inlined_call_operand.vmem [shape: f32[9,64,128], index: 6, kind: input, shape index: {}]
  %s7 = inlined_call_operand.vmem [shape: f32[1,128], index: 7, kind: input, shape index: {}]
  %s8 = inlined_call_operand.vmem [shape: f32[128,8], index: 8, kind: input, shape index: {}]
  %s9 = inlined_call_operand.vmem [shape: f32[1,8], index: 9, kind: input, shape index: {}]
  %s10 = inlined_call_operand.vmem [shape: f32[4,80,64], index: 10, kind: input, shape index: {}]
  %s11 = inlined_call_operand.vmem [shape: f32[1,64], index: 11, kind: input, shape index: {}]
  %s12 = inlined_call_operand.vmem [shape: f32[2,80,64], index: 12, kind: input, shape index: {}]
  %s13 = inlined_call_operand.vmem [shape: f32[1,64], index: 13, kind: input, shape index: {}]
  %s14 = inlined_call_operand.vmem [shape: f32[1,64], index: 14, kind: input, shape index: {}]
  %s15 = inlined_call_operand.<no memory space> [shape: f32[1,1], index: 15, kind: input, shape index: {}]
  %s16 = inlined_call_operand.hbm [shape: f32[2,1,64], index: 16, kind: output, shape index: {0}]
  %s17 = inlined_call_operand.vmem [shape: f32[2,1,1], index: 17, kind: output, shape index: {1}]
  %18 = xla_tuple %s16, %s17
  %s19 = sld [smem:[#allocation0]]
  $region105: #{ac_forward.1} parent=0
    _
  %s21 = ssub.s32 1, %s19
  %s22 = scalar_select 0, %s21, %s19
  %v23 = vstv %s15
  %24 = vst [vmem:[#allocation4] sm:$0x1] %v23
  $region1: #{ac_forward.1} parent=0
    #allocation5 [shape = 'u8[1024]{0}', space=vmem, size = 0x400, scoped, tag = 'output window, operand 0']
    #allocation6 [shape = 's32[2]{0}', space=sflag, size = 0x8, scoped, tag = 'scoped memory for ac_forward.1']
    %25 = vsyncpa [#allocation6], 0
    %s26 = scalar_lea.sflag [#allocation6], 1
    %27 = vsyncpa %s26, 0
    loop: start=0, step=1, limit=4
    $region2: #{ac_forward.1} parent=1 // loop_pre_header
      _
    $region3: #{ac_forward.1} parent=1 // loop_header
      %s29 = sphi 0, %s33
      %p30 = scmp.ge.s32.totalorder %s29, 4
      %s39 = sphi 0, %s41
      %s42 = sphi 0, %s39
      %s43 = sphi 0, %s42
      %s59 = sphi 0, %s43
      %s63 = sphi 0, %s63
      %s65 = sphi 0, %s63
      %s66 = sphi 0, %s65
      %s80 = sphi 0, %s66
      %s84 = sphi 0, %s84
      %s86 = sphi 0, %s84
      %s87 = sphi 0, %s86
      %s101 = sphi 0, %s87
      %s105 = sphi 0, %s105
      %s107 = sphi 0, %s105
      %s108 = sphi 0, %s107
      %s122 = sphi 0, %s108
      %s126 = sphi 0, %s126
      %s128 = sphi 0, %s126
      %s129 = sphi 0, %s128
      %s143 = sphi 0, %s129
      %s147 = sphi 0, %s147
      %s149 = sphi 0, %s147
      %s150 = sphi 0, %s149
      %s164 = sphi 0, %s150
      %s168 = sphi 0, %s168
      %s170 = sphi 0, %s168
      %s171 = sphi 0, %s170
      %s185 = sphi 0, %s171
      %s189 = sphi 0, %s189
      %s191 = sphi 0, %s189
      %s192 = sphi 0, %s191
      %s206 = sphi 0, %s192
      %s210 = sphi 0, %s210
      %s212 = sphi 0, %s210
      %s213 = sphi 0, %s212
      %s227 = sphi 0, %s213
      %s231 = sphi 0, %s231
      %s233 = sphi 0, %s231
      %s234 = sphi 0, %s233
      %s248 = sphi 0, %s234
      %s252 = sphi 0, %s252
      %s254 = sphi 0, %s252
      %s255 = sphi 0, %s254
      %s269 = sphi 0, %s255
      %s273 = sphi 0, %s273
      %s275 = sphi 0, %s273
      %s276 = sphi 0, %s275
      %s290 = sphi 0, %s276
      %s294 = sphi 0, %s294
      %s296 = sphi 0, %s294
      %s297 = sphi 0, %s296
      %s311 = sphi 0, %s297
      %s315 = sphi 0, %s315
      %s317 = sphi 0, %s315
      %s318 = sphi 0, %s317
      %s332 = sphi 0, %s318
      %s336 = sphi 0, %s336
      %s338 = sphi 0, %s336
      %s339 = sphi 0, %s338
      %s353 = sphi 0, %s339
      %s357 = sphi 0, %s357
      %s359 = sphi 0, %s357
      %s360 = sphi 0, %s359
      %s374 = sphi 0, %s360
      %s380 = sphi 0, %s382
      %s383 = sphi 0, %s380
      %s384 = sphi 0, %s383
      %s400 = sphi 0, %s384
      %s406 = sphi 0, %s408
      %s409 = sphi 0, %s406
      %s410 = sphi 0, %s409
      %s426 = sphi 0, %s410
    $region4: #{ac_forward.1} parent=1 // loop_header_branch
      %32 = sbr.rel (%p30) target = $region8
    $region5: #{ac_forward.1} parent=1 // loop_body
      %s34 = ssub.s32 %s29, 1
      %s35 = ssub.s32 %s29, 2
      %s36 = sadd.s32 %s29, 1
      %s37 = ssub.s32 %s29, %s36
      %p38 = scmp.eq.s32.totalorder %s37, 0
      %s40 = sadd.s32 %s39, 1
      %s41 = scalar_select %p38, %s39, %s40
      %p44 = pneg %p38
      %p45 = scmp.eq.s32.totalorder %s29, 1
      %p46 = por %p44, %p45
      %p47 = scmp.ne.s32.totalorder %s39, %s42
      %p48 = scmp.eq.s32.totalorder %s29, 0
      %p49 = por %p47, %p48
      %p50 = scmp.ne.s32.totalorder %s39, %s42
      %p51 = scmp.eq.s32.totalorder %s34, 1
      %p52 = por %p50, %p51
      %p53 = scmp.ne.s32.totalorder %s42, %s43
      %p54 = scmp.eq.s32.totalorder %s34, 0
      %p55 = por %p53, %p54
      %p56 = scmp.ne.s32.totalorder %s42, %s43
      %p57 = scmp.eq.s32.totalorder %s35, 1
      %p58 = por %p56, %p57
      %p60 = scmp.ne.s32.totalorder %s43, %s59
      %p61 = scmp.eq.s32.totalorder %s35, 0
      %p62 = por %p60, %p61
      %s64 = sadd.s32 %s63, 1
      %p67 = scmp.eq.s32.totalorder %s29, 1
      %p68 = scmp.ne.s32.totalorder %s63, %s65
      %p69 = scmp.eq.s32.totalorder %s29, 0
      %p70 = por %p68, %p69
      %p71 = scmp.ne.s32.totalorder %s63, %s65
      %p72 = scmp.eq.s32.totalorder %s34, 1
      %p73 = por %p71, %p72
      %p74 = scmp.ne.s32.totalorder %s65, %s66
      %p75 = scmp.eq.s32.totalorder %s34, 0
      %p76 = por %p74, %p75
      %p77 = scmp.ne.s32.totalorder %s65, %s66
      %p78 = scmp.eq.s32.totalorder %s35, 1
      %p79 = por %p77, %p78
      %p81 = scmp.ne.s32.totalorder %s66, %s80
      %p82 = scmp.eq.s32.totalorder %s35, 0
      %p83 = por %p81, %p82
      %s85 = sadd.s32 %s84, 1
      %p88 = scmp.eq.s32.totalorder %s29, 1
      %p89 = scmp.ne.s32.totalorder %s84, %s86
      %p90 = scmp.eq.s32.totalorder %s29, 0
      %p91 = por %p89, %p90
      %p92 = scmp.ne.s32.totalorder %s84, %s86
      %p93 = scmp.eq.s32.totalorder %s34, 1
      %p94 = por %p92, %p93
      %p95 = scmp.ne.s32.totalorder %s86, %s87
      %p96 = scmp.eq.s32.totalorder %s34, 0
      %p97 = por %p95, %p96
      %p98 = scmp.ne.s32.totalorder %s86, %s87
      %p99 = scmp.eq.s32.totalorder %s35, 1
      %p100 = por %p98, %p99
      %p102 = scmp.ne.s32.totalorder %s87, %s101
      %p103 = scmp.eq.s32.totalorder %s35, 0
      %p104 = por %p102, %p103
      %s106 = sadd.s32 %s105, 1
      %p109 = scmp.eq.s32.totalorder %s29, 1
      %p110 = scmp.ne.s32.totalorder %s105, %s107
      %p111 = scmp.eq.s32.totalorder %s29, 0
      %p112 = por %p110, %p111
      %p113 = scmp.ne.s32.totalorder %s105, %s107
      %p114 = scmp.eq.s32.totalorder %s34, 1
      %p115 = por %p113, %p114
      %p116 = scmp.ne.s32.totalorder %s107, %s108
      %p117 = scmp.eq.s32.totalorder %s34, 0
      %p118 = por %p116, %p117
      %p119 = scmp.ne.s32.totalorder %s107, %s108
      %p120 = scmp.eq.s32.totalorder %s35, 1
      %p121 = por %p119, %p120
      %p123 = scmp.ne.s32.totalorder %s108, %s122
      %p124 = scmp.eq.s32.totalorder %s35, 0
      %p125 = por %p123, %p124
      %s127 = sadd.s32 %s126, 1
      %p130 = scmp.eq.s32.totalorder %s29, 1
      %p131 = scmp.ne.s32.totalorder %s126, %s128
      %p132 = scmp.eq.s32.totalorder %s29, 0
      %p133 = por %p131, %p132
      %p134 = scmp.ne.s32.totalorder %s126, %s128
      %p135 = scmp.eq.s32.totalorder %s34, 1
      %p136 = por %p134, %p135
      %p137 = scmp.ne.s32.totalorder %s128, %s129
      %p138 = scmp.eq.s32.totalorder %s34, 0
      %p139 = por %p137, %p138
      %p140 = scmp.ne.s32.totalorder %s128, %s129
      %p141 = scmp.eq.s32.totalorder %s35, 1
      %p142 = por %p140, %p141
      %p144 = scmp.ne.s32.totalorder %s129, %s143
      %p145 = scmp.eq.s32.totalorder %s35, 0
      %p146 = por %p144, %p145
      %s148 = sadd.s32 %s147, 1
      %p151 = scmp.eq.s32.totalorder %s29, 1
      %p152 = scmp.ne.s32.totalorder %s147, %s149
      %p153 = scmp.eq.s32.totalorder %s29, 0
      %p154 = por %p152, %p153
      %p155 = scmp.ne.s32.totalorder %s147, %s149
      %p156 = scmp.eq.s32.totalorder %s34, 1
      %p157 = por %p155, %p156
      %p158 = scmp.ne.s32.totalorder %s149, %s150
      %p159 = scmp.eq.s32.totalorder %s34, 0
      %p160 = por %p158, %p159
      %p161 = scmp.ne.s32.totalorder %s149, %s150
      %p162 = scmp.eq.s32.totalorder %s35, 1
      %p163 = por %p161, %p162
      %p165 = scmp.ne.s32.totalorder %s150, %s164
      %p166 = scmp.eq.s32.totalorder %s35, 0
      %p167 = por %p165, %p166
      %s169 = sadd.s32 %s168, 1
      %p172 = scmp.eq.s32.totalorder %s29, 1
      %p173 = scmp.ne.s32.totalorder %s168, %s170
      %p174 = scmp.eq.s32.totalorder %s29, 0
      %p175 = por %p173, %p174
      %p176 = scmp.ne.s32.totalorder %s168, %s170
      %p177 = scmp.eq.s32.totalorder %s34, 1
      %p178 = por %p176, %p177
      %p179 = scmp.ne.s32.totalorder %s170, %s171
      %p180 = scmp.eq.s32.totalorder %s34, 0
      %p181 = por %p179, %p180
      %p182 = scmp.ne.s32.totalorder %s170, %s171
      %p183 = scmp.eq.s32.totalorder %s35, 1
      %p184 = por %p182, %p183
      %p186 = scmp.ne.s32.totalorder %s171, %s185
      %p187 = scmp.eq.s32.totalorder %s35, 0
      %p188 = por %p186, %p187
      %s190 = sadd.s32 %s189, 1
      %p193 = scmp.eq.s32.totalorder %s29, 1
      %p194 = scmp.ne.s32.totalorder %s189, %s191
      %p195 = scmp.eq.s32.totalorder %s29, 0
      %p196 = por %p194, %p195
      %p197 = scmp.ne.s32.totalorder %s189, %s191
      %p198 = scmp.eq.s32.totalorder %s34, 1
      %p199 = por %p197, %p198
      %p200 = scmp.ne.s32.totalorder %s191, %s192
      %p201 = scmp.eq.s32.totalorder %s34, 0
      %p202 = por %p200, %p201
      %p203 = scmp.ne.s32.totalorder %s191, %s192
      %p204 = scmp.eq.s32.totalorder %s35, 1
      %p205 = por %p203, %p204
      %p207 = scmp.ne.s32.totalorder %s192, %s206
      %p208 = scmp.eq.s32.totalorder %s35, 0
      %p209 = por %p207, %p208
      %s211 = sadd.s32 %s210, 1
      %p214 = scmp.eq.s32.totalorder %s29, 1
      %p215 = scmp.ne.s32.totalorder %s210, %s212
      %p216 = scmp.eq.s32.totalorder %s29, 0
      %p217 = por %p215, %p216
      %p218 = scmp.ne.s32.totalorder %s210, %s212
      %p219 = scmp.eq.s32.totalorder %s34, 1
      %p220 = por %p218, %p219
      %p221 = scmp.ne.s32.totalorder %s212, %s213
      %p222 = scmp.eq.s32.totalorder %s34, 0
      %p223 = por %p221, %p222
      %p224 = scmp.ne.s32.totalorder %s212, %s213
      %p225 = scmp.eq.s32.totalorder %s35, 1
      %p226 = por %p224, %p225
      %p228 = scmp.ne.s32.totalorder %s213, %s227
      %p229 = scmp.eq.s32.totalorder %s35, 0
      %p230 = por %p228, %p229
      %s232 = sadd.s32 %s231, 1
      %p235 = scmp.eq.s32.totalorder %s29, 1
      %p236 = scmp.ne.s32.totalorder %s231, %s233
      %p237 = scmp.eq.s32.totalorder %s29, 0
      %p238 = por %p236, %p237
      %p239 = scmp.ne.s32.totalorder %s231, %s233
      %p240 = scmp.eq.s32.totalorder %s34, 1
      %p241 = por %p239, %p240
      %p242 = scmp.ne.s32.totalorder %s233, %s234
      %p243 = scmp.eq.s32.totalorder %s34, 0
      %p244 = por %p242, %p243
      %p245 = scmp.ne.s32.totalorder %s233, %s234
      %p246 = scmp.eq.s32.totalorder %s35, 1
      %p247 = por %p245, %p246
      %p249 = scmp.ne.s32.totalorder %s234, %s248
      %p250 = scmp.eq.s32.totalorder %s35, 0
      %p251 = por %p249, %p250
      %s253 = sadd.s32 %s252, 1
      %p256 = scmp.eq.s32.totalorder %s29, 1
      %p257 = scmp.ne.s32.totalorder %s252, %s254
      %p258 = scmp.eq.s32.totalorder %s29, 0
      %p259 = por %p257, %p258
      %p260 = scmp.ne.s32.totalorder %s252, %s254
      %p261 = scmp.eq.s32.totalorder %s34, 1
      %p262 = por %p260, %p261
      %p263 = scmp.ne.s32.totalorder %s254, %s255
      %p264 = scmp.eq.s32.totalorder %s34, 0
      %p265 = por %p263, %p264
      %p266 = scmp.ne.s32.totalorder %s254, %s255
      %p267 = scmp.eq.s32.totalorder %s35, 1
      %p268 = por %p266, %p267
      %p270 = scmp.ne.s32.totalorder %s255, %s269
      %p271 = scmp.eq.s32.totalorder %s35, 0
      %p272 = por %p270, %p271
      %s274 = sadd.s32 %s273, 1
      %p277 = scmp.eq.s32.totalorder %s29, 1
      %p278 = scmp.ne.s32.totalorder %s273, %s275
      %p279 = scmp.eq.s32.totalorder %s29, 0
      %p280 = por %p278, %p279
      %p281 = scmp.ne.s32.totalorder %s273, %s275
      %p282 = scmp.eq.s32.totalorder %s34, 1
      %p283 = por %p281, %p282
      %p284 = scmp.ne.s32.totalorder %s275, %s276
      %p285 = scmp.eq.s32.totalorder %s34, 0
      %p286 = por %p284, %p285
      %p287 = scmp.ne.s32.totalorder %s275, %s276
      %p288 = scmp.eq.s32.totalorder %s35, 1
      %p289 = por %p287, %p288
      %p291 = scmp.ne.s32.totalorder %s276, %s290
      %p292 = scmp.eq.s32.totalorder %s35, 0
      %p293 = por %p291, %p292
      %s295 = sadd.s32 %s294, 1
      %p298 = scmp.eq.s32.totalorder %s29, 1
      %p299 = scmp.ne.s32.totalorder %s294, %s296
      %p300 = scmp.eq.s32.totalorder %s29, 0
      %p301 = por %p299, %p300
      %p302 = scmp.ne.s32.totalorder %s294, %s296
      %p303 = scmp.eq.s32.totalorder %s34, 1
      %p304 = por %p302, %p303
      %p305 = scmp.ne.s32.totalorder %s296, %s297
      %p306 = scmp.eq.s32.totalorder %s34, 0
      %p307 = por %p305, %p306
      %p308 = scmp.ne.s32.totalorder %s296, %s297
      %p309 = scmp.eq.s32.totalorder %s35, 1
      %p310 = por %p308, %p309
      %p312 = scmp.ne.s32.totalorder %s297, %s311
      %p313 = scmp.eq.s32.totalorder %s35, 0
      %p314 = por %p312, %p313
      %s316 = sadd.s32 %s315, 1
      %p319 = scmp.eq.s32.totalorder %s29, 1
      %p320 = scmp.ne.s32.totalorder %s315, %s317
      %p321 = scmp.eq.s32.totalorder %s29, 0
      %p322 = por %p320, %p321
      %p323 = scmp.ne.s32.totalorder %s315, %s317
      %p324 = scmp.eq.s32.totalorder %s34, 1
      %p325 = por %p323, %p324
      %p326 = scmp.ne.s32.totalorder %s317, %s318
      %p327 = scmp.eq.s32.totalorder %s34, 0
      %p328 = por %p326, %p327
      %p329 = scmp.ne.s32.totalorder %s317, %s318
      %p330 = scmp.eq.s32.totalorder %s35, 1
      %p331 = por %p329, %p330
      %p333 = scmp.ne.s32.totalorder %s318, %s332
      %p334 = scmp.eq.s32.totalorder %s35, 0
      %p335 = por %p333, %p334
      %s337 = sadd.s32 %s336, 1
      %p340 = scmp.eq.s32.totalorder %s29, 1
      %p341 = scmp.ne.s32.totalorder %s336, %s338
      %p342 = scmp.eq.s32.totalorder %s29, 0
      %p343 = por %p341, %p342
      %p344 = scmp.ne.s32.totalorder %s336, %s338
      %p345 = scmp.eq.s32.totalorder %s34, 1
      %p346 = por %p344, %p345
      %p347 = scmp.ne.s32.totalorder %s338, %s339
      %p348 = scmp.eq.s32.totalorder %s34, 0
      %p349 = por %p347, %p348
      %p350 = scmp.ne.s32.totalorder %s338, %s339
      %p351 = scmp.eq.s32.totalorder %s35, 1
      %p352 = por %p350, %p351
      %p354 = scmp.ne.s32.totalorder %s339, %s353
      %p355 = scmp.eq.s32.totalorder %s35, 0
      %p356 = por %p354, %p355
      %s358 = sadd.s32 %s357, 1
      %p361 = scmp.eq.s32.totalorder %s29, 1
      %p362 = scmp.ne.s32.totalorder %s357, %s359
      %p363 = scmp.eq.s32.totalorder %s29, 0
      %p364 = por %p362, %p363
      %p365 = scmp.ne.s32.totalorder %s357, %s359
      %p366 = scmp.eq.s32.totalorder %s34, 1
      %p367 = por %p365, %p366
      %p368 = scmp.ne.s32.totalorder %s359, %s360
      %p369 = scmp.eq.s32.totalorder %s34, 0
      %p370 = por %p368, %p369
      %p371 = scmp.ne.s32.totalorder %s359, %s360
      %p372 = scmp.eq.s32.totalorder %s35, 1
      %p373 = por %p371, %p372
      %p375 = scmp.ne.s32.totalorder %s360, %s374
      %p376 = scmp.eq.s32.totalorder %s35, 0
      %p377 = por %p375, %p376
      %s378 = ssub.s32 %s29, %s36
      %p379 = scmp.eq.s32.totalorder %s378, 0
      %s381 = sadd.s32 %s380, 1
      %s382 = scalar_select %p379, %s380, %s381
      %p385 = pneg %p379
      %p386 = scmp.eq.s32.totalorder %s29, 1
      %p387 = por %p385, %p386
      %p388 = scmp.ne.s32.totalorder %s380, %s383
      %p389 = scmp.eq.s32.totalorder %s29, 0
      %p390 = por %p388, %p389
      %p391 = scmp.ne.s32.totalorder %s380, %s383
      %p392 = scmp.eq.s32.totalorder %s34, 1
      %p393 = por %p391, %p392
      %p394 = scmp.ne.s32.totalorder %s383, %s384
      %p395 = scmp.eq.s32.totalorder %s34, 0
      %p396 = por %p394, %p395
      %p397 = scmp.ne.s32.totalorder %s383, %s384
      %p398 = scmp.eq.s32.totalorder %s35, 1
      %p399 = por %p397, %p398
      %p401 = scmp.ne.s32.totalorder %s384, %s400
      %p402 = scmp.eq.s32.totalorder %s35, 0
      %p403 = por %p401, %p402
      %s404 = ssub.s32 %s29, %s36
      %p405 = scmp.eq.s32.totalorder %s404, 0
      %s407 = sadd.s32 %s406, 1
      %s408 = scalar_select %p405, %s406, %s407
      %p411 = pneg %p405
      %p412 = scmp.eq.s32.totalorder %s29, 1
      %p413 = por %p411, %p412
      %p414 = scmp.ne.s32.totalorder %s406, %s409
      %p415 = scmp.eq.s32.totalorder %s29, 0
      %p416 = por %p414, %p415
      %p417 = scmp.ne.s32.totalorder %s406, %s409
      %p418 = scmp.eq.s32.totalorder %s34, 1
      %p419 = por %p417, %p418
      %p420 = scmp.ne.s32.totalorder %s409, %s410
      %p421 = scmp.eq.s32.totalorder %s34, 0
      %p422 = por %p420, %p421
      %p423 = scmp.ne.s32.totalorder %s409, %s410
      %p424 = scmp.eq.s32.totalorder %s35, 1
      %p425 = por %p423, %p424
      %p427 = scmp.ne.s32.totalorder %s410, %s426
      %p428 = scmp.eq.s32.totalorder %s35, 0
      %p429 = por %p427, %p428
      %p430 = scmp.le.s32.totalorder 1, %s29
      %p431 = scmp.lt.s32.totalorder %s29, 3
      %p432 = pnand %p430, %p431
      %p433 = pneg %p432
      // Predicated region
      $region9: #{ac_forward.1} parent=5 // pred_check
        _
      $region10: #{ac_forward.1} parent=5 // pred_check_branch
        %435 = sbr.rel (%p432) target = $region12
      $region11: #{ac_forward.1} parent=5 // pred_region
        %s436 = ssub.s32 %s29, 1
        // Predicated region
        $region13: #{ac_forward.1} parent=11 // pred_check
          %p437 = pneg %p76
        $region14: #{ac_forward.1} parent=11 // pred_check_branch
          %439 = sbr.rel (%p437) target = $region16
        $region15: #{ac_forward.1} parent=11 // pred_region
          _
        $region16: #{ac_forward.1} parent=11 // pred_fallthru
          _
        // Predicated region
        $region17: #{ac_forward.1} parent=11 // pred_check
          %p440 = pneg %p97
        $region18: #{ac_forward.1} parent=11 // pred_check_branch
          %442 = sbr.rel (%p440) target = $region20
        $region19: #{ac_forward.1} parent=11 // pred_region
          _
        $region20: #{ac_forward.1} parent=11 // pred_fallthru
          _
        // Predicated region
        $region21: #{ac_forward.1} parent=11 // pred_check
          %p443 = pneg %p118
        $region22: #{ac_forward.1} parent=11 // pred_check_branch
          %445 = sbr.rel (%p443) target = $region24
        $region23: #{ac_forward.1} parent=11 // pred_region
          _
        $region24: #{ac_forward.1} parent=11 // pred_fallthru
          _
        // Predicated region
        $region25: #{ac_forward.1} parent=11 // pred_check
          %p446 = pneg %p139
        $region26: #{ac_forward.1} parent=11 // pred_check_branch
          %448 = sbr.rel (%p446) target = $region28
        $region27: #{ac_forward.1} parent=11 // pred_region
          _
        $region28: #{ac_forward.1} parent=11 // pred_fallthru
          _
        // Predicated region
        $region29: #{ac_forward.1} parent=11 // pred_check
          %p449 = pneg %p160
        $region30: #{ac_forward.1} parent=11 // pred_check_branch
          %451 = sbr.rel (%p449) target = $region32
        $region31: #{ac_forward.1} parent=11 // pred_region
          _
        $region32: #{ac_forward.1} parent=11 // pred_fallthru
          _
        // Predicated region
        $region33: #{ac_forward.1} parent=11 // pred_check
          %p452 = pneg %p181
        $region34: #{ac_forward.1} parent=11 // pred_check_branch
          %454 = sbr.rel (%p452) target = $region36
        $region35: #{ac_forward.1} parent=11 // pred_region
          _
        $region36: #{ac_forward.1} parent=11 // pred_fallthru
          _
        // Predicated region
        $region37: #{ac_forward.1} parent=11 // pred_check
          %p455 = pneg %p202
        $region38: #{ac_forward.1} parent=11 // pred_check_branch
          %457 = sbr.rel (%p455) target = $region40
        $region39: #{ac_forward.1} parent=11 // pred_region
          _
        $region40: #{ac_forward.1} parent=11 // pred_fallthru
          _
        // Predicated region
        $region41: #{ac_forward.1} parent=11 // pred_check
          %p458 = pneg %p223
        $region42: #{ac_forward.1} parent=11 // pred_check_branch
          %460 = sbr.rel (%p458) target = $region44
        $region43: #{ac_forward.1} parent=11 // pred_region
          _
        $region44: #{ac_forward.1} parent=11 // pred_fallthru
          _
        // Predicated region
        $region45: #{ac_forward.1} parent=11 // pred_check
          %p461 = pneg %p244
        $region46: #{ac_forward.1} parent=11 // pred_check_branch
          %463 = sbr.rel (%p461) target = $region48
        $region47: #{ac_forward.1} parent=11 // pred_region
          _
        $region48: #{ac_forward.1} parent=11 // pred_fallthru
          _
        // Predicated region
        $region49: #{ac_forward.1} parent=11 // pred_check
          %p464 = pneg %p265
        $region50: #{ac_forward.1} parent=11 // pred_check_branch
          %466 = sbr.rel (%p464) target = $region52
        $region51: #{ac_forward.1} parent=11 // pred_region
          _
        $region52: #{ac_forward.1} parent=11 // pred_fallthru
          _
        // Predicated region
        $region53: #{ac_forward.1} parent=11 // pred_check
          %p467 = pneg %p286
        $region54: #{ac_forward.1} parent=11 // pred_check_branch
          %469 = sbr.rel (%p467) target = $region56
        $region55: #{ac_forward.1} parent=11 // pred_region
          _
        $region56: #{ac_forward.1} parent=11 // pred_fallthru
          _
        // Predicated region
        $region57: #{ac_forward.1} parent=11 // pred_check
          %p470 = pneg %p307
        $region58: #{ac_forward.1} parent=11 // pred_check_branch
          %472 = sbr.rel (%p470) target = $region60
        $region59: #{ac_forward.1} parent=11 // pred_region
          _
        $region60: #{ac_forward.1} parent=11 // pred_fallthru
          _
        // Predicated region
        $region61: #{ac_forward.1} parent=11 // pred_check
          %p473 = pneg %p328
        $region62: #{ac_forward.1} parent=11 // pred_check_branch
          %475 = sbr.rel (%p473) target = $region64
        $region63: #{ac_forward.1} parent=11 // pred_region
          _
        $region64: #{ac_forward.1} parent=11 // pred_fallthru
          _
        // Predicated region
        $region65: #{ac_forward.1} parent=11 // pred_check
          %p476 = pneg %p349
        $region66: #{ac_forward.1} parent=11 // pred_check_branch
          %478 = sbr.rel (%p476) target = $region68
        $region67: #{ac_forward.1} parent=11 // pred_region
          _
        $region68: #{ac_forward.1} parent=11 // pred_fallthru
          _
        // Predicated region
        $region69: #{ac_forward.1} parent=11 // pred_check
          %p479 = pneg %p370
        $region70: #{ac_forward.1} parent=11 // pred_check_branch
          %481 = sbr.rel (%p479) target = $region72
        $region71: #{ac_forward.1} parent=11 // pred_region
          _
        $region72: #{ac_forward.1} parent=11 // pred_fallthru
          _
      $region12: #{ac_forward.1} parent=5 // pred_fallthru
        _
      %p482 = scmp.lt.s32.totalorder %s29, 2
      // Predicated region
      $region73: #{ac_forward.1} parent=5 // pred_check
        %p483 = pneg %p482
      $region74: #{ac_forward.1} parent=5 // pred_check_branch
        %485 = sbr.rel (%p483) target = $region76
      $region75: #{ac_forward.1} parent=5 // pred_region
        // Predicated region
        $region77: #{ac_forward.1} parent=75 // pred_check
          %p486 = pneg %p49
        $region78: #{ac_forward.1} parent=75 // pred_check_branch
          %488 = sbr.rel (%p486) target = $region80
        $region79: #{ac_forward.1} parent=75 // pred_region
          %p489 = scmp.lt.s32.totalorder %s29, 1
          %s490 = scalar_select %p489, %s29, 1
          %s491 = smul.addr %s490, 15
          %s492 = smul.addr %s491, 8
          %s493 = scalar_lea.vmem %s0, %s492
        $region80: #{ac_forward.1} parent=75 // pred_fallthru
          _
      $region76: #{ac_forward.1} parent=5 // pred_fallthru
        _
      %p494 = scmp.le.s32.totalorder 1, %s29
      %p495 = scmp.lt.s32.totalorder %s29, 3
      %p496 = pnand %p494, %p495
      %p497 = pneg %p496
      // Predicated region
      $region81: #{ac_forward.1} parent=5 // pred_check
        _
      $region82: #{ac_forward.1} parent=5 // pred_check_branch
        %499 = sbr.rel (%p496) target = $region84
      $region83: #{ac_forward.1} parent=5 // pred_region
        %s500 = ssub.s32 %s29, 1
        %p501 = scmp.lt.s32.totalorder %s34, 1
        %s502 = scalar_select %p501, %s34, 1
        %s503 = smul.addr %s502, 15
        %s504 = smul.addr %s503, 8
        %s505 = scalar_lea.vmem %s0, %s504
        %p506 = pneg %p55
        %p507 = pneg %p52
        %p508 = pneg %p76
        %p509 = pneg %p73
        %p510 = pneg %p97
        %p511 = pneg %p94
        %p512 = pneg %p118
        %p513 = pneg %p115
        %p514 = pneg %p139
        %p515 = pneg %p136
        %p516 = pneg %p160
        %p517 = pneg %p157
        %p518 = pneg %p181
        %p519 = pneg %p178
        %p520 = pneg %p202
        %p521 = pneg %p199
        %p522 = pneg %p223
        %p523 = pneg %p220
        %p524 = pneg %p244
        %p525 = pneg %p241
        %p526 = pneg %p265
        %p527 = pneg %p262
        %p528 = pneg %p286
        %p529 = pneg %p283
        %p530 = pneg %p307
        %p531 = pneg %p304
        %p532 = pneg %p328
        %p533 = pneg %p325
        %p534 = pneg %p349
        %p535 = pneg %p346
        %p536 = pneg %p370
        %p537 = pneg %p367
        %p538 = pneg %p396
        %p539 = pneg %p393
        %s540 = sand.u32 %s383, 1
        %s541 = scalar_lea.sflag [#allocation6], %s540
        %s542 = sand.u32 %s383, 1
        %s543 = scalar_lea.vmem [#allocation5], %s542
        %p544 = pneg %p422
        %p545 = pneg %p419
        %p546 = scmp.lt.s32.totalorder %s34, 1
        %s547 = scalar_select %p546, %s34, 1
        %s548 = scalar_lea.vmem %s17, %s547
        %p549 = scmp.lt.s32.totalorder %s34, 1
        %s550 = scalar_select %p549, %s34, 1
        %s551 = smul.addr %s550, 15
        %s552 = smul.addr %s551, 8
        %s553 = scalar_lea.vmem %s0, %s552
        %p554 = scmp.lt.s32.totalorder %s34, 1
        %s555 = scalar_select %p554, %s34, 1
        %s556 = scalar_lea.vmem %s17, %s555
        %v557 = vld [vmem:[%s1] sm:$0xff]
        %v558 = vld [vmem:[%s1 + $0x8] sm:$0xff]
        %v559 = vld [vmem:[%s1 + $0x10] sm:$0xff]
        %v560 = vld [vmem:[%s1 + $0x18] sm:$0xff]
        %v561 = vld [vmem:[%s1 + $0x20] sm:$0xff]
        %v562 = vld [vmem:[%s1 + $0x28] sm:$0xff]
        %v563 = vld [vmem:[%s1 + $0x30] sm:$0xff]
        %v564 = vld [vmem:[%s1 + $0x38] sm:$0xff]
        %v565 = vld [vmem:[%s1 + $0x40] sm:$0xff]
        %v566 = vld [vmem:[%s1 + $0x48] sm:$0xff]
        %v567 = vld [vmem:[%s553 + $0x9] sm:$0xff]
        %v568 = vld [vmem:[%s553 + $0x11] sm:$0xff]
        %v569 = vld [vmem:[%s553 + $0x19] sm:$0xff]
        %v570 = vld [vmem:[%s553 + $0x21] sm:$0xff]
        %v571 = vld [vmem:[%s553 + $0x29] sm:$0xff]
        %v572 = vld [vmem:[%s553 + $0x31] sm:$0xff]
        %v573 = vld [vmem:[%s553 + $0x39] sm:$0xff]
        %v574 = vld [vmem:[%s553 + $0x41] sm:$0xff]
        %v575 = vld [vmem:[%s553 + $0x49] sm:$0xff]
        %v576 = vld [vmem:[%s553 + $0x51] sm:$0xff]
        %v577 = vld [vmem:[%s2] sm:$0xff]
        %v578 = vld [vmem:[%s553 + $0xa] sm:$0xff]
        %v579 = vld [vmem:[%s553 + $0x12] sm:$0xff]
        %v580 = vld [vmem:[%s553 + $0x1a] sm:$0xff]
        %v581 = vld [vmem:[%s553 + $0x22] sm:$0xff]
        %v582 = vld [vmem:[%s553 + $0x2a] sm:$0xff]
        %v583 = vld [vmem:[%s553 + $0x32] sm:$0xff]
        %v584 = vld [vmem:[%s553 + $0x3a] sm:$0xff]
        %v585 = vld [vmem:[%s553 + $0x42] sm:$0xff]
        %v586 = vld [vmem:[%s553 + $0x4a] sm:$0xff]
        %v587 = vld [vmem:[%s553 + $0x52] sm:$0xff]
        %s588 = scalar_lea.vmem %s2, 8
        %v589 = vld [vmem:[%s588] sm:$0xff]
        %vm590 = vcmask 64512
        %v592 = vsel %vm590, %v578, 0
        %v595 = vsel %vm590, %v579, 0
        %v598 = vsel %vm590, %v580, 0
        %v601 = vsel %vm590, %v581, 0
        %v604 = vsel %vm590, %v582, 0
        %v607 = vsel %vm590, %v583, 0
        %v610 = vsel %vm590, %v584, 0
        %v613 = vsel %vm590, %v585, 0
        %v616 = vsel %vm590, %v586, 0
        %v619 = vsel %vm590, %v587, 0
        %621 = vmatpush.msra.mxu0 0.0
        %622 = vmatpush.msra.mxu0 0.0
        %623 = vmatpush.msra.mxu0 0.0
        %624 = vmatpush.msra.mxu0 0.0
        %625 = vmatpush.msra.mxu0 0.0
        %626 = vmatpush.msra.mxu0 0.0
        %627 = vmatpush.msra.mxu0 0.0
        %628 = vmatpush.msra.mxu0 0.0
        %629 = vmatpush.msra.mxu0 0.0
        %630 = vmatpush.msra.mxu0 0.0
        %631 = vmatpush.msra.mxu0 0.0
        %632 = vmatpush.msra.mxu0 0.0
        %633 = vmatpush.msra.mxu0 0.0
        %634 = vmatpush.msra.mxu0 0.0
        %635 = vmatpush.msra.mxu0 0.0
        %636 = vmatpush.msra.mxu0 %v589
        %637 = vmatmul.f32.gmra.mxu0 %v592
        %v638 = vpop.f32.mrf.mxu0
        %v639 = vadd.f32 0.0, %v638
        %640 = vmatmul.f32.gmra.mxu0 %v595
        %v641 = vpop.f32.mrf.mxu0
        %v642 = vadd.f32 0.0, %v641
        %643 = vmatmul.f32.gmra.mxu0 %v598
        %v644 = vpop.f32.mrf.mxu0
        %v645 = vadd.f32 0.0, %v644
        %646 = vmatmul.f32.gmra.mxu0 %v601
        %v647 = vpop.f32.mrf.mxu0
        %v648 = vadd.f32 0.0, %v647
        %649 = vmatmul.f32.gmra.mxu0 %v604
        %v650 = vpop.f32.mrf.mxu0
        %v651 = vadd.f32 0.0, %v650
        %652 = vmatmul.f32.gmra.mxu0 %v607
        %v653 = vpop.f32.mrf.mxu0
        %v654 = vadd.f32 0.0, %v653
        %655 = vmatmul.f32.gmra.mxu0 %v610
        %v656 = vpop.f32.mrf.mxu0
        %v657 = vadd.f32 0.0, %v656
        %658 = vmatmul.f32.gmra.mxu0 %v613
        %v659 = vpop.f32.mrf.mxu0
        %v660 = vadd.f32 0.0, %v659
        %661 = vmatmul.f32.gmra.mxu0 %v616
        %v662 = vpop.f32.mrf.mxu0
        %v663 = vadd.f32 0.0, %v662
        %664 = vmatmul.f32.gmra.mxu0 %v619
        %v665 = vpop.f32.mrf.mxu0
        %v666 = vadd.f32 0.0, %v665
        %667 = vdwg.mxu0
        %v669 = vsel %vm590, %v567, 0
        %v672 = vsel %vm590, %v568, 0
        %v675 = vsel %vm590, %v569, 0
        %v678 = vsel %vm590, %v570, 0
        %v681 = vsel %vm590, %v571, 0
        %v684 = vsel %vm590, %v572, 0
        %v687 = vsel %vm590, %v573, 0
        %v690 = vsel %vm590, %v574, 0
        %v693 = vsel %vm590, %v575, 0
        %v696 = vsel %vm590, %v576, 0
        %698 = vmatpush.msra.mxu0 0.0
        %699 = vmatpush.msra.mxu0 0.0
        %700 = vmatpush.msra.mxu0 0.0
        %701 = vmatpush.msra.mxu0 0.0
        %702 = vmatpush.msra.mxu0 0.0
        %703 = vmatpush.msra.mxu0 0.0
        %704 = vmatpush.msra.mxu0 0.0
        %705 = vmatpush.msra.mxu0 0.0
        %706 = vmatpush.msra.mxu0 0.0
        %707 = vmatpush.msra.mxu0 0.0
        %708 = vmatpush.msra.mxu0 0.0
        %709 = vmatpush.msra.mxu0 0.0
        %710 = vmatpush.msra.mxu0 0.0
        %711 = vmatpush.msra.mxu0 0.0
        %712 = vmatpush.msra.mxu0 0.0
        %713 = vmatpush.msra.mxu0 %v577
        %714 = vmatmul.f32.gmra.mxu0 %v669
        %v715 = vpop.f32.mrf.mxu0
        %v716 = vadd.f32 %v639, %v715
        %717 = vmatmul.f32.gmra.mxu0 %v672
        %v718 = vpop.f32.mrf.mxu0
        %v719 = vadd.f32 %v642, %v718
        %720 = vmatmul.f32.gmra.mxu0 %v675
        %v721 = vpop.f32.mrf.mxu0
        %v722 = vadd.f32 %v645, %v721
        %723 = vmatmul.f32.gmra.mxu0 %v678
        %v724 = vpop.f32.mrf.mxu0
        %v725 = vadd.f32 %v648, %v724
        %726 = vmatmul.f32.gmra.mxu0 %v681
        %v727 = vpop.f32.mrf.mxu0
        %v728 = vadd.f32 %v651, %v727
        %729 = vmatmul.f32.gmra.mxu0 %v684
        %v730 = vpop.f32.mrf.mxu0
        %v731 = vadd.f32 %v654, %v730
        %732 = vmatmul.f32.gmra.mxu0 %v687
        %v733 = vpop.f32.mrf.mxu0
        %v734 = vadd.f32 %v657, %v733
        %735 = vmatmul.f32.gmra.mxu0 %v690
        %v736 = vpop.f32.mrf.mxu0
        %v737 = vadd.f32 %v660, %v736
        %738 = vmatmul.f32.gmra.mxu0 %v693
        %v739 = vpop.f32.mrf.mxu0
        %v740 = vadd.f32 %v663, %v739
        %741 = vmatmul.f32.gmra.mxu0 %v696
        %v742 = vpop.f32.mrf.mxu0
        %v743 = vadd.f32 %v666, %v742
        %744 = vdwg.mxu0
        %v745 = vld [vmem:[%s553 + $0xb] sm:$0xff]
        %v746 = vld [vmem:[%s553 + $0x13] sm:$0xff]
        %v747 = vld [vmem:[%s553 + $0x1b] sm:$0xff]
        %v748 = vld [vmem:[%s553 + $0x23] sm:$0xff]
        %v749 = vld [vmem:[%s553 + $0x2b] sm:$0xff]
        %v750 = vld [vmem:[%s553 + $0x33] sm:$0xff]
        %v751 = vld [vmem:[%s553 + $0x3b] sm:$0xff]
        %v752 = vld [vmem:[%s553 + $0x43] sm:$0xff]
        %v753 = vld [vmem:[%s553 + $0x4b] sm:$0xff]
        %v754 = vld [vmem:[%s553 + $0x53] sm:$0xff]
        %s755 = scalar_lea.vmem %s2, 16
        %v756 = vld [vmem:[%s755] sm:$0xff]
        %v758 = vsel %vm590, %v745, 0
        %v761 = vsel %vm590, %v746, 0
        %v764 = vsel %vm590, %v747, 0
        %v767 = vsel %vm590, %v748, 0
        %v770 = vsel %vm590, %v749, 0
        %v773 = vsel %vm590, %v750, 0
        %v776 = vsel %vm590, %v751, 0
        %v779 = vsel %vm590, %v752, 0
        %v782 = vsel %vm590, %v753, 0
        %v785 = vsel %vm590, %v754, 0
        %787 = vmatpush.msra.mxu0 0.0
        %788 = vmatpush.msra.mxu0 0.0
        %789 = vmatpush.msra.mxu0 0.0
        %790 = vmatpush.msra.mxu0 0.0
        %791 = vmatpush.msra.mxu0 0.0
        %792 = vmatpush.msra.mxu0 0.0
        %793 = vmatpush.msra.mxu0 0.0
        %794 = vmatpush.msra.mxu0 0.0
        %795 = vmatpush.msra.mxu0 0.0
        %796 = vmatpush.msra.mxu0 0.0
        %797 = vmatpush.msra.mxu0 0.0
        %798 = vmatpush.msra.mxu0 0.0
        %799 = vmatpush.msra.mxu0 0.0
        %800 = vmatpush.msra.mxu0 0.0
        %801 = vmatpush.msra.mxu0 0.0
        %802 = vmatpush.msra.mxu0 %v756
        %803 = vmatmul.f32.gmra.mxu0 %v758
        %v804 = vpop.f32.mrf.mxu0
        %v805 = vadd.f32 0.0, %v804
        %806 = vmatmul.f32.gmra.mxu0 %v761
        %v807 = vpop.f32.mrf.mxu0
        %v808 = vadd.f32 0.0, %v807
        %809 = vmatmul.f32.gmra.mxu0 %v764
        %v810 = vpop.f32.mrf.mxu0
        %v811 = vadd.f32 0.0, %v810
        %812 = vmatmul.f32.gmra.mxu0 %v767
        %v813 = vpop.f32.mrf.mxu0
        %v814 = vadd.f32 0.0, %v813
        %815 = vmatmul.f32.gmra.mxu0 %v770
        %v816 = vpop.f32.mrf.mxu0
        %v817 = vadd.f32 0.0, %v816
        %818 = vmatmul.f32.gmra.mxu0 %v773
        %v819 = vpop.f32.mrf.mxu0
        %v820 = vadd.f32 0.0, %v819
        %821 = vmatmul.f32.gmra.mxu0 %v776
        %v822 = vpop.f32.mrf.mxu0
        %v823 = vadd.f32 0.0, %v822
        %824 = vmatmul.f32.gmra.mxu0 %v779
        %v825 = vpop.f32.mrf.mxu0
        %v826 = vadd.f32 0.0, %v825
        %827 = vmatmul.f32.gmra.mxu0 %v782
        %v828 = vpop.f32.mrf.mxu0
        %v829 = vadd.f32 0.0, %v828
        %830 = vmatmul.f32.gmra.mxu0 %v785
        %v831 = vpop.f32.mrf.mxu0
        %v832 = vadd.f32 0.0, %v831
        %833 = vdwg.mxu0
        %v834 = vadd.f32 %v716, %v805
        %v835 = vadd.f32 %v719, %v808
        %v836 = vadd.f32 %v722, %v811
        %v837 = vadd.f32 %v725, %v814
        %v838 = vadd.f32 %v728, %v817
        %v839 = vadd.f32 %v731, %v820
        %v840 = vadd.f32 %v734, %v823
        %v841 = vadd.f32 %v737, %v826
        %v842 = vadd.f32 %v740, %v829
        %v843 = vadd.f32 %v743, %v832
        %v844 = vld [vmem:[%s553 + $0x13] sm:$0xff]
        %v845 = vld [vmem:[%s553 + $0x1b] sm:$0xff]
        %v846 = vld [vmem:[%s553 + $0x23] sm:$0xff]
        %v847 = vld [vmem:[%s553 + $0x2b] sm:$0xff]
        %v848 = vld [vmem:[%s553 + $0x33] sm:$0xff]
        %v849 = vld [vmem:[%s553 + $0x3b] sm:$0xff]
        %v850 = vld [vmem:[%s553 + $0x43] sm:$0xff]
        %v851 = vld [vmem:[%s553 + $0x4b] sm:$0xff]
        %v852 = vld [vmem:[%s553 + $0x53] sm:$0xff]
        %v853 = vld [vmem:[%s553 + $0x5b] sm:$0xff]
        %s854 = scalar_lea.vmem %s2, 24
        %v855 = vld [vmem:[%s854] sm:$0xff]
        %v857 = vsel %vm590, %v844, 0
        %v860 = vsel %vm590, %v845, 0
        %v863 = vsel %vm590, %v846, 0
        %v866 = vsel %vm590, %v847, 0
        %v869 = vsel %vm590, %v848, 0
        %v872 = vsel %vm590, %v849, 0
        %v875 = vsel %vm590, %v850, 0
        %v878 = vsel %vm590, %v851, 0
        %v881 = vsel %vm590, %v852, 0
        %v884 = vsel %vm590, %v853, 0
        %886 = vmatpush.msra.mxu0 0.0
        %887 = vmatpush.msra.mxu0 0.0
        %888 = vmatpush.msra.mxu0 0.0
        %889 = vmatpush.msra.mxu0 0.0
        %890 = vmatpush.msra.mxu0 0.0
        %891 = vmatpush.msra.mxu0 0.0
        %892 = vmatpush.msra.mxu0 0.0
        %893 = vmatpush.msra.mxu0 0.0
        %894 = vmatpush.msra.mxu0 0.0
        %895 = vmatpush.msra.mxu0 0.0
        %896 = vmatpush.msra.mxu0 0.0
        %897 = vmatpush.msra.mxu0 0.0
        %898 = vmatpush.msra.mxu0 0.0
        %899 = vmatpush.msra.mxu0 0.0
        %900 = vmatpush.msra.mxu0 0.0
        %901 = vmatpush.msra.mxu0 %v855
        %902 = vmatmul.f32.gmra.mxu0 %v857
        %v903 = vpop.f32.mrf.mxu0
        %v904 = vadd.f32 0.0, %v903
        %905 = vmatmul.f32.gmra.mxu0 %v860
        %v906 = vpop.f32.mrf.mxu0
        %v907 = vadd.f32 0.0, %v906
        %908 = vmatmul.f32.gmra.mxu0 %v863
        %v909 = vpop.f32.mrf.mxu0
        %v910 = vadd.f32 0.0, %v909
        %911 = vmatmul.f32.gmra.mxu0 %v866
        %v912 = vpop.f32.mrf.mxu0
        %v913 = vadd.f32 0.0, %v912
        %914 = vmatmul.f32.gmra.mxu0 %v869
        %v915 = vpop.f32.mrf.mxu0
        %v916 = vadd.f32 0.0, %v915
        %917 = vmatmul.f32.gmra.mxu0 %v872
        %v918 = vpop.f32.mrf.mxu0
        %v919 = vadd.f32 0.0, %v918
        %920 = vmatmul.f32.gmra.mxu0 %v875
        %v921 = vpop.f32.mrf.mxu0
        %v922 = vadd.f32 0.0, %v921
        %923 = vmatmul.f32.gmra.mxu0 %v878
        %v924 = vpop.f32.mrf.mxu0
        %v925 = vadd.f32 0.0, %v924
        %926 = vmatmul.f32.gmra.mxu0 %v881
        %v927 = vpop.f32.mrf.mxu0
        %v928 = vadd.f32 0.0, %v927
        %929 = vmatmul.f32.gmra.mxu0 %v884
        %v930 = vpop.f32.mrf.mxu0
        %v931 = vadd.f32 0.0, %v930
        %932 = vdwg.mxu0
        %v933 = vadd.f32 %v834, %v904
        %v934 = vadd.f32 %v835, %v907
        %v935 = vadd.f32 %v836, %v910
        %v936 = vadd.f32 %v837, %v913
        %v937 = vadd.f32 %v838, %v916
        %v938 = vadd.f32 %v839, %v919
        %v939 = vadd.f32 %v840, %v922
        %v940 = vadd.f32 %v841, %v925
        %v941 = vadd.f32 %v842, %v928
        %v942 = vadd.f32 %v843, %v931
        %v943 = vld [vmem:[%s553 + $0x14] sm:$0xff]
        %v944 = vld [vmem:[%s553 + $0x1c] sm:$0xff]
        %v945 = vld [vmem:[%s553 + $0x24] sm:$0xff]
        %v946 = vld [vmem:[%s553 + $0x2c] sm:$0xff]
        %v947 = vld [vmem:[%s553 + $0x34] sm:$0xff]
        %v948 = vld [vmem:[%s553 + $0x3c] sm:$0xff]
        %v949 = vld [vmem:[%s553 + $0x44] sm:$0xff]
        %v950 = vld [vmem:[%s553 + $0x4c] sm:$0xff]
        %v951 = vld [vmem:[%s553 + $0x54] sm:$0xff]
        %v952 = vld [vmem:[%s553 + $0x5c] sm:$0xff]
        %s953 = scalar_lea.vmem %s2, 32
        %v954 = vld [vmem:[%s953] sm:$0xff]
        %v956 = vsel %vm590, %v943, 0
        %v959 = vsel %vm590, %v944, 0
        %v962 = vsel %vm590, %v945, 0
        %v965 = vsel %vm590, %v946, 0
        %v968 = vsel %vm590, %v947, 0
        %v971 = vsel %vm590, %v948, 0
        %v974 = vsel %vm590, %v949, 0
        %v977 = vsel %vm590, %v950, 0
        %v980 = vsel %vm590, %v951, 0
        %v983 = vsel %vm590, %v952, 0
        %985 = vmatpush.msra.mxu0 0.0
        %986 = vmatpush.msra.mxu0 0.0
        %987 = vmatpush.msra.mxu0 0.0
        %988 = vmatpush.msra.mxu0 0.0
        %989 = vmatpush.msra.mxu0 0.0
        %990 = vmatpush.msra.mxu0 0.0
        %991 = vmatpush.msra.mxu0 0.0
        %992 = vmatpush.msra.mxu0 0.0
        %993 = vmatpush.msra.mxu0 0.0
        %994 = vmatpush.msra.mxu0 0.0
        %995 = vmatpush.msra.mxu0 0.0
        %996 = vmatpush.msra.mxu0 0.0
        %997 = vmatpush.msra.mxu0 0.0
        %998 = vmatpush.msra.mxu0 0.0
        %999 = vmatpush.msra.mxu0 0.0
        %1000 = vmatpush.msra.mxu0 %v954
        %1001 = vmatmul.f32.gmra.mxu0 %v956
        %v1002 = vpop.f32.mrf.mxu0
        %v1003 = vadd.f32 0.0, %v1002
        %1004 = vmatmul.f32.gmra.mxu0 %v959
        %v1005 = vpop.f32.mrf.mxu0
        %v1006 = vadd.f32 0.0, %v1005
        %1007 = vmatmul.f32.gmra.mxu0 %v962
        %v1008 = vpop.f32.mrf.mxu0
        %v1009 = vadd.f32 0.0, %v1008
        %1010 = vmatmul.f32.gmra.mxu0 %v965
        %v1011 = vpop.f32.mrf.mxu0
        %v1012 = vadd.f32 0.0, %v1011
        %1013 = vmatmul.f32.gmra.mxu0 %v968
        %v1014 = vpop.f32.mrf.mxu0
        %v1015 = vadd.f32 0.0, %v1014
        %1016 = vmatmul.f32.gmra.mxu0 %v971
        %v1017 = vpop.f32.mrf.mxu0
        %v1018 = vadd.f32 0.0, %v1017
        %1019 = vmatmul.f32.gmra.mxu0 %v974
        %v1020 = vpop.f32.mrf.mxu0
        %v1021 = vadd.f32 0.0, %v1020
        %1022 = vmatmul.f32.gmra.mxu0 %v977
        %v1023 = vpop.f32.mrf.mxu0
        %v1024 = vadd.f32 0.0, %v1023
        %1025 = vmatmul.f32.gmra.mxu0 %v980
        %v1026 = vpop.f32.mrf.mxu0
        %v1027 = vadd.f32 0.0, %v1026
        %1028 = vmatmul.f32.gmra.mxu0 %v983
        %v1029 = vpop.f32.mrf.mxu0
        %v1030 = vadd.f32 0.0, %v1029
        %1031 = vdwg.mxu0
        %v1032 = vadd.f32 %v933, %v1003
        %v1033 = vadd.f32 %v934, %v1006
        %v1034 = vadd.f32 %v935, %v1009
        %v1035 = vadd.f32 %v936, %v1012
        %v1036 = vadd.f32 %v937, %v1015
        %v1037 = vadd.f32 %v938, %v1018
        %v1038 = vadd.f32 %v939, %v1021
        %v1039 = vadd.f32 %v940, %v1024
        %v1040 = vadd.f32 %v941, %v1027
        %v1041 = vadd.f32 %v942, %v1030
        %v1042 = vld [vmem:[%s553 + $0x15] sm:$0xff]
        %v1043 = vld [vmem:[%s553 + $0x1d] sm:$0xff]
        %v1044 = vld [vmem:[%s553 + $0x25] sm:$0xff]
        %v1045 = vld [vmem:[%s553 + $0x2d] sm:$0xff]
        %v1046 = vld [vmem:[%s553 + $0x35] sm:$0xff]
        %v1047 = vld [vmem:[%s553 + $0x3d] sm:$0xff]
        %v1048 = vld [vmem:[%s553 + $0x45] sm:$0xff]
        %v1049 = vld [vmem:[%s553 + $0x4d] sm:$0xff]
        %v1050 = vld [vmem:[%s553 + $0x55] sm:$0xff]
        %v1051 = vld [vmem:[%s553 + $0x5d] sm:$0xff]
        %s1052 = scalar_lea.vmem %s2, 40
        %v1053 = vld [vmem:[%s1052] sm:$0xff]
        %v1055 = vsel %vm590, %v1042, 0
        %v1058 = vsel %vm590, %v1043, 0
        %v1061 = vsel %vm590, %v1044, 0
        %v1064 = vsel %vm590, %v1045, 0
        %v1067 = vsel %vm590, %v1046, 0
        %v1070 = vsel %vm590, %v1047, 0
        %v1073 = vsel %vm590, %v1048, 0
        %v1076 = vsel %vm590, %v1049, 0
        %v1079 = vsel %vm590, %v1050, 0
        %v1082 = vsel %vm590, %v1051, 0
        %1084 = vmatpush.msra.mxu0 0.0
        %1085 = vmatpush.msra.mxu0 0.0
        %1086 = vmatpush.msra.mxu0 0.0
        %1087 = vmatpush.msra.mxu0 0.0
        %1088 = vmatpush.msra.mxu0 0.0
        %1089 = vmatpush.msra.mxu0 0.0
        %1090 = vmatpush.msra.mxu0 0.0
        %1091 = vmatpush.msra.mxu0 0.0
        %1092 = vmatpush.msra.mxu0 0.0
        %1093 = vmatpush.msra.mxu0 0.0
        %1094 = vmatpush.msra.mxu0 0.0
        %1095 = vmatpush.msra.mxu0 0.0
        %1096 = vmatpush.msra.mxu0 0.0
        %1097 = vmatpush.msra.mxu0 0.0
        %1098 = vmatpush.msra.mxu0 0.0
        %1099 = vmatpush.msra.mxu0 %v1053
        %1100 = vmatmul.f32.gmra.mxu0 %v1055
        %v1101 = vpop.f32.mrf.mxu0
        %v1102 = vadd.f32 0.0, %v1101
        %1103 = vmatmul.f32.gmra.mxu0 %v1058
        %v1104 = vpop.f32.mrf.mxu0
        %v1105 = vadd.f32 0.0, %v1104
        %1106 = vmatmul.f32.gmra.mxu0 %v1061
        %v1107 = vpop.f32.mrf.mxu0
        %v1108 = vadd.f32 0.0, %v1107
        %1109 = vmatmul.f32.gmra.mxu0 %v1064
        %v1110 = vpop.f32.mrf.mxu0
        %v1111 = vadd.f32 0.0, %v1110
        %1112 = vmatmul.f32.gmra.mxu0 %v1067
        %v1113 = vpop.f32.mrf.mxu0
        %v1114 = vadd.f32 0.0, %v1113
        %1115 = vmatmul.f32.gmra.mxu0 %v1070
        %v1116 = vpop.f32.mrf.mxu0
        %v1117 = vadd.f32 0.0, %v1116
        %1118 = vmatmul.f32.gmra.mxu0 %v1073
        %v1119 = vpop.f32.mrf.mxu0
        %v1120 = vadd.f32 0.0, %v1119
        %1121 = vmatmul.f32.gmra.mxu0 %v1076
        %v1122 = vpop.f32.mrf.mxu0
        %v1123 = vadd.f32 0.0, %v1122
        %1124 = vmatmul.f32.gmra.mxu0 %v1079
        %v1125 = vpop.f32.mrf.mxu0
        %v1126 = vadd.f32 0.0, %v1125
        %1127 = vmatmul.f32.gmra.mxu0 %v1082
        %v1128 = vpop.f32.mrf.mxu0
        %v1129 = vadd.f32 0.0, %v1128
        %1130 = vdwg.mxu0
        %v1131 = vadd.f32 %v1032, %v1102
        %v1132 = vadd.f32 %v1033, %v1105
        %v1133 = vadd.f32 %v1034, %v1108
        %v1134 = vadd.f32 %v1035, %v1111
        %v1135 = vadd.f32 %v1036, %v1114
        %v1136 = vadd.f32 %v1037, %v1117
        %v1137 = vadd.f32 %v1038, %v1120
        %v1138 = vadd.f32 %v1039, %v1123
        %v1139 = vadd.f32 %v1040, %v1126
        %v1140 = vadd.f32 %v1041, %v1129
        %v1141 = vld [vmem:[%s553 + $0x1d] sm:$0xff]
        %v1142 = vld [vmem:[%s553 + $0x25] sm:$0xff]
        %v1143 = vld [vmem:[%s553 + $0x2d] sm:$0xff]
        %v1144 = vld [vmem:[%s553 + $0x35] sm:$0xff]
        %v1145 = vld [vmem:[%s553 + $0x3d] sm:$0xff]
        %v1146 = vld [vmem:[%s553 + $0x45] sm:$0xff]
        %v1147 = vld [vmem:[%s553 + $0x4d] sm:$0xff]
        %v1148 = vld [vmem:[%s553 + $0x55] sm:$0xff]
        %v1149 = vld [vmem:[%s553 + $0x5d] sm:$0xff]
        %v1150 = vld [vmem:[%s553 + $0x65] sm:$0xff]
        %s1151 = scalar_lea.vmem %s2, 48
        %v1152 = vld [vmem:[%s1151] sm:$0xff]
        %v1154 = vsel %vm590, %v1141, 0
        %v1157 = vsel %vm590, %v1142, 0
        %v1160 = vsel %vm590, %v1143, 0
        %v1163 = vsel %vm590, %v1144, 0
        %v1166 = vsel %vm590, %v1145, 0
        %v1169 = vsel %vm590, %v1146, 0
        %v1172 = vsel %vm590, %v1147, 0
        %v1175 = vsel %vm590, %v1148, 0
        %v1178 = vsel %vm590, %v1149, 0
        %v1181 = vsel %vm590, %v1150, 0
        %1183 = vmatpush.msra.mxu0 0.0
        %1184 = vmatpush.msra.mxu0 0.0
        %1185 = vmatpush.msra.mxu0 0.0
        %1186 = vmatpush.msra.mxu0 0.0
        %1187 = vmatpush.msra.mxu0 0.0
        %1188 = vmatpush.msra.mxu0 0.0
        %1189 = vmatpush.msra.mxu0 0.0
        %1190 = vmatpush.msra.mxu0 0.0
        %1191 = vmatpush.msra.mxu0 0.0
        %1192 = vmatpush.msra.mxu0 0.0
        %1193 = vmatpush.msra.mxu0 0.0
        %1194 = vmatpush.msra.mxu0 0.0
        %1195 = vmatpush.msra.mxu0 0.0
        %1196 = vmatpush.msra.mxu0 0.0
        %1197 = vmatpush.msra.mxu0 0.0
        %1198 = vmatpush.msra.mxu0 %v1152
        %1199 = vmatmul.f32.gmra.mxu0 %v1154
        %v1200 = vpop.f32.mrf.mxu0
        %v1201 = vadd.f32 0.0, %v1200
        %1202 = vmatmul.f32.gmra.mxu0 %v1157
        %v1203 = vpop.f32.mrf.mxu0
        %v1204 = vadd.f32 0.0, %v1203
        %1205 = vmatmul.f32.gmra.mxu0 %v1160
        %v1206 = vpop.f32.mrf.mxu0
        %v1207 = vadd.f32 0.0, %v1206
        %1208 = vmatmul.f32.gmra.mxu0 %v1163
        %v1209 = vpop.f32.mrf.mxu0
        %v1210 = vadd.f32 0.0, %v1209
        %1211 = vmatmul.f32.gmra.mxu0 %v1166
        %v1212 = vpop.f32.mrf.mxu0
        %v1213 = vadd.f32 0.0, %v1212
        %1214 = vmatmul.f32.gmra.mxu0 %v1169
        %v1215 = vpop.f32.mrf.mxu0
        %v1216 = vadd.f32 0.0, %v1215
        %1217 = vmatmul.f32.gmra.mxu0 %v1172
        %v1218 = vpop.f32.mrf.mxu0
        %v1219 = vadd.f32 0.0, %v1218
        %1220 = vmatmul.f32.gmra.mxu0 %v1175
        %v1221 = vpop.f32.mrf.mxu0
        %v1222 = vadd.f32 0.0, %v1221
        %1223 = vmatmul.f32.gmra.mxu0 %v1178
        %v1224 = vpop.f32.mrf.mxu0
        %v1225 = vadd.f32 0.0, %v1224
        %1226 = vmatmul.f32.gmra.mxu0 %v1181
        %v1227 = vpop.f32.mrf.mxu0
        %v1228 = vadd.f32 0.0, %v1227
        %1229 = vdwg.mxu0
        %v1230 = vadd.f32 %v1131, %v1201
        %v1231 = vadd.f32 %v1132, %v1204
        %v1232 = vadd.f32 %v1133, %v1207
        %v1233 = vadd.f32 %v1134, %v1210
        %v1234 = vadd.f32 %v1135, %v1213
        %v1235 = vadd.f32 %v1136, %v1216
        %v1236 = vadd.f32 %v1137, %v1219
        %v1237 = vadd.f32 %v1138, %v1222
        %v1238 = vadd.f32 %v1139, %v1225
        %v1239 = vadd.f32 %v1140, %v1228
        %v1240 = vld [vmem:[%s553 + $0x1e] sm:$0xff]
        %v1241 = vld [vmem:[%s553 + $0x26] sm:$0xff]
        %v1242 = vld [vmem:[%s553 + $0x2e] sm:$0xff]
        %v1243 = vld [vmem:[%s553 + $0x36] sm:$0xff]
        %v1244 = vld [vmem:[%s553 + $0x3e] sm:$0xff]
        %v1245 = vld [vmem:[%s553 + $0x46] sm:$0xff]
        %v1246 = vld [vmem:[%s553 + $0x4e] sm:$0xff]
        %v1247 = vld [vmem:[%s553 + $0x56] sm:$0xff]
        %v1248 = vld [vmem:[%s553 + $0x5e] sm:$0xff]
        %v1249 = vld [vmem:[%s553 + $0x66] sm:$0xff]
        %s1250 = scalar_lea.vmem %s2, 56
        %v1251 = vld [vmem:[%s1250] sm:$0xff]
        %v1253 = vsel %vm590, %v1240, 0
        %v1256 = vsel %vm590, %v1241, 0
        %v1259 = vsel %vm590, %v1242, 0
        %v1262 = vsel %vm590, %v1243, 0
        %v1265 = vsel %vm590, %v1244, 0
        %v1268 = vsel %vm590, %v1245, 0
        %v1271 = vsel %vm590, %v1246, 0
        %v1274 = vsel %vm590, %v1247, 0
        %v1277 = vsel %vm590, %v1248, 0
        %v1280 = vsel %vm590, %v1249, 0
        %1282 = vmatpush.msra.mxu0 0.0
        %1283 = vmatpush.msra.mxu0 0.0
        %1284 = vmatpush.msra.mxu0 0.0
        %1285 = vmatpush.msra.mxu0 0.0
        %1286 = vmatpush.msra.mxu0 0.0
        %1287 = vmatpush.msra.mxu0 0.0
        %1288 = vmatpush.msra.mxu0 0.0
        %1289 = vmatpush.msra.mxu0 0.0
        %1290 = vmatpush.msra.mxu0 0.0
        %1291 = vmatpush.msra.mxu0 0.0
        %1292 = vmatpush.msra.mxu0 0.0
        %1293 = vmatpush.msra.mxu0 0.0
        %1294 = vmatpush.msra.mxu0 0.0
        %1295 = vmatpush.msra.mxu0 0.0
        %1296 = vmatpush.msra.mxu0 0.0
        %1297 = vmatpush.msra.mxu0 %v1251
        %1298 = vmatmul.f32.gmra.mxu0 %v1253
        %v1299 = vpop.f32.mrf.mxu0
        %v1300 = vadd.f32 0.0, %v1299
        %1301 = vmatmul.f32.gmra.mxu0 %v1256
        %v1302 = vpop.f32.mrf.mxu0
        %v1303 = vadd.f32 0.0, %v1302
        %1304 = vmatmul.f32.gmra.mxu0 %v1259
        %v1305 = vpop.f32.mrf.mxu0
        %v1306 = vadd.f32 0.0, %v1305
        %1307 = vmatmul.f32.gmra.mxu0 %v1262
        %v1308 = vpop.f32.mrf.mxu0
        %v1309 = vadd.f32 0.0, %v1308
        %1310 = vmatmul.f32.gmra.mxu0 %v1265
        %v1311 = vpop.f32.mrf.mxu0
        %v1312 = vadd.f32 0.0, %v1311
        %1313 = vmatmul.f32.gmra.mxu0 %v1268
        %v1314 = vpop.f32.mrf.mxu0
        %v1315 = vadd.f32 0.0, %v1314
        %1316 = vmatmul.f32.gmra.mxu0 %v1271
        %v1317 = vpop.f32.mrf.mxu0
        %v1318 = vadd.f32 0.0, %v1317
        %1319 = vmatmul.f32.gmra.mxu0 %v1274
        %v1320 = vpop.f32.mrf.mxu0
        %v1321 = vadd.f32 0.0, %v1320
        %1322 = vmatmul.f32.gmra.mxu0 %v1277
        %v1323 = vpop.f32.mrf.mxu0
        %v1324 = vadd.f32 0.0, %v1323
        %1325 = vmatmul.f32.gmra.mxu0 %v1280
        %v1326 = vpop.f32.mrf.mxu0
        %v1327 = vadd.f32 0.0, %v1326
        %1328 = vdwg.mxu0
        %v1329 = vadd.f32 %v1230, %v1300
        %v1330 = vadd.f32 %v1231, %v1303
        %v1331 = vadd.f32 %v1232, %v1306
        %v1332 = vadd.f32 %v1233, %v1309
        %v1333 = vadd.f32 %v1234, %v1312
        %v1334 = vadd.f32 %v1235, %v1315
        %v1335 = vadd.f32 %v1236, %v1318
        %v1336 = vadd.f32 %v1237, %v1321
        %v1337 = vadd.f32 %v1238, %v1324
        %v1338 = vadd.f32 %v1239, %v1327
        %v1339 = vld [vmem:[%s553 + $0x1f] sm:$0xff]
        %v1340 = vld [vmem:[%s553 + $0x27] sm:$0xff]
        %v1341 = vld [vmem:[%s553 + $0x2f] sm:$0xff]
        %v1342 = vld [vmem:[%s553 + $0x37] sm:$0xff]
        %v1343 = vld [vmem:[%s553 + $0x3f] sm:$0xff]
        %v1344 = vld [vmem:[%s553 + $0x47] sm:$0xff]
        %v1345 = vld [vmem:[%s553 + $0x4f] sm:$0xff]
        %v1346 = vld [vmem:[%s553 + $0x57] sm:$0xff]
        %v1347 = vld [vmem:[%s553 + $0x5f] sm:$0xff]
        %v1348 = vld [vmem:[%s553 + $0x67] sm:$0xff]
        %s1349 = scalar_lea.vmem %s2, 64
        %v1350 = vld [vmem:[%s1349] sm:$0xff]
        %v1352 = vsel %vm590, %v1339, 0
        %v1355 = vsel %vm590, %v1340, 0
        %v1358 = vsel %vm590, %v1341, 0
        %v1361 = vsel %vm590, %v1342, 0
        %v1364 = vsel %vm590, %v1343, 0
        %v1367 = vsel %vm590, %v1344, 0
        %v1370 = vsel %vm590, %v1345, 0
        %v1373 = vsel %vm590, %v1346, 0
        %v1376 = vsel %vm590, %v1347, 0
        %v1379 = vsel %vm590, %v1348, 0
        %1381 = vmatpush.msra.mxu0 0.0
        %1382 = vmatpush.msra.mxu0 0.0
        %1383 = vmatpush.msra.mxu0 0.0
        %1384 = vmatpush.msra.mxu0 0.0
        %1385 = vmatpush.msra.mxu0 0.0
        %1386 = vmatpush.msra.mxu0 0.0
        %1387 = vmatpush.msra.mxu0 0.0
        %1388 = vmatpush.msra.mxu0 0.0
        %1389 = vmatpush.msra.mxu0 0.0
        %1390 = vmatpush.msra.mxu0 0.0
        %1391 = vmatpush.msra.mxu0 0.0
        %1392 = vmatpush.msra.mxu0 0.0
        %1393 = vmatpush.msra.mxu0 0.0
        %1394 = vmatpush.msra.mxu0 0.0
        %1395 = vmatpush.msra.mxu0 0.0
        %1396 = vmatpush.msra.mxu0 %v1350
        %1397 = vmatmul.f32.gmra.mxu0 %v1352
        %v1398 = vpop.f32.mrf.mxu0
        %v1399 = vadd.f32 0.0, %v1398
        %1400 = vmatmul.f32.gmra.mxu0 %v1355
        %v1401 = vpop.f32.mrf.mxu0
        %v1402 = vadd.f32 0.0, %v1401
        %1403 = vmatmul.f32.gmra.mxu0 %v1358
        %v1404 = vpop.f32.mrf.mxu0
        %v1405 = vadd.f32 0.0, %v1404
        %1406 = vmatmul.f32.gmra.mxu0 %v1361
        %v1407 = vpop.f32.mrf.mxu0
        %v1408 = vadd.f32 0.0, %v1407
        %1409 = vmatmul.f32.gmra.mxu0 %v1364
        %v1410 = vpop.f32.mrf.mxu0
        %v1411 = vadd.f32 0.0, %v1410
        %1412 = vmatmul.f32.gmra.mxu0 %v1367
        %v1413 = vpop.f32.mrf.mxu0
        %v1414 = vadd.f32 0.0, %v1413
        %1415 = vmatmul.f32.gmra.mxu0 %v1370
        %v1416 = vpop.f32.mrf.mxu0
        %v1417 = vadd.f32 0.0, %v1416
        %1418 = vmatmul.f32.gmra.mxu0 %v1373
        %v1419 = vpop.f32.mrf.mxu0
        %v1420 = vadd.f32 0.0, %v1419
        %1421 = vmatmul.f32.gmra.mxu0 %v1376
        %v1422 = vpop.f32.mrf.mxu0
        %v1423 = vadd.f32 0.0, %v1422
        %1424 = vmatmul.f32.gmra.mxu0 %v1379
        %v1425 = vpop.f32.mrf.mxu0
        %v1426 = vadd.f32 0.0, %v1425
        %1427 = vdwg.mxu0
        %v1428 = vadd.f32 %v1329, %v1399
        %v1429 = vadd.f32 %v1330, %v1402
        %v1430 = vadd.f32 %v1331, %v1405
        %v1431 = vadd.f32 %v1332, %v1408
        %v1432 = vadd.f32 %v1333, %v1411
        %v1433 = vadd.f32 %v1334, %v1414
        %v1434 = vadd.f32 %v1335, %v1417
        %v1435 = vadd.f32 %v1336, %v1420
        %v1436 = vadd.f32 %v1337, %v1423
        %v1437 = vadd.f32 %v1338, %v1426
        %v1438 = vld [vmem:[%s3] sm:$0x1]
        %v1440 = vperm.slane %v1438, 0
        %v1442 = vadd.f32 %v1428, %v1440
        %v1443 = vadd.f32 %v1429, %v1440
        %v1444 = vadd.f32 %v1430, %v1440
        %v1445 = vadd.f32 %v1431, %v1440
        %v1446 = vadd.f32 %v1432, %v1440
        %v1447 = vadd.f32 %v1433, %v1440
        %v1448 = vadd.f32 %v1434, %v1440
        %v1449 = vadd.f32 %v1435, %v1440
        %v1450 = vadd.f32 %v1436, %v1440
        %v1451 = vadd.f32 %v1437, %v1440
        %v1452 = vmax.f32 %v1442, 0.0
        %v1453 = vmax.f32 %v1443, 0.0
        %v1454 = vmax.f32 %v1444, 0.0
        %v1455 = vmax.f32 %v1445, 0.0
        %v1456 = vmax.f32 %v1446, 0.0
        %v1457 = vmax.f32 %v1447, 0.0
        %v1458 = vmax.f32 %v1448, 0.0
        %v1459 = vmax.f32 %v1449, 0.0
        %v1460 = vmax.f32 %v1450, 0.0
        %v1461 = vmax.f32 %v1451, 0.0
        %vm1462 = vcmask 261120
        %1463 = vst.msk [vmem:[#allocation2] sm:$0xff] %vm1462, 0.0
        %1464 = vst.msk [vmem:[#allocation2 + $0x8] sm:$0xff] %vm1462, 0.0
        %vm1465 = vcmask 257024
        %1466 = vst.msk [vmem:[#allocation2 + $0x10] sm:$0xf] %vm1465, 0.0
        %1468 = vset.pattern.permute.xlu0 0
        %1469 = vperm.xlu0 %1468, %v557
        %v1470 = vpop.permute.xlu0 %1469
        %1473 = vset.pattern.permute.xlu0 0
        %1474 = vperm.xlu0 %1473, %v558
        %v1475 = vpop.permute.xlu0 %1474
        %1478 = vset.pattern.permute.xlu0 0
        %1479 = vperm.xlu0 %1478, %v559
        %v1480 = vpop.permute.xlu0 %1479
        %1483 = vset.pattern.permute.xlu0 0
        %1484 = vperm.xlu0 %1483, %v560
        %v1485 = vpop.permute.xlu0 %1484
        %1488 = vset.pattern.permute.xlu0 0
        %1489 = vperm.xlu0 %1488, %v561
        %v1490 = vpop.permute.xlu0 %1489
        %1493 = vset.pattern.permute.xlu0 0
        %1494 = vperm.xlu0 %1493, %v562
        %v1495 = vpop.permute.xlu0 %1494
        %1498 = vset.pattern.permute.xlu0 0
        %1499 = vperm.xlu0 %1498, %v563
        %v1500 = vpop.permute.xlu0 %1499
        %1503 = vset.pattern.permute.xlu0 0
        %1504 = vperm.xlu0 %1503, %v564
        %v1505 = vpop.permute.xlu0 %1504
        %1508 = vset.pattern.permute.xlu0 0
        %1509 = vperm.xlu0 %1508, %v565
        %v1510 = vpop.permute.xlu0 %1509
        %1513 = vset.pattern.permute.xlu0 0
        %1514 = vperm.xlu0 %1513, %v566
        %v1515 = vpop.permute.xlu0 %1514
        %v1517 = vmul.f32 %v1452, %v1470
        %v1518 = vmul.f32 %v1453, %v1475
        %v1519 = vmul.f32 %v1454, %v1480
        %v1520 = vmul.f32 %v1455, %v1485
        %v1521 = vmul.f32 %v1456, %v1490
        %v1522 = vmul.f32 %v1457, %v1495
        %v1523 = vmul.f32 %v1458, %v1500
        %v1524 = vmul.f32 %v1459, %v1505
        %v1525 = vmul.f32 %v1460, %v1510
        %v1526 = vmul.f32 %v1461, %v1515
        %1527 = vst.msk [vmem:[#allocation2 + $0x14] sm:$0xff] %vm1462, %v1517
        %1528 = vst.msk [vmem:[#allocation2 + $0x1c] sm:$0xff] %vm1462, %v1518
        %1529 = vst.msk [vmem:[#allocation2 + $0x24] sm:$0xff] %vm1462, %v1519
        %1530 = vst.msk [vmem:[#allocation2 + $0x2c] sm:$0xff] %vm1462, %v1520
        %1531 = vst.msk [vmem:[#allocation2 + $0x34] sm:$0xff] %vm1462, %v1521
        %1532 = vst.msk [vmem:[#allocation2 + $0x3c] sm:$0xff] %vm1462, %v1522
        %1533 = vst.msk [vmem:[#allocation2 + $0x44] sm:$0xff] %vm1462, %v1523
        %1534 = vst.msk [vmem:[#allocation2 + $0x4c] sm:$0xff] %vm1462, %v1524
        %1535 = vst.msk [vmem:[#allocation2 + $0x54] sm:$0xff] %vm1462, %v1525
        %1536 = vst.msk [vmem:[#allocation2 + $0x5c] sm:$0xff] %vm1462, %v1526
        %1537 = vst.msk [vmem:[#allocation2 + $0x64] sm:$0xff] %vm1462, 0.0
        %1538 = vst.msk [vmem:[#allocation2 + $0x6c] sm:$0xff] %vm1462, 0.0
        %1539 = vst.msk [vmem:[#allocation2 + $0x74] sm:$0xf] %vm1465, 0.0
        %v1540 = vld [vmem:[#allocation2 + $0x9] sm:$0xff]
        %v1541 = vld [vmem:[#allocation2 + $0x11] sm:$0xff]
        %v1542 = vld [vmem:[#allocation2 + $0x19] sm:$0xff]
        %v1543 = vld [vmem:[#allocation2 + $0x21] sm:$0xff]
        %v1544 = vld [vmem:[#allocation2 + $0x29] sm:$0xff]
        %v1545 = vld [vmem:[#allocation2 + $0x31] sm:$0xff]
        %v1546 = vld [vmem:[#allocation2 + $0x39] sm:$0xff]
        %v1547 = vld [vmem:[#allocation2 + $0x41] sm:$0xff]
        %v1548 = vld [vmem:[#allocation2 + $0x49] sm:$0xff]
        %v1549 = vld [vmem:[#allocation2 + $0x51] sm:$0xff]
        %v1550 = vld [vmem:[%s4] sm:$0xff]
        %v1551 = vld [vmem:[%s4 + $0x8] sm:$0xff]
        %v1552 = vld [vmem:[%s4 + $0x10] sm:$0xff]
        %v1553 = vld [vmem:[%s4 + $0x18] sm:$0xff]
        %v1554 = vld [vmem:[#allocation2 + $0xa] sm:$0xff]
        %v1555 = vld [vmem:[#allocation2 + $0x12] sm:$0xff]
        %v1556 = vld [vmem:[#allocation2 + $0x1a] sm:$0xff]
        %v1557 = vld [vmem:[#allocation2 + $0x22] sm:$0xff]
        %v1558 = vld [vmem:[#allocation2 + $0x2a] sm:$0xff]
        %v1559 = vld [vmem:[#allocation2 + $0x32] sm:$0xff]
        %v1560 = vld [vmem:[#allocation2 + $0x3a] sm:$0xff]
        %v1561 = vld [vmem:[#allocation2 + $0x42] sm:$0xff]
        %v1562 = vld [vmem:[#allocation2 + $0x4a] sm:$0xff]
        %v1563 = vld [vmem:[#allocation2 + $0x52] sm:$0xff]
        %s1564 = scalar_lea.vmem %s4, 32
        %v1565 = vld [vmem:[%s1564] sm:$0xff]
        %v1566 = vld [vmem:[%s1564 + $0x8] sm:$0xff]
        %v1567 = vld [vmem:[%s1564 + $0x10] sm:$0xff]
        %v1568 = vld [vmem:[%s1564 + $0x18] sm:$0xff]
        %v1570 = vsel %vm1462, %v1554, 0
        %v1573 = vsel %vm1462, %v1555, 0
        %v1576 = vsel %vm1462, %v1556, 0
        %v1579 = vsel %vm1462, %v1557, 0
        %v1582 = vsel %vm1462, %v1558, 0
        %v1585 = vsel %vm1462, %v1559, 0
        %v1588 = vsel %vm1462, %v1560, 0
        %v1591 = vsel %vm1462, %v1561, 0
        %v1594 = vsel %vm1462, %v1562, 0
        %v1597 = vsel %vm1462, %v1563, 0
        %1599 = vmatpush.msra.mxu0 0.0
        %1600 = vmatpush.msra.mxu0 0.0
        %1601 = vmatpush.msra.mxu0 0.0
        %1602 = vmatpush.msra.mxu0 0.0
        %1603 = vmatpush.msra.mxu0 0.0
        %1604 = vmatpush.msra.mxu0 0.0
        %1605 = vmatpush.msra.mxu0 0.0
        %1606 = vmatpush.msra.mxu0 0.0
        %1607 = vmatpush.msra.mxu0 0.0
        %1608 = vmatpush.msra.mxu0 0.0
        %1609 = vmatpush.msra.mxu0 0.0
        %1610 = vmatpush.msra.mxu0 0.0
        %1611 = vmatpush.msra.mxu0 %v1568
        %1612 = vmatpush.msra.mxu0 %v1567
        %1613 = vmatpush.msra.mxu0 %v1566
        %1614 = vmatpush.msra.mxu0 %v1565
        %1615 = vmatmul.f32.gmra.mxu0 %v1570
        %v1616 = vpop.f32.mrf.mxu0
        %v1617 = vadd.f32 0.0, %v1616
        %1618 = vmatmul.f32.gmra.mxu0 %v1573
        %v1619 = vpop.f32.mrf.mxu0
        %v1620 = vadd.f32 0.0, %v1619
        %1621 = vmatmul.f32.gmra.mxu0 %v1576
        %v1622 = vpop.f32.mrf.mxu0
        %v1623 = vadd.f32 0.0, %v1622
        %1624 = vmatmul.f32.gmra.mxu0 %v1579
        %v1625 = vpop.f32.mrf.mxu0
        %v1626 = vadd.f32 0.0, %v1625
        %1627 = vmatmul.f32.gmra.mxu0 %v1582
        %v1628 = vpop.f32.mrf.mxu0
        %v1629 = vadd.f32 0.0, %v1628
        %1630 = vmatmul.f32.gmra.mxu0 %v1585
        %v1631 = vpop.f32.mrf.mxu0
        %v1632 = vadd.f32 0.0, %v1631
        %1633 = vmatmul.f32.gmra.mxu0 %v1588
        %v1634 = vpop.f32.mrf.mxu0
        %v1635 = vadd.f32 0.0, %v1634
        %1636 = vmatmul.f32.gmra.mxu0 %v1591
        %v1637 = vpop.f32.mrf.mxu0
        %v1638 = vadd.f32 0.0, %v1637
        %1639 = vmatmul.f32.gmra.mxu0 %v1594
        %v1640 = vpop.f32.mrf.mxu0
        %v1641 = vadd.f32 0.0, %v1640
        %1642 = vmatmul.f32.gmra.mxu0 %v1597
        %v1643 = vpop.f32.mrf.mxu0
        %v1644 = vadd.f32 0.0, %v1643
        %1645 = vdwg.mxu0
        %v1647 = vsel %vm1462, %v1540, 0
        %v1650 = vsel %vm1462, %v1541, 0
        %v1653 = vsel %vm1462, %v1542, 0
        %v1656 = vsel %vm1462, %v1543, 0
        %v1659 = vsel %vm1462, %v1544, 0
        %v1662 = vsel %vm1462, %v1545, 0
        %v1665 = vsel %vm1462, %v1546, 0
        %v1668 = vsel %vm1462, %v1547, 0
        %v1671 = vsel %vm1462, %v1548, 0
        %v1674 = vsel %vm1462, %v1549, 0
        %1676 = vmatpush.msra.mxu0 0.0
        %1677 = vmatpush.msra.mxu0 0.0
        %1678 = vmatpush.msra.mxu0 0.0
        %1679 = vmatpush.msra.mxu0 0.0
        %1680 = vmatpush.msra.mxu0 0.0
        %1681 = vmatpush.msra.mxu0 0.0
        %1682 = vmatpush.msra.mxu0 0.0
        %1683 = vmatpush.msra.mxu0 0.0
        %1684 = vmatpush.msra.mxu0 0.0
        %1685 = vmatpush.msra.mxu0 0.0
        %1686 = vmatpush.msra.mxu0 0.0
        %1687 = vmatpush.msra.mxu0 0.0
        %1688 = vmatpush.msra.mxu0 %v1553
        %1689 = vmatpush.msra.mxu0 %v1552
        %1690 = vmatpush.msra.mxu0 %v1551
        %1691 = vmatpush.msra.mxu0 %v1550
        %1692 = vmatmul.f32.gmra.mxu0 %v1647
        %v1693 = vpop.f32.mrf.mxu0
        %v1694 = vadd.f32 %v1617, %v1693
        %1695 = vmatmul.f32.gmra.mxu0 %v1650
        %v1696 = vpop.f32.mrf.mxu0
        %v1697 = vadd.f32 %v1620, %v1696
        %1698 = vmatmul.f32.gmra.mxu0 %v1653
        %v1699 = vpop.f32.mrf.mxu0
        %v1700 = vadd.f32 %v1623, %v1699
        %1701 = vmatmul.f32.gmra.mxu0 %v1656
        %v1702 = vpop.f32.mrf.mxu0
        %v1703 = vadd.f32 %v1626, %v1702
        %1704 = vmatmul.f32.gmra.mxu0 %v1659
        %v1705 = vpop.f32.mrf.mxu0
        %v1706 = vadd.f32 %v1629, %v1705
        %1707 = vmatmul.f32.gmra.mxu0 %v1662
        %v1708 = vpop.f32.mrf.mxu0
        %v1709 = vadd.f32 %v1632, %v1708
        %1710 = vmatmul.f32.gmra.mxu0 %v1665
        %v1711 = vpop.f32.mrf.mxu0
        %v1712 = vadd.f32 %v1635, %v1711
        %1713 = vmatmul.f32.gmra.mxu0 %v1668
        %v1714 = vpop.f32.mrf.mxu0
        %v1715 = vadd.f32 %v1638, %v1714
        %1716 = vmatmul.f32.gmra.mxu0 %v1671
        %v1717 = vpop.f32.mrf.mxu0
        %v1718 = vadd.f32 %v1641, %v1717
        %1719 = vmatmul.f32.gmra.mxu0 %v1674
        %v1720 = vpop.f32.mrf.mxu0
        %v1721 = vadd.f32 %v1644, %v1720
        %1722 = vdwg.mxu0
        %v1723 = vld [vmem:[#allocation2 + $0xb] sm:$0xff]
        %v1724 = vld [vmem:[#allocation2 + $0x13] sm:$0xff]
        %v1725 = vld [vmem:[#allocation2 + $0x1b] sm:$0xff]
        %v1726 = vld [vmem:[#allocation2 + $0x23] sm:$0xff]
        %v1727 = vld [vmem:[#allocation2 + $0x2b] sm:$0xff]
        %v1728 = vld [vmem:[#allocation2 + $0x33] sm:$0xff]
        %v1729 = vld [vmem:[#allocation2 + $0x3b] sm:$0xff]
        %v1730 = vld [vmem:[#allocation2 + $0x43] sm:$0xff]
        %v1731 = vld [vmem:[#allocation2 + $0x4b] sm:$0xff]
        %v1732 = vld [vmem:[#allocation2 + $0x53] sm:$0xff]
        %s1733 = scalar_lea.vmem %s4, 64
        %v1734 = vld [vmem:[%s1733] sm:$0xff]
        %v1735 = vld [vmem:[%s1733 + $0x8] sm:$0xff]
        %v1736 = vld [vmem:[%s1733 + $0x10] sm:$0xff]
        %v1737 = vld [vmem:[%s1733 + $0x18] sm:$0xff]
        %v1739 = vsel %vm1462, %v1723, 0
        %v1742 = vsel %vm1462, %v1724, 0
        %v1745 = vsel %vm1462, %v1725, 0
        %v1748 = vsel %vm1462, %v1726, 0
        %v1751 = vsel %vm1462, %v1727, 0
        %v1754 = vsel %vm1462, %v1728, 0
        %v1757 = vsel %vm1462, %v1729, 0
        %v1760 = vsel %vm1462, %v1730, 0
        %v1763 = vsel %vm1462, %v1731, 0
        %v1766 = vsel %vm1462, %v1732, 0
        %1768 = vmatpush.msra.mxu0 0.0
        %1769 = vmatpush.msra.mxu0 0.0
        %1770 = vmatpush.msra.mxu0 0.0
        %1771 = vmatpush.msra.mxu0 0.0
        %1772 = vmatpush.msra.mxu0 0.0
        %1773 = vmatpush.msra.mxu0 0.0
        %1774 = vmatpush.msra.mxu0 0.0
        %1775 = vmatpush.msra.mxu0 0.0
        %1776 = vmatpush.msra.mxu0 0.0
        %1777 = vmatpush.msra.mxu0 0.0
        %1778 = vmatpush.msra.mxu0 0.0
        %1779 = vmatpush.msra.mxu0 0.0
        %1780 = vmatpush.msra.mxu0 %v1737
        %1781 = vmatpush.msra.mxu0 %v1736
        %1782 = vmatpush.msra.mxu0 %v1735
        %1783 = vmatpush.msra.mxu0 %v1734
        %1784 = vmatmul.f32.gmra.mxu0 %v1739
        %v1785 = vpop.f32.mrf.mxu0
        %v1786 = vadd.f32 0.0, %v1785
        %1787 = vmatmul.f32.gmra.mxu0 %v1742
        %v1788 = vpop.f32.mrf.mxu0
        %v1789 = vadd.f32 0.0, %v1788
        %1790 = vmatmul.f32.gmra.mxu0 %v1745
        %v1791 = vpop.f32.mrf.mxu0
        %v1792 = vadd.f32 0.0, %v1791
        %1793 = vmatmul.f32.gmra.mxu0 %v1748
        %v1794 = vpop.f32.mrf.mxu0
        %v1795 = vadd.f32 0.0, %v1794
        %1796 = vmatmul.f32.gmra.mxu0 %v1751
        %v1797 = vpop.f32.mrf.mxu0
        %v1798 = vadd.f32 0.0, %v1797
        %1799 = vmatmul.f32.gmra.mxu0 %v1754
        %v1800 = vpop.f32.mrf.mxu0
        %v1801 = vadd.f32 0.0, %v1800
        %1802 = vmatmul.f32.gmra.mxu0 %v1757
        %v1803 = vpop.f32.mrf.mxu0
        %v1804 = vadd.f32 0.0, %v1803
        %1805 = vmatmul.f32.gmra.mxu0 %v1760
        %v1806 = vpop.f32.mrf.mxu0
        %v1807 = vadd.f32 0.0, %v1806
        %1808 = vmatmul.f32.gmra.mxu0 %v1763
        %v1809 = vpop.f32.mrf.mxu0
        %v1810 = vadd.f32 0.0, %v1809
        %1811 = vmatmul.f32.gmra.mxu0 %v1766
        %v1812 = vpop.f32.mrf.mxu0
        %v1813 = vadd.f32 0.0, %v1812
        %1814 = vdwg.mxu0
        %v1815 = vadd.f32 %v1694, %v1786
        %v1816 = vadd.f32 %v1697, %v1789
        %v1817 = vadd.f32 %v1700, %v1792
        %v1818 = vadd.f32 %v1703, %v1795
        %v1819 = vadd.f32 %v1706, %v1798
        %v1820 = vadd.f32 %v1709, %v1801
        %v1821 = vadd.f32 %v1712, %v1804
        %v1822 = vadd.f32 %v1715, %v1807
        %v1823 = vadd.f32 %v1718, %v1810
        %v1824 = vadd.f32 %v1721, %v1813
        %v1825 = vld [vmem:[#allocation2 + $0x13] sm:$0xff]
        %v1826 = vld [vmem:[#allocation2 + $0x1b] sm:$0xff]
        %v1827 = vld [vmem:[#allocation2 + $0x23] sm:$0xff]
        %v1828 = vld [vmem:[#allocation2 + $0x2b] sm:$0xff]
        %v1829 = vld [vmem:[#allocation2 + $0x33] sm:$0xff]
        %v1830 = vld [vmem:[#allocation2 + $0x3b] sm:$0xff]
        %v1831 = vld [vmem:[#allocation2 + $0x43] sm:$0xff]
        %v1832 = vld [vmem:[#allocation2 + $0x4b] sm:$0xff]
        %v1833 = vld [vmem:[#allocation2 + $0x53] sm:$0xff]
        %v1834 = vld [vmem:[#allocation2 + $0x5b] sm:$0xff]
        %s1835 = scalar_lea.vmem %s4, 96
        %v1836 = vld [vmem:[%s1835] sm:$0xff]
        %v1837 = vld [vmem:[%s1835 + $0x8] sm:$0xff]
        %v1838 = vld [vmem:[%s1835 + $0x10] sm:$0xff]
        %v1839 = vld [vmem:[%s1835 + $0x18] sm:$0xff]
        %v1841 = vsel %vm1462, %v1825, 0
        %v1844 = vsel %vm1462, %v1826, 0
        %v1847 = vsel %vm1462, %v1827, 0
        %v1850 = vsel %vm1462, %v1828, 0
        %v1853 = vsel %vm1462, %v1829, 0
        %v1856 = vsel %vm1462, %v1830, 0
        %v1859 = vsel %vm1462, %v1831, 0
        %v1862 = vsel %vm1462, %v1832, 0
        %v1865 = vsel %vm1462, %v1833, 0
        %v1868 = vsel %vm1462, %v1834, 0
        %1870 = vmatpush.msra.mxu0 0.0
        %1871 = vmatpush.msra.mxu0 0.0
        %1872 = vmatpush.msra.mxu0 0.0
        %1873 = vmatpush.msra.mxu0 0.0
        %1874 = vmatpush.msra.mxu0 0.0
        %1875 = vmatpush.msra.mxu0 0.0
        %1876 = vmatpush.msra.mxu0 0.0
        %1877 = vmatpush.msra.mxu0 0.0
        %1878 = vmatpush.msra.mxu0 0.0
        %1879 = vmatpush.msra.mxu0 0.0
        %1880 = vmatpush.msra.mxu0 0.0
        %1881 = vmatpush.msra.mxu0 0.0
        %1882 = vmatpush.msra.mxu0 %v1839
        %1883 = vmatpush.msra.mxu0 %v1838
        %1884 = vmatpush.msra.mxu0 %v1837
        %1885 = vmatpush.msra.mxu0 %v1836
        %1886 = vmatmul.f32.gmra.mxu0 %v1841
        %v1887 = vpop.f32.mrf.mxu0
        %v1888 = vadd.f32 0.0, %v1887
        %1889 = vmatmul.f32.gmra.mxu0 %v1844
        %v1890 = vpop.f32.mrf.mxu0
        %v1891 = vadd.f32 0.0, %v1890
        %1892 = vmatmul.f32.gmra.mxu0 %v1847
        %v1893 = vpop.f32.mrf.mxu0
        %v1894 = vadd.f32 0.0, %v1893
        %1895 = vmatmul.f32.gmra.mxu0 %v1850
        %v1896 = vpop.f32.mrf.mxu0
        %v1897 = vadd.f32 0.0, %v1896
        %1898 = vmatmul.f32.gmra.mxu0 %v1853
        %v1899 = vpop.f32.mrf.mxu0
        %v1900 = vadd.f32 0.0, %v1899
        %1901 = vmatmul.f32.gmra.mxu0 %v1856
        %v1902 = vpop.f32.mrf.mxu0
        %v1903 = vadd.f32 0.0, %v1902
        %1904 = vmatmul.f32.gmra.mxu0 %v1859
        %v1905 = vpop.f32.mrf.mxu0
        %v1906 = vadd.f32 0.0, %v1905
        %1907 = vmatmul.f32.gmra.mxu0 %v1862
        %v1908 = vpop.f32.mrf.mxu0
        %v1909 = vadd.f32 0.0, %v1908
        %1910 = vmatmul.f32.gmra.mxu0 %v1865
        %v1911 = vpop.f32.mrf.mxu0
        %v1912 = vadd.f32 0.0, %v1911
        %1913 = vmatmul.f32.gmra.mxu0 %v1868
        %v1914 = vpop.f32.mrf.mxu0
        %v1915 = vadd.f32 0.0, %v1914
        %1916 = vdwg.mxu0
        %v1917 = vadd.f32 %v1815, %v1888
        %v1918 = vadd.f32 %v1816, %v1891
        %v1919 = vadd.f32 %v1817, %v1894
        %v1920 = vadd.f32 %v1818, %v1897
        %v1921 = vadd.f32 %v1819, %v1900
        %v1922 = vadd.f32 %v1820, %v1903
        %v1923 = vadd.f32 %v1821, %v1906
        %v1924 = vadd.f32 %v1822, %v1909
        %v1925 = vadd.f32 %v1823, %v1912
        %v1926 = vadd.f32 %v1824, %v1915
        %v1927 = vld [vmem:[#allocation2 + $0x14] sm:$0xff]
        %v1928 = vld [vmem:[#allocation2 + $0x1c] sm:$0xff]
        %v1929 = vld [vmem:[#allocation2 + $0x24] sm:$0xff]
        %v1930 = vld [vmem:[#allocation2 + $0x2c] sm:$0xff]
        %v1931 = vld [vmem:[#allocation2 + $0x34] sm:$0xff]
        %v1932 = vld [vmem:[#allocation2 + $0x3c] sm:$0xff]
        %v1933 = vld [vmem:[#allocation2 + $0x44] sm:$0xff]
        %v1934 = vld [vmem:[#allocation2 + $0x4c] sm:$0xff]
        %v1935 = vld [vmem:[#allocation2 + $0x54] sm:$0xff]
        %v1936 = vld [vmem:[#allocation2 + $0x5c] sm:$0xff]
        %s1937 = scalar_lea.vmem %s4, 128
        %v1938 = vld [vmem:[%s1937] sm:$0xff]
        %v1939 = vld [vmem:[%s1937 + $0x8] sm:$0xff]
        %v1940 = vld [vmem:[%s1937 + $0x10] sm:$0xff]
        %v1941 = vld [vmem:[%s1937 + $0x18] sm:$0xff]
        %v1943 = vsel %vm1462, %v1927, 0
        %v1946 = vsel %vm1462, %v1928, 0
        %v1949 = vsel %vm1462, %v1929, 0
        %v1952 = vsel %vm1462, %v1930, 0
        %v1955 = vsel %vm1462, %v1931, 0
        %v1958 = vsel %vm1462, %v1932, 0
        %v1961 = vsel %vm1462, %v1933, 0
        %v1964 = vsel %vm1462, %v1934, 0
        %v1967 = vsel %vm1462, %v1935, 0
        %v1970 = vsel %vm1462, %v1936, 0
        %1972 = vmatpush.msra.mxu0 0.0
        %1973 = vmatpush.msra.mxu0 0.0
        %1974 = vmatpush.msra.mxu0 0.0
        %1975 = vmatpush.msra.mxu0 0.0
        %1976 = vmatpush.msra.mxu0 0.0
        %1977 = vmatpush.msra.mxu0 0.0
        %1978 = vmatpush.msra.mxu0 0.0
        %1979 = vmatpush.msra.mxu0 0.0
        %1980 = vmatpush.msra.mxu0 0.0
        %1981 = vmatpush.msra.mxu0 0.0
        %1982 = vmatpush.msra.mxu0 0.0
        %1983 = vmatpush.msra.mxu0 0.0
        %1984 = vmatpush.msra.mxu0 %v1941
        %1985 = vmatpush.msra.mxu0 %v1940
        %1986 = vmatpush.msra.mxu0 %v1939
        %1987 = vmatpush.msra.mxu0 %v1938
        %1988 = vmatmul.f32.gmra.mxu0 %v1943
        %v1989 = vpop.f32.mrf.mxu0
        %v1990 = vadd.f32 0.0, %v1989
        %1991 = vmatmul.f32.gmra.mxu0 %v1946
        %v1992 = vpop.f32.mrf.mxu0
        %v1993 = vadd.f32 0.0, %v1992
        %1994 = vmatmul.f32.gmra.mxu0 %v1949
        %v1995 = vpop.f32.mrf.mxu0
        %v1996 = vadd.f32 0.0, %v1995
        %1997 = vmatmul.f32.gmra.mxu0 %v1952
        %v1998 = vpop.f32.mrf.mxu0
        %v1999 = vadd.f32 0.0, %v1998
        %2000 = vmatmul.f32.gmra.mxu0 %v1955
        %v2001 = vpop.f32.mrf.mxu0
        %v2002 = vadd.f32 0.0, %v2001
        %2003 = vmatmul.f32.gmra.mxu0 %v1958
        %v2004 = vpop.f32.mrf.mxu0
        %v2005 = vadd.f32 0.0, %v2004
        %2006 = vmatmul.f32.gmra.mxu0 %v1961
        %v2007 = vpop.f32.mrf.mxu0
        %v2008 = vadd.f32 0.0, %v2007
        %2009 = vmatmul.f32.gmra.mxu0 %v1964
        %v2010 = vpop.f32.mrf.mxu0
        %v2011 = vadd.f32 0.0, %v2010
        %2012 = vmatmul.f32.gmra.mxu0 %v1967
        %v2013 = vpop.f32.mrf.mxu0
        %v2014 = vadd.f32 0.0, %v2013
        %2015 = vmatmul.f32.gmra.mxu0 %v1970
        %v2016 = vpop.f32.mrf.mxu0
        %v2017 = vadd.f32 0.0, %v2016
        %2018 = vdwg.mxu0
        %v2019 = vadd.f32 %v1917, %v1990
        %v2020 = vadd.f32 %v1918, %v1993
        %v2021 = vadd.f32 %v1919, %v1996
        %v2022 = vadd.f32 %v1920, %v1999
        %v2023 = vadd.f32 %v1921, %v2002
        %v2024 = vadd.f32 %v1922, %v2005
        %v2025 = vadd.f32 %v1923, %v2008
        %v2026 = vadd.f32 %v1924, %v2011
        %v2027 = vadd.f32 %v1925, %v2014
        %v2028 = vadd.f32 %v1926, %v2017
        %v2029 = vld [vmem:[#allocation2 + $0x15] sm:$0xff]
        %v2030 = vld [vmem:[#allocation2 + $0x1d] sm:$0xff]
        %v2031 = vld [vmem:[#allocation2 + $0x25] sm:$0xff]
        %v2032 = vld [vmem:[#allocation2 + $0x2d] sm:$0xff]
        %v2033 = vld [vmem:[#allocation2 + $0x35] sm:$0xff]
        %v2034 = vld [vmem:[#allocation2 + $0x3d] sm:$0xff]
        %v2035 = vld [vmem:[#allocation2 + $0x45] sm:$0xff]
        %v2036 = vld [vmem:[#allocation2 + $0x4d] sm:$0xff]
        %v2037 = vld [vmem:[#allocation2 + $0x55] sm:$0xff]
        %v2038 = vld [vmem:[#allocation2 + $0x5d] sm:$0xff]
        %s2039 = scalar_lea.vmem %s4, 160
        %v2040 = vld [vmem:[%s2039] sm:$0xff]
        %v2041 = vld [vmem:[%s2039 + $0x8] sm:$0xff]
        %v2042 = vld [vmem:[%s2039 + $0x10] sm:$0xff]
        %v2043 = vld [vmem:[%s2039 + $0x18] sm:$0xff]
        %v2045 = vsel %vm1462, %v2029, 0
        %v2048 = vsel %vm1462, %v2030, 0
        %v2051 = vsel %vm1462, %v2031, 0
        %v2054 = vsel %vm1462, %v2032, 0
        %v2057 = vsel %vm1462, %v2033, 0
        %v2060 = vsel %vm1462, %v2034, 0
        %v2063 = vsel %vm1462, %v2035, 0
        %v2066 = vsel %vm1462, %v2036, 0
        %v2069 = vsel %vm1462, %v2037, 0
        %v2072 = vsel %vm1462, %v2038, 0
        %2074 = vmatpush.msra.mxu0 0.0
        %2075 = vmatpush.msra.mxu0 0.0
        %2076 = vmatpush.msra.mxu0 0.0
        %2077 = vmatpush.msra.mxu0 0.0
        %2078 = vmatpush.msra.mxu0 0.0
        %2079 = vmatpush.msra.mxu0 0.0
        %2080 = vmatpush.msra.mxu0 0.0
        %2081 = vmatpush.msra.mxu0 0.0
        %2082 = vmatpush.msra.mxu0 0.0
        %2083 = vmatpush.msra.mxu0 0.0
        %2084 = vmatpush.msra.mxu0 0.0
        %2085 = vmatpush.msra.mxu0 0.0
        %2086 = vmatpush.msra.mxu0 %v2043
        %2087 = vmatpush.msra.mxu0 %v2042
        %2088 = vmatpush.msra.mxu0 %v2041
        %2089 = vmatpush.msra.mxu0 %v2040
        %2090 = vmatmul.f32.gmra.mxu0 %v2045
        %v2091 = vpop.f32.mrf.mxu0
        %v2092 = vadd.f32 0.0, %v2091
        %2093 = vmatmul.f32.gmra.mxu0 %v2048
        %v2094 = vpop.f32.mrf.mxu0
        %v2095 = vadd.f32 0.0, %v2094
        %2096 = vmatmul.f32.gmra.mxu0 %v2051
        %v2097 = vpop.f32.mrf.mxu0
        %v2098 = vadd.f32 0.0, %v2097
        %2099 = vmatmul.f32.gmra.mxu0 %v2054
        %v2100 = vpop.f32.mrf.mxu0
        %v2101 = vadd.f32 0.0, %v2100
        %2102 = vmatmul.f32.gmra.mxu0 %v2057
        %v2103 = vpop.f32.mrf.mxu0
        %v2104 = vadd.f32 0.0, %v2103
        %2105 = vmatmul.f32.gmra.mxu0 %v2060
        %v2106 = vpop.f32.mrf.mxu0
        %v2107 = vadd.f32 0.0, %v2106
        %2108 = vmatmul.f32.gmra.mxu0 %v2063
        %v2109 = vpop.f32.mrf.mxu0
        %v2110 = vadd.f32 0.0, %v2109
        %2111 = vmatmul.f32.gmra.mxu0 %v2066
        %v2112 = vpop.f32.mrf.mxu0
        %v2113 = vadd.f32 0.0, %v2112
        %2114 = vmatmul.f32.gmra.mxu0 %v2069
        %v2115 = vpop.f32.mrf.mxu0
        %v2116 = vadd.f32 0.0, %v2115
        %2117 = vmatmul.f32.gmra.mxu0 %v2072
        %v2118 = vpop.f32.mrf.mxu0
        %v2119 = vadd.f32 0.0, %v2118
        %2120 = vdwg.mxu0
        %v2121 = vadd.f32 %v2019, %v2092
        %v2122 = vadd.f32 %v2020, %v2095
        %v2123 = vadd.f32 %v2021, %v2098
        %v2124 = vadd.f32 %v2022, %v2101
        %v2125 = vadd.f32 %v2023, %v2104
        %v2126 = vadd.f32 %v2024, %v2107
        %v2127 = vadd.f32 %v2025, %v2110
        %v2128 = vadd.f32 %v2026, %v2113
        %v2129 = vadd.f32 %v2027, %v2116
        %v2130 = vadd.f32 %v2028, %v2119
        %v2131 = vld [vmem:[#allocation2 + $0x1d] sm:$0xff]
        %v2132 = vld [vmem:[#allocation2 + $0x25] sm:$0xff]
        %v2133 = vld [vmem:[#allocation2 + $0x2d] sm:$0xff]
        %v2134 = vld [vmem:[#allocation2 + $0x35] sm:$0xff]
        %v2135 = vld [vmem:[#allocation2 + $0x3d] sm:$0xff]
        %v2136 = vld [vmem:[#allocation2 + $0x45] sm:$0xff]
        %v2137 = vld [vmem:[#allocation2 + $0x4d] sm:$0xff]
        %v2138 = vld [vmem:[#allocation2 + $0x55] sm:$0xff]
        %v2139 = vld [vmem:[#allocation2 + $0x5d] sm:$0xff]
        %v2140 = vld [vmem:[#allocation2 + $0x65] sm:$0xff]
        %s2141 = scalar_lea.vmem %s4, 192
        %v2142 = vld [vmem:[%s2141] sm:$0xff]
        %v2143 = vld [vmem:[%s2141 + $0x8] sm:$0xff]
        %v2144 = vld [vmem:[%s2141 + $0x10] sm:$0xff]
        %v2145 = vld [vmem:[%s2141 + $0x18] sm:$0xff]
        %v2147 = vsel %vm1462, %v2131, 0
        %v2150 = vsel %vm1462, %v2132, 0
        %v2153 = vsel %vm1462, %v2133, 0
        %v2156 = vsel %vm1462, %v2134, 0
        %v2159 = vsel %vm1462, %v2135, 0
        %v2162 = vsel %vm1462, %v2136, 0
        %v2165 = vsel %vm1462, %v2137, 0
        %v2168 = vsel %vm1462, %v2138, 0
        %v2171 = vsel %vm1462, %v2139, 0
        %v2174 = vsel %vm1462, %v2140, 0
        %2176 = vmatpush.msra.mxu0 0.0
        %2177 = vmatpush.msra.mxu0 0.0
        %2178 = vmatpush.msra.mxu0 0.0
        %2179 = vmatpush.msra.mxu0 0.0
        %2180 = vmatpush.msra.mxu0 0.0
        %2181 = vmatpush.msra.mxu0 0.0
        %2182 = vmatpush.msra.mxu0 0.0
        %2183 = vmatpush.msra.mxu0 0.0
        %2184 = vmatpush.msra.mxu0 0.0
        %2185 = vmatpush.msra.mxu0 0.0
        %2186 = vmatpush.msra.mxu0 0.0
        %2187 = vmatpush.msra.mxu0 0.0
        %2188 = vmatpush.msra.mxu0 %v2145
        %2189 = vmatpush.msra.mxu0 %v2144
        %2190 = vmatpush.msra.mxu0 %v2143
        %2191 = vmatpush.msra.mxu0 %v2142
        %2192 = vmatmul.f32.gmra.mxu0 %v2147
        %v2193 = vpop.f32.mrf.mxu0
        %v2194 = vadd.f32 0.0, %v2193
        %2195 = vmatmul.f32.gmra.mxu0 %v2150
        %v2196 = vpop.f32.mrf.mxu0
        %v2197 = vadd.f32 0.0, %v2196
        %2198 = vmatmul.f32.gmra.mxu0 %v2153
        %v2199 = vpop.f32.mrf.mxu0
        %v2200 = vadd.f32 0.0, %v2199
        %2201 = vmatmul.f32.gmra.mxu0 %v2156
        %v2202 = vpop.f32.mrf.mxu0
        %v2203 = vadd.f32 0.0, %v2202
        %2204 = vmatmul.f32.gmra.mxu0 %v2159
        %v2205 = vpop.f32.mrf.mxu0
        %v2206 = vadd.f32 0.0, %v2205
        %2207 = vmatmul.f32.gmra.mxu0 %v2162
        %v2208 = vpop.f32.mrf.mxu0
        %v2209 = vadd.f32 0.0, %v2208
        %2210 = vmatmul.f32.gmra.mxu0 %v2165
        %v2211 = vpop.f32.mrf.mxu0
        %v2212 = vadd.f32 0.0, %v2211
        %2213 = vmatmul.f32.gmra.mxu0 %v2168
        %v2214 = vpop.f32.mrf.mxu0
        %v2215 = vadd.f32 0.0, %v2214
        %2216 = vmatmul.f32.gmra.mxu0 %v2171
        %v2217 = vpop.f32.mrf.mxu0
        %v2218 = vadd.f32 0.0, %v2217
        %2219 = vmatmul.f32.gmra.mxu0 %v2174
        %v2220 = vpop.f32.mrf.mxu0
        %v2221 = vadd.f32 0.0, %v2220
        %2222 = vdwg.mxu0
        %v2223 = vadd.f32 %v2121, %v2194
        %v2224 = vadd.f32 %v2122, %v2197
        %v2225 = vadd.f32 %v2123, %v2200
        %v2226 = vadd.f32 %v2124, %v2203
        %v2227 = vadd.f32 %v2125, %v2206
        %v2228 = vadd.f32 %v2126, %v2209
        %v2229 = vadd.f32 %v2127, %v2212
        %v2230 = vadd.f32 %v2128, %v2215
        %v2231 = vadd.f32 %v2129, %v2218
        %v2232 = vadd.f32 %v2130, %v2221
        %v2233 = vld [vmem:[#allocation2 + $0x1e] sm:$0xff]
        %v2234 = vld [vmem:[#allocation2 + $0x26] sm:$0xff]
        %v2235 = vld [vmem:[#allocation2 + $0x2e] sm:$0xff]
        %v2236 = vld [vmem:[#allocation2 + $0x36] sm:$0xff]
        %v2237 = vld [vmem:[#allocation2 + $0x3e] sm:$0xff]
        %v2238 = vld [vmem:[#allocation2 + $0x46] sm:$0xff]
        %v2239 = vld [vmem:[#allocation2 + $0x4e] sm:$0xff]
        %v2240 = vld [vmem:[#allocation2 + $0x56] sm:$0xff]
        %v2241 = vld [vmem:[#allocation2 + $0x5e] sm:$0xff]
        %v2242 = vld [vmem:[#allocation2 + $0x66] sm:$0xff]
        %s2243 = scalar_lea.vmem %s4, 224
        %v2244 = vld [vmem:[%s2243] sm:$0xff]
        %v2245 = vld [vmem:[%s2243 + $0x8] sm:$0xff]
        %v2246 = vld [vmem:[%s2243 + $0x10] sm:$0xff]
        %v2247 = vld [vmem:[%s2243 + $0x18] sm:$0xff]
        %v2249 = vsel %vm1462, %v2233, 0
        %v2252 = vsel %vm1462, %v2234, 0
        %v2255 = vsel %vm1462, %v2235, 0
        %v2258 = vsel %vm1462, %v2236, 0
        %v2261 = vsel %vm1462, %v2237, 0
        %v2264 = vsel %vm1462, %v2238, 0
        %v2267 = vsel %vm1462, %v2239, 0
        %v2270 = vsel %vm1462, %v2240, 0
        %v2273 = vsel %vm1462, %v2241, 0
        %v2276 = vsel %vm1462, %v2242, 0
        %2278 = vmatpush.msra.mxu0 0.0
        %2279 = vmatpush.msra.mxu0 0.0
        %2280 = vmatpush.msra.mxu0 0.0
        %2281 = vmatpush.msra.mxu0 0.0
        %2282 = vmatpush.msra.mxu0 0.0
        %2283 = vmatpush.msra.mxu0 0.0
        %2284 = vmatpush.msra.mxu0 0.0
        %2285 = vmatpush.msra.mxu0 0.0
        %2286 = vmatpush.msra.mxu0 0.0
        %2287 = vmatpush.msra.mxu0 0.0
        %2288 = vmatpush.msra.mxu0 0.0
        %2289 = vmatpush.msra.mxu0 0.0
        %2290 = vmatpush.msra.mxu0 %v2247
        %2291 = vmatpush.msra.mxu0 %v2246
        %2292 = vmatpush.msra.mxu0 %v2245
        %2293 = vmatpush.msra.mxu0 %v2244
        %2294 = vmatmul.f32.gmra.mxu0 %v2249
        %v2295 = vpop.f32.mrf.mxu0
        %v2296 = vadd.f32 0.0, %v2295
        %2297 = vmatmul.f32.gmra.mxu0 %v2252
        %v2298 = vpop.f32.mrf.mxu0
        %v2299 = vadd.f32 0.0, %v2298
        %2300 = vmatmul.f32.gmra.mxu0 %v2255
        %v2301 = vpop.f32.mrf.mxu0
        %v2302 = vadd.f32 0.0, %v2301
        %2303 = vmatmul.f32.gmra.mxu0 %v2258
        %v2304 = vpop.f32.mrf.mxu0
        %v2305 = vadd.f32 0.0, %v2304
        %2306 = vmatmul.f32.gmra.mxu0 %v2261
        %v2307 = vpop.f32.mrf.mxu0
        %v2308 = vadd.f32 0.0, %v2307
        %2309 = vmatmul.f32.gmra.mxu0 %v2264
        %v2310 = vpop.f32.mrf.mxu0
        %v2311 = vadd.f32 0.0, %v2310
        %2312 = vmatmul.f32.gmra.mxu0 %v2267
        %v2313 = vpop.f32.mrf.mxu0
        %v2314 = vadd.f32 0.0, %v2313
        %2315 = vmatmul.f32.gmra.mxu0 %v2270
        %v2316 = vpop.f32.mrf.mxu0
        %v2317 = vadd.f32 0.0, %v2316
        %2318 = vmatmul.f32.gmra.mxu0 %v2273
        %v2319 = vpop.f32.mrf.mxu0
        %v2320 = vadd.f32 0.0, %v2319
        %2321 = vmatmul.f32.gmra.mxu0 %v2276
        %v2322 = vpop.f32.mrf.mxu0
        %v2323 = vadd.f32 0.0, %v2322
        %2324 = vdwg.mxu0
        %v2325 = vadd.f32 %v2223, %v2296
        %v2326 = vadd.f32 %v2224, %v2299
        %v2327 = vadd.f32 %v2225, %v2302
        %v2328 = vadd.f32 %v2226, %v2305
        %v2329 = vadd.f32 %v2227, %v2308
        %v2330 = vadd.f32 %v2228, %v2311
        %v2331 = vadd.f32 %v2229, %v2314
        %v2332 = vadd.f32 %v2230, %v2317
        %v2333 = vadd.f32 %v2231, %v2320
        %v2334 = vadd.f32 %v2232, %v2323
        %v2335 = vld [vmem:[#allocation2 + $0x1f] sm:$0xff]
        %v2336 = vld [vmem:[#allocation2 + $0x27] sm:$0xff]
        %v2337 = vld [vmem:[#allocation2 + $0x2f] sm:$0xff]
        %v2338 = vld [vmem:[#allocation2 + $0x37] sm:$0xff]
        %v2339 = vld [vmem:[#allocation2 + $0x3f] sm:$0xff]
        %v2340 = vld [vmem:[#allocation2 + $0x47] sm:$0xff]
        %v2341 = vld [vmem:[#allocation2 + $0x4f] sm:$0xff]
        %v2342 = vld [vmem:[#allocation2 + $0x57] sm:$0xff]
        %v2343 = vld [vmem:[#allocation2 + $0x5f] sm:$0xff]
        %v2344 = vld [vmem:[#allocation2 + $0x67] sm:$0xff]
        %s2345 = scalar_lea.vmem %s4, 256
        %v2346 = vld [vmem:[%s2345] sm:$0xff]
        %v2347 = vld [vmem:[%s2345 + $0x8] sm:$0xff]
        %v2348 = vld [vmem:[%s2345 + $0x10] sm:$0xff]
        %v2349 = vld [vmem:[%s2345 + $0x18] sm:$0xff]
        %v2351 = vsel %vm1462, %v2335, 0
        %v2354 = vsel %vm1462, %v2336, 0
        %v2357 = vsel %vm1462, %v2337, 0
        %v2360 = vsel %vm1462, %v2338, 0
        %v2363 = vsel %vm1462, %v2339, 0
        %v2366 = vsel %vm1462, %v2340, 0
        %v2369 = vsel %vm1462, %v2341, 0
        %v2372 = vsel %vm1462, %v2342, 0
        %v2375 = vsel %vm1462, %v2343, 0
        %v2378 = vsel %vm1462, %v2344, 0
        %2380 = vmatpush.msra.mxu0 0.0
        %2381 = vmatpush.msra.mxu0 0.0
        %2382 = vmatpush.msra.mxu0 0.0
        %2383 = vmatpush.msra.mxu0 0.0
        %2384 = vmatpush.msra.mxu0 0.0
        %2385 = vmatpush.msra.mxu0 0.0
        %2386 = vmatpush.msra.mxu0 0.0
        %2387 = vmatpush.msra.mxu0 0.0
        %2388 = vmatpush.msra.mxu0 0.0
        %2389 = vmatpush.msra.mxu0 0.0
        %2390 = vmatpush.msra.mxu0 0.0
        %2391 = vmatpush.msra.mxu0 0.0
        %2392 = vmatpush.msra.mxu0 %v2349
        %2393 = vmatpush.msra.mxu0 %v2348
        %2394 = vmatpush.msra.mxu0 %v2347
        %2395 = vmatpush.msra.mxu0 %v2346
        %2396 = vmatmul.f32.gmra.mxu0 %v2351
        %v2397 = vpop.f32.mrf.mxu0
        %v2398 = vadd.f32 0.0, %v2397
        %2399 = vmatmul.f32.gmra.mxu0 %v2354
        %v2400 = vpop.f32.mrf.mxu0
        %v2401 = vadd.f32 0.0, %v2400
        %2402 = vmatmul.f32.gmra.mxu0 %v2357
        %v2403 = vpop.f32.mrf.mxu0
        %v2404 = vadd.f32 0.0, %v2403
        %2405 = vmatmul.f32.gmra.mxu0 %v2360
        %v2406 = vpop.f32.mrf.mxu0
        %v2407 = vadd.f32 0.0, %v2406
        %2408 = vmatmul.f32.gmra.mxu0 %v2363
        %v2409 = vpop.f32.mrf.mxu0
        %v2410 = vadd.f32 0.0, %v2409
        %2411 = vmatmul.f32.gmra.mxu0 %v2366
        %v2412 = vpop.f32.mrf.mxu0
        %v2413 = vadd.f32 0.0, %v2412
        %2414 = vmatmul.f32.gmra.mxu0 %v2369
        %v2415 = vpop.f32.mrf.mxu0
        %v2416 = vadd.f32 0.0, %v2415
        %2417 = vmatmul.f32.gmra.mxu0 %v2372
        %v2418 = vpop.f32.mrf.mxu0
        %v2419 = vadd.f32 0.0, %v2418
        %2420 = vmatmul.f32.gmra.mxu0 %v2375
        %v2421 = vpop.f32.mrf.mxu0
        %v2422 = vadd.f32 0.0, %v2421
        %2423 = vmatmul.f32.gmra.mxu0 %v2378
        %v2424 = vpop.f32.mrf.mxu0
        %v2425 = vadd.f32 0.0, %v2424
        %2426 = vdwg.mxu0
        %v2427 = vadd.f32 %v2325, %v2398
        %v2428 = vadd.f32 %v2326, %v2401
        %v2429 = vadd.f32 %v2327, %v2404
        %v2430 = vadd.f32 %v2328, %v2407
        %v2431 = vadd.f32 %v2329, %v2410
        %v2432 = vadd.f32 %v2330, %v2413
        %v2433 = vadd.f32 %v2331, %v2416
        %v2434 = vadd.f32 %v2332, %v2419
        %v2435 = vadd.f32 %v2333, %v2422
        %v2436 = vadd.f32 %v2334, %v2425
        %v2437 = vld [vmem:[%s5] sm:$0x1]
        %v2439 = vperm.slane %v2437, 0
        %v2441 = vadd.f32 %v2427, %v2439
        %v2442 = vadd.f32 %v2428, %v2439
        %v2443 = vadd.f32 %v2429, %v2439
        %v2444 = vadd.f32 %v2430, %v2439
        %v2445 = vadd.f32 %v2431, %v2439
        %v2446 = vadd.f32 %v2432, %v2439
        %v2447 = vadd.f32 %v2433, %v2439
        %v2448 = vadd.f32 %v2434, %v2439
        %v2449 = vadd.f32 %v2435, %v2439
        %v2450 = vadd.f32 %v2436, %v2439
        %v2451 = vmax.f32 %v2441, 0.0
        %v2452 = vmax.f32 %v2442, 0.0
        %v2453 = vmax.f32 %v2443, 0.0
        %v2454 = vmax.f32 %v2444, 0.0
        %v2455 = vmax.f32 %v2445, 0.0
        %v2456 = vmax.f32 %v2446, 0.0
        %v2457 = vmax.f32 %v2447, 0.0
        %v2458 = vmax.f32 %v2448, 0.0
        %v2459 = vmax.f32 %v2449, 0.0
        %v2460 = vmax.f32 %v2450, 0.0
        %vm2461 = vcmask 523264
        %2462 = vst.msk [vmem:[#allocation3] sm:$0xff] %vm2461, 0.0
        %2463 = vst.msk [vmem:[#allocation3 + $0x8] sm:$0xff] %vm2461, 0.0
        %vm2464 = vcmask 519168
        %2465 = vst.msk [vmem:[#allocation3 + $0x10] sm:$0xf] %vm2464, 0.0
        %v2466 = vmul.f32 %v2451, %v1470
        %v2467 = vmul.f32 %v2452, %v1475
        %v2468 = vmul.f32 %v2453, %v1480
        %v2469 = vmul.f32 %v2454, %v1485
        %v2470 = vmul.f32 %v2455, %v1490
        %v2471 = vmul.f32 %v2456, %v1495
        %v2472 = vmul.f32 %v2457, %v1500
        %v2473 = vmul.f32 %v2458, %v1505
        %v2474 = vmul.f32 %v2459, %v1510
        %v2475 = vmul.f32 %v2460, %v1515
        %2476 = vst.msk [vmem:[#allocation3 + $0x14] sm:$0xff] %vm2461, %v2466
        %2477 = vst.msk [vmem:[#allocation3 + $0x1c] sm:$0xff] %vm2461, %v2467
        %2478 = vst.msk [vmem:[#allocation3 + $0x24] sm:$0xff] %vm2461, %v2468
        %2479 = vst.msk [vmem:[#allocation3 + $0x2c] sm:$0xff] %vm2461, %v2469
        %2480 = vst.msk [vmem:[#allocation3 + $0x34] sm:$0xff] %vm2461, %v2470
        %2481 = vst.msk [vmem:[#allocation3 + $0x3c] sm:$0xff] %vm2461, %v2471
        %2482 = vst.msk [vmem:[#allocation3 + $0x44] sm:$0xff] %vm2461, %v2472
        %2483 = vst.msk [vmem:[#allocation3 + $0x4c] sm:$0xff] %vm2461, %v2473
        %2484 = vst.msk [vmem:[#allocation3 + $0x54] sm:$0xff] %vm2461, %v2474
        %2485 = vst.msk [vmem:[#allocation3 + $0x5c] sm:$0xff] %vm2461, %v2475
        %2486 = vst.msk [vmem:[#allocation3 + $0x64] sm:$0xff] %vm2461, 0.0
        %2487 = vst.msk [vmem:[#allocation3 + $0x6c] sm:$0xff] %vm2461, 0.0
        %2488 = vst.msk [vmem:[#allocation3 + $0x74] sm:$0xf] %vm2464, 0.0
        %v2489 = vld [vmem:[#allocation3 + $0x9] sm:$0xff]
        %v2490 = vld [vmem:[#allocation3 + $0x11] sm:$0xff]
        %v2491 = vld [vmem:[#allocation3 + $0x19] sm:$0xff]
        %v2492 = vld [vmem:[#allocation3 + $0x21] sm:$0xff]
        %v2493 = vld [vmem:[#allocation3 + $0x29] sm:$0xff]
        %v2494 = vld [vmem:[#allocation3 + $0x31] sm:$0xff]
        %v2495 = vld [vmem:[#allocation3 + $0x39] sm:$0xff]
        %v2496 = vld [vmem:[#allocation3 + $0x41] sm:$0xff]
        %v2497 = vld [vmem:[#allocation3 + $0x49] sm:$0xff]
        %v2498 = vld [vmem:[#allocation3 + $0x51] sm:$0xff]
        %v2499 = vld [vmem:[%s6] sm:$0xff]
        %v2500 = vld [vmem:[%s6 + $0x8] sm:$0xff]
        %v2501 = vld [vmem:[%s6 + $0x10] sm:$0xff]
        %v2502 = vld [vmem:[%s6 + $0x18] sm:$0xff]
        %v2503 = vld [vmem:[%s6 + $0x20] sm:$0xff]
        %v2504 = vld [vmem:[%s6 + $0x28] sm:$0xff]
        %v2505 = vld [vmem:[%s6 + $0x30] sm:$0xff]
        %v2506 = vld [vmem:[%s6 + $0x38] sm:$0xff]
        %v2507 = vld [vmem:[#allocation3 + $0xa] sm:$0xff]
        %v2508 = vld [vmem:[#allocation3 + $0x12] sm:$0xff]
        %v2509 = vld [vmem:[#allocation3 + $0x1a] sm:$0xff]
        %v2510 = vld [vmem:[#allocation3 + $0x22] sm:$0xff]
        %v2511 = vld [vmem:[#allocation3 + $0x2a] sm:$0xff]
        %v2512 = vld [vmem:[#allocation3 + $0x32] sm:$0xff]
        %v2513 = vld [vmem:[#allocation3 + $0x3a] sm:$0xff]
        %v2514 = vld [vmem:[#allocation3 + $0x42] sm:$0xff]
        %v2515 = vld [vmem:[#allocation3 + $0x4a] sm:$0xff]
        %v2516 = vld [vmem:[#allocation3 + $0x52] sm:$0xff]
        %s2517 = scalar_lea.vmem %s6, 64
        %v2518 = vld [vmem:[%s2517] sm:$0xff]
        %v2519 = vld [vmem:[%s2517 + $0x8] sm:$0xff]
        %v2520 = vld [vmem:[%s2517 + $0x10] sm:$0xff]
        %v2521 = vld [vmem:[%s2517 + $0x18] sm:$0xff]
        %v2522 = vld [vmem:[%s2517 + $0x20] sm:$0xff]
        %v2523 = vld [vmem:[%s2517 + $0x28] sm:$0xff]
        %v2524 = vld [vmem:[%s2517 + $0x30] sm:$0xff]
        %v2525 = vld [vmem:[%s2517 + $0x38] sm:$0xff]
        %v2527 = vsel %vm2461, %v2507, 0
        %v2530 = vsel %vm2461, %v2508, 0
        %v2533 = vsel %vm2461, %v2509, 0
        %v2536 = vsel %vm2461, %v2510, 0
        %v2539 = vsel %vm2461, %v2511, 0
        %v2542 = vsel %vm2461, %v2512, 0
        %v2545 = vsel %vm2461, %v2513, 0
        %v2548 = vsel %vm2461, %v2514, 0
        %v2551 = vsel %vm2461, %v2515, 0
        %v2554 = vsel %vm2461, %v2516, 0
        %2556 = vmatpush.msra.mxu0 0.0
        %2557 = vmatpush.msra.mxu0 0.0
        %2558 = vmatpush.msra.mxu0 0.0
        %2559 = vmatpush.msra.mxu0 0.0
        %2560 = vmatpush.msra.mxu0 0.0
        %2561 = vmatpush.msra.mxu0 0.0
        %2562 = vmatpush.msra.mxu0 0.0
        %2563 = vmatpush.msra.mxu0 0.0
        %2564 = vmatpush.msra.mxu0 %v2525
        %2565 = vmatpush.msra.mxu0 %v2524
        %2566 = vmatpush.msra.mxu0 %v2523
        %2567 = vmatpush.msra.mxu0 %v2522
        %2568 = vmatpush.msra.mxu0 %v2521
        %2569 = vmatpush.msra.mxu0 %v2520
        %2570 = vmatpush.msra.mxu0 %v2519
        %2571 = vmatpush.msra.mxu0 %v2518
        %2572 = vmatmul.f32.gmra.mxu0 %v2527
        %v2573 = vpop.f32.mrf.mxu0
        %v2574 = vadd.f32 0.0, %v2573
        %2575 = vmatmul.f32.gmra.mxu0 %v2530
        %v2576 = vpop.f32.mrf.mxu0
        %v2577 = vadd.f32 0.0, %v2576
        %2578 = vmatmul.f32.gmra.mxu0 %v2533
        %v2579 = vpop.f32.mrf.mxu0
        %v2580 = vadd.f32 0.0, %v2579
        %2581 = vmatmul.f32.gmra.mxu0 %v2536
        %v2582 = vpop.f32.mrf.mxu0
        %v2583 = vadd.f32 0.0, %v2582
        %2584 = vmatmul.f32.gmra.mxu0 %v2539
        %v2585 = vpop.f32.mrf.mxu0
        %v2586 = vadd.f32 0.0, %v2585
        %2587 = vmatmul.f32.gmra.mxu0 %v2542
        %v2588 = vpop.f32.mrf.mxu0
        %v2589 = vadd.f32 0.0, %v2588
        %2590 = vmatmul.f32.gmra.mxu0 %v2545
        %v2591 = vpop.f32.mrf.mxu0
        %v2592 = vadd.f32 0.0, %v2591
        %2593 = vmatmul.f32.gmra.mxu0 %v2548
        %v2594 = vpop.f32.mrf.mxu0
        %v2595 = vadd.f32 0.0, %v2594
        %2596 = vmatmul.f32.gmra.mxu0 %v2551
        %v2597 = vpop.f32.mrf.mxu0
        %v2598 = vadd.f32 0.0, %v2597
        %2599 = vmatmul.f32.gmra.mxu0 %v2554
        %v2600 = vpop.f32.mrf.mxu0
        %v2601 = vadd.f32 0.0, %v2600
        %2602 = vdwg.mxu0
        %v2604 = vsel %vm2461, %v2489, 0
        %v2607 = vsel %vm2461, %v2490, 0
        %v2610 = vsel %vm2461, %v2491, 0
        %v2613 = vsel %vm2461, %v2492, 0
        %v2616 = vsel %vm2461, %v2493, 0
        %v2619 = vsel %vm2461, %v2494, 0
        %v2622 = vsel %vm2461, %v2495, 0
        %v2625 = vsel %vm2461, %v2496, 0
        %v2628 = vsel %vm2461, %v2497, 0
        %v2631 = vsel %vm2461, %v2498, 0
        %2633 = vmatpush.msra.mxu0 0.0
        %2634 = vmatpush.msra.mxu0 0.0
        %2635 = vmatpush.msra.mxu0 0.0
        %2636 = vmatpush.msra.mxu0 0.0
        %2637 = vmatpush.msra.mxu0 0.0
        %2638 = vmatpush.msra.mxu0 0.0
        %2639 = vmatpush.msra.mxu0 0.0
        %2640 = vmatpush.msra.mxu0 0.0
        %2641 = vmatpush.msra.mxu0 %v2506
        %2642 = vmatpush.msra.mxu0 %v2505
        %2643 = vmatpush.msra.mxu0 %v2504
        %2644 = vmatpush.msra.mxu0 %v2503
        %2645 = vmatpush.msra.mxu0 %v2502
        %2646 = vmatpush.msra.mxu0 %v2501
        %2647 = vmatpush.msra.mxu0 %v2500
        %2648 = vmatpush.msra.mxu0 %v2499
        %2649 = vmatmul.f32.gmra.mxu0 %v2604
        %v2650 = vpop.f32.mrf.mxu0
        %v2651 = vadd.f32 %v2574, %v2650
        %2652 = vmatmul.f32.gmra.mxu0 %v2607
        %v2653 = vpop.f32.mrf.mxu0
        %v2654 = vadd.f32 %v2577, %v2653
        %2655 = vmatmul.f32.gmra.mxu0 %v2610
        %v2656 = vpop.f32.mrf.mxu0
        %v2657 = vadd.f32 %v2580, %v2656
        %2658 = vmatmul.f32.gmra.mxu0 %v2613
        %v2659 = vpop.f32.mrf.mxu0
        %v2660 = vadd.f32 %v2583, %v2659
        %2661 = vmatmul.f32.gmra.mxu0 %v2616
        %v2662 = vpop.f32.mrf.mxu0
        %v2663 = vadd.f32 %v2586, %v2662
        %2664 = vmatmul.f32.gmra.mxu0 %v2619
        %v2665 = vpop.f32.mrf.mxu0
        %v2666 = vadd.f32 %v2589, %v2665
        %2667 = vmatmul.f32.gmra.mxu0 %v2622
        %v2668 = vpop.f32.mrf.mxu0
        %v2669 = vadd.f32 %v2592, %v2668
        %2670 = vmatmul.f32.gmra.mxu0 %v2625
        %v2671 = vpop.f32.mrf.mxu0
        %v2672 = vadd.f32 %v2595, %v2671
        %2673 = vmatmul.f32.gmra.mxu0 %v2628
        %v2674 = vpop.f32.mrf.mxu0
        %v2675 = vadd.f32 %v2598, %v2674
        %2676 = vmatmul.f32.gmra.mxu0 %v2631
        %v2677 = vpop.f32.mrf.mxu0
        %v2678 = vadd.f32 %v2601, %v2677
        %2679 = vdwg.mxu0
        %v2680 = vld [vmem:[#allocation3 + $0xb] sm:$0xff]
        %v2681 = vld [vmem:[#allocation3 + $0x13] sm:$0xff]
        %v2682 = vld [vmem:[#allocation3 + $0x1b] sm:$0xff]
        %v2683 = vld [vmem:[#allocation3 + $0x23] sm:$0xff]
        %v2684 = vld [vmem:[#allocation3 + $0x2b] sm:$0xff]
        %v2685 = vld [vmem:[#allocation3 + $0x33] sm:$0xff]
        %v2686 = vld [vmem:[#allocation3 + $0x3b] sm:$0xff]
        %v2687 = vld [vmem:[#allocation3 + $0x43] sm:$0xff]
        %v2688 = vld [vmem:[#allocation3 + $0x4b] sm:$0xff]
        %v2689 = vld [vmem:[#allocation3 + $0x53] sm:$0xff]
        %s2690 = scalar_lea.vmem %s6, 128
        %v2691 = vld [vmem:[%s2690] sm:$0xff]
        %v2692 = vld [vmem:[%s2690 + $0x8] sm:$0xff]
        %v2693 = vld [vmem:[%s2690 + $0x10] sm:$0xff]
        %v2694 = vld [vmem:[%s2690 + $0x18] sm:$0xff]
        %v2695 = vld [vmem:[%s2690 + $0x20] sm:$0xff]
        %v2696 = vld [vmem:[%s2690 + $0x28] sm:$0xff]
        %v2697 = vld [vmem:[%s2690 + $0x30] sm:$0xff]
        %v2698 = vld [vmem:[%s2690 + $0x38] sm:$0xff]
        %v2700 = vsel %vm2461, %v2680, 0
        %v2703 = vsel %vm2461, %v2681, 0
        %v2706 = vsel %vm2461, %v2682, 0
        %v2709 = vsel %vm2461, %v2683, 0
        %v2712 = vsel %vm2461, %v2684, 0
        %v2715 = vsel %vm2461, %v2685, 0
        %v2718 = vsel %vm2461, %v2686, 0
        %v2721 = vsel %vm2461, %v2687, 0
        %v2724 = vsel %vm2461, %v2688, 0
        %v2727 = vsel %vm2461, %v2689, 0
        %2729 = vmatpush.msra.mxu0 0.0
        %2730 = vmatpush.msra.mxu0 0.0
        %2731 = vmatpush.msra.mxu0 0.0
        %2732 = vmatpush.msra.mxu0 0.0
        %2733 = vmatpush.msra.mxu0 0.0
        %2734 = vmatpush.msra.mxu0 0.0
        %2735 = vmatpush.msra.mxu0 0.0
        %2736 = vmatpush.msra.mxu0 0.0
        %2737 = vmatpush.msra.mxu0 %v2698
        %2738 = vmatpush.msra.mxu0 %v2697
        %2739 = vmatpush.msra.mxu0 %v2696
        %2740 = vmatpush.msra.mxu0 %v2695
        %2741 = vmatpush.msra.mxu0 %v2694
        %2742 = vmatpush.msra.mxu0 %v2693
        %2743 = vmatpush.msra.mxu0 %v2692
        %2744 = vmatpush.msra.mxu0 %v2691
        %2745 = vmatmul.f32.gmra.mxu0 %v2700
        %v2746 = vpop.f32.mrf.mxu0
        %v2747 = vadd.f32 0.0, %v2746
        %2748 = vmatmul.f32.gmra.mxu0 %v2703
        %v2749 = vpop.f32.mrf.mxu0
        %v2750 = vadd.f32 0.0, %v2749
        %2751 = vmatmul.f32.gmra.mxu0 %v2706
        %v2752 = vpop.f32.mrf.mxu0
        %v2753 = vadd.f32 0.0, %v2752
        %2754 = vmatmul.f32.gmra.mxu0 %v2709
        %v2755 = vpop.f32.mrf.mxu0
        %v2756 = vadd.f32 0.0, %v2755
        %2757 = vmatmul.f32.gmra.mxu0 %v2712
        %v2758 = vpop.f32.mrf.mxu0
        %v2759 = vadd.f32 0.0, %v2758
        %2760 = vmatmul.f32.gmra.mxu0 %v2715
        %v2761 = vpop.f32.mrf.mxu0
        %v2762 = vadd.f32 0.0, %v2761
        %2763 = vmatmul.f32.gmra.mxu0 %v2718
        %v2764 = vpop.f32.mrf.mxu0
        %v2765 = vadd.f32 0.0, %v2764
        %2766 = vmatmul.f32.gmra.mxu0 %v2721
        %v2767 = vpop.f32.mrf.mxu0
        %v2768 = vadd.f32 0.0, %v2767
        %2769 = vmatmul.f32.gmra.mxu0 %v2724
        %v2770 = vpop.f32.mrf.mxu0
        %v2771 = vadd.f32 0.0, %v2770
        %2772 = vmatmul.f32.gmra.mxu0 %v2727
        %v2773 = vpop.f32.mrf.mxu0
        %v2774 = vadd.f32 0.0, %v2773
        %2775 = vdwg.mxu0
        %v2776 = vadd.f32 %v2651, %v2747
        %v2777 = vadd.f32 %v2654, %v2750
        %v2778 = vadd.f32 %v2657, %v2753
        %v2779 = vadd.f32 %v2660, %v2756
        %v2780 = vadd.f32 %v2663, %v2759
        %v2781 = vadd.f32 %v2666, %v2762
        %v2782 = vadd.f32 %v2669, %v2765
        %v2783 = vadd.f32 %v2672, %v2768
        %v2784 = vadd.f32 %v2675, %v2771
        %v2785 = vadd.f32 %v2678, %v2774
        %v2786 = vld [vmem:[#allocation3 + $0x13] sm:$0xff]
        %v2787 = vld [vmem:[#allocation3 + $0x1b] sm:$0xff]
        %v2788 = vld [vmem:[#allocation3 + $0x23] sm:$0xff]
        %v2789 = vld [vmem:[#allocation3 + $0x2b] sm:$0xff]
        %v2790 = vld [vmem:[#allocation3 + $0x33] sm:$0xff]
        %v2791 = vld [vmem:[#allocation3 + $0x3b] sm:$0xff]
        %v2792 = vld [vmem:[#allocation3 + $0x43] sm:$0xff]
        %v2793 = vld [vmem:[#allocation3 + $0x4b] sm:$0xff]
        %v2794 = vld [vmem:[#allocation3 + $0x53] sm:$0xff]
        %v2795 = vld [vmem:[#allocation3 + $0x5b] sm:$0xff]
        %s2796 = scalar_lea.vmem %s6, 192
        %v2797 = vld [vmem:[%s2796] sm:$0xff]
        %v2798 = vld [vmem:[%s2796 + $0x8] sm:$0xff]
        %v2799 = vld [vmem:[%s2796 + $0x10] sm:$0xff]
        %v2800 = vld [vmem:[%s2796 + $0x18] sm:$0xff]
        %v2801 = vld [vmem:[%s2796 + $0x20] sm:$0xff]
        %v2802 = vld [vmem:[%s2796 + $0x28] sm:$0xff]
        %v2803 = vld [vmem:[%s2796 + $0x30] sm:$0xff]
        %v2804 = vld [vmem:[%s2796 + $0x38] sm:$0xff]
        %v2806 = vsel %vm2461, %v2786, 0
        %v2809 = vsel %vm2461, %v2787, 0
        %v2812 = vsel %vm2461, %v2788, 0
        %v2815 = vsel %vm2461, %v2789, 0
        %v2818 = vsel %vm2461, %v2790, 0
        %v2821 = vsel %vm2461, %v2791, 0
        %v2824 = vsel %vm2461, %v2792, 0
        %v2827 = vsel %vm2461, %v2793, 0
        %v2830 = vsel %vm2461, %v2794, 0
        %v2833 = vsel %vm2461, %v2795, 0
        %2835 = vmatpush.msra.mxu0 0.0
        %2836 = vmatpush.msra.mxu0 0.0
        %2837 = vmatpush.msra.mxu0 0.0
        %2838 = vmatpush.msra.mxu0 0.0
        %2839 = vmatpush.msra.mxu0 0.0
        %2840 = vmatpush.msra.mxu0 0.0
        %2841 = vmatpush.msra.mxu0 0.0
        %2842 = vmatpush.msra.mxu0 0.0
        %2843 = vmatpush.msra.mxu0 %v2804
        %2844 = vmatpush.msra.mxu0 %v2803
        %2845 = vmatpush.msra.mxu0 %v2802
        %2846 = vmatpush.msra.mxu0 %v2801
        %2847 = vmatpush.msra.mxu0 %v2800
        %2848 = vmatpush.msra.mxu0 %v2799
        %2849 = vmatpush.msra.mxu0 %v2798
        %2850 = vmatpush.msra.mxu0 %v2797
        %2851 = vmatmul.f32.gmra.mxu0 %v2806
        %v2852 = vpop.f32.mrf.mxu0
        %v2853 = vadd.f32 0.0, %v2852
        %2854 = vmatmul.f32.gmra.mxu0 %v2809
        %v2855 = vpop.f32.mrf.mxu0
        %v2856 = vadd.f32 0.0, %v2855
        %2857 = vmatmul.f32.gmra.mxu0 %v2812
        %v2858 = vpop.f32.mrf.mxu0
        %v2859 = vadd.f32 0.0, %v2858
        %2860 = vmatmul.f32.gmra.mxu0 %v2815
        %v2861 = vpop.f32.mrf.mxu0
        %v2862 = vadd.f32 0.0, %v2861
        %2863 = vmatmul.f32.gmra.mxu0 %v2818
        %v2864 = vpop.f32.mrf.mxu0
        %v2865 = vadd.f32 0.0, %v2864
        %2866 = vmatmul.f32.gmra.mxu0 %v2821
        %v2867 = vpop.f32.mrf.mxu0
        %v2868 = vadd.f32 0.0, %v2867
        %2869 = vmatmul.f32.gmra.mxu0 %v2824
        %v2870 = vpop.f32.mrf.mxu0
        %v2871 = vadd.f32 0.0, %v2870
        %2872 = vmatmul.f32.gmra.mxu0 %v2827
        %v2873 = vpop.f32.mrf.mxu0
        %v2874 = vadd.f32 0.0, %v2873
        %2875 = vmatmul.f32.gmra.mxu0 %v2830
        %v2876 = vpop.f32.mrf.mxu0
        %v2877 = vadd.f32 0.0, %v2876
        %2878 = vmatmul.f32.gmra.mxu0 %v2833
        %v2879 = vpop.f32.mrf.mxu0
        %v2880 = vadd.f32 0.0, %v2879
        %2881 = vdwg.mxu0
        %v2882 = vadd.f32 %v2776, %v2853
        %v2883 = vadd.f32 %v2777, %v2856
        %v2884 = vadd.f32 %v2778, %v2859
        %v2885 = vadd.f32 %v2779, %v2862
        %v2886 = vadd.f32 %v2780, %v2865
        %v2887 = vadd.f32 %v2781, %v2868
        %v2888 = vadd.f32 %v2782, %v2871
        %v2889 = vadd.f32 %v2783, %v2874
        %v2890 = vadd.f32 %v2784, %v2877
        %v2891 = vadd.f32 %v2785, %v2880
        %v2892 = vld [vmem:[#allocation3 + $0x14] sm:$0xff]
        %v2893 = vld [vmem:[#allocation3 + $0x1c] sm:$0xff]
        %v2894 = vld [vmem:[#allocation3 + $0x24] sm:$0xff]
        %v2895 = vld [vmem:[#allocation3 + $0x2c] sm:$0xff]
        %v2896 = vld [vmem:[#allocation3 + $0x34] sm:$0xff]
        %v2897 = vld [vmem:[#allocation3 + $0x3c] sm:$0xff]
        %v2898 = vld [vmem:[#allocation3 + $0x44] sm:$0xff]
        %v2899 = vld [vmem:[#allocation3 + $0x4c] sm:$0xff]
        %v2900 = vld [vmem:[#allocation3 + $0x54] sm:$0xff]
        %v2901 = vld [vmem:[#allocation3 + $0x5c] sm:$0xff]
        %s2902 = scalar_lea.vmem %s6, 256
        %v2903 = vld [vmem:[%s2902] sm:$0xff]
        %v2904 = vld [vmem:[%s2902 + $0x8] sm:$0xff]
        %v2905 = vld [vmem:[%s2902 + $0x10] sm:$0xff]
        %v2906 = vld [vmem:[%s2902 + $0x18] sm:$0xff]
        %v2907 = vld [vmem:[%s2902 + $0x20] sm:$0xff]
        %v2908 = vld [vmem:[%s2902 + $0x28] sm:$0xff]
        %v2909 = vld [vmem:[%s2902 + $0x30] sm:$0xff]
        %v2910 = vld [vmem:[%s2902 + $0x38] sm:$0xff]
        %v2912 = vsel %vm2461, %v2892, 0
        %v2915 = vsel %vm2461, %v2893, 0
        %v2918 = vsel %vm2461, %v2894, 0
        %v2921 = vsel %vm2461, %v2895, 0
        %v2924 = vsel %vm2461, %v2896, 0
        %v2927 = vsel %vm2461, %v2897, 0
        %v2930 = vsel %vm2461, %v2898, 0
        %v2933 = vsel %vm2461, %v2899, 0
        %v2936 = vsel %vm2461, %v2900, 0
        %v2939 = vsel %vm2461, %v2901, 0
        %2941 = vmatpush.msra.mxu0 0.0
        %2942 = vmatpush.msra.mxu0 0.0
        %2943 = vmatpush.msra.mxu0 0.0
        %2944 = vmatpush.msra.mxu0 0.0
        %2945 = vmatpush.msra.mxu0 0.0
        %2946 = vmatpush.msra.mxu0 0.0
        %2947 = vmatpush.msra.mxu0 0.0
        %2948 = vmatpush.msra.mxu0 0.0
        %2949 = vmatpush.msra.mxu0 %v2910
        %2950 = vmatpush.msra.mxu0 %v2909
        %2951 = vmatpush.msra.mxu0 %v2908
        %2952 = vmatpush.msra.mxu0 %v2907
        %2953 = vmatpush.msra.mxu0 %v2906
        %2954 = vmatpush.msra.mxu0 %v2905
        %2955 = vmatpush.msra.mxu0 %v2904
        %2956 = vmatpush.msra.mxu0 %v2903
        %2957 = vmatmul.f32.gmra.mxu0 %v2912
        %v2958 = vpop.f32.mrf.mxu0
        %v2959 = vadd.f32 0.0, %v2958
        %2960 = vmatmul.f32.gmra.mxu0 %v2915
        %v2961 = vpop.f32.mrf.mxu0
        %v2962 = vadd.f32 0.0, %v2961
        %2963 = vmatmul.f32.gmra.mxu0 %v2918
        %v2964 = vpop.f32.mrf.mxu0
        %v2965 = vadd.f32 0.0, %v2964
        %2966 = vmatmul.f32.gmra.mxu0 %v2921
        %v2967 = vpop.f32.mrf.mxu0
        %v2968 = vadd.f32 0.0, %v2967
        %2969 = vmatmul.f32.gmra.mxu0 %v2924
        %v2970 = vpop.f32.mrf.mxu0
        %v2971 = vadd.f32 0.0, %v2970
        %2972 = vmatmul.f32.gmra.mxu0 %v2927
        %v2973 = vpop.f32.mrf.mxu0
        %v2974 = vadd.f32 0.0, %v2973
        %2975 = vmatmul.f32.gmra.mxu0 %v2930
        %v2976 = vpop.f32.mrf.mxu0
        %v2977 = vadd.f32 0.0, %v2976
        %2978 = vmatmul.f32.gmra.mxu0 %v2933
        %v2979 = vpop.f32.mrf.mxu0
        %v2980 = vadd.f32 0.0, %v2979
        %2981 = vmatmul.f32.gmra.mxu0 %v2936
        %v2982 = vpop.f32.mrf.mxu0
        %v2983 = vadd.f32 0.0, %v2982
        %2984 = vmatmul.f32.gmra.mxu0 %v2939
        %v2985 = vpop.f32.mrf.mxu0
        %v2986 = vadd.f32 0.0, %v2985
        %2987 = vdwg.mxu0
        %v2988 = vadd.f32 %v2882, %v2959
        %v2989 = vadd.f32 %v2883, %v2962
        %v2990 = vadd.f32 %v2884, %v2965
        %v2991 = vadd.f32 %v2885, %v2968
        %v2992 = vadd.f32 %v2886, %v2971
        %v2993 = vadd.f32 %v2887, %v2974
        %v2994 = vadd.f32 %v2888, %v2977
        %v2995 = vadd.f32 %v2889, %v2980
        %v2996 = vadd.f32 %v2890, %v2983
        %v2997 = vadd.f32 %v2891, %v2986
        %v2998 = vld [vmem:[#allocation3 + $0x15] sm:$0xff]
        %v2999 = vld [vmem:[#allocation3 + $0x1d] sm:$0xff]
        %v3000 = vld [vmem:[#allocation3 + $0x25] sm:$0xff]
        %v3001 = vld [vmem:[#allocation3 + $0x2d] sm:$0xff]
        %v3002 = vld [vmem:[#allocation3 + $0x35] sm:$0xff]
        %v3003 = vld [vmem:[#allocation3 + $0x3d] sm:$0xff]
        %v3004 = vld [vmem:[#allocation3 + $0x45] sm:$0xff]
        %v3005 = vld [vmem:[#allocation3 + $0x4d] sm:$0xff]
        %v3006 = vld [vmem:[#allocation3 + $0x55] sm:$0xff]
        %v3007 = vld [vmem:[#allocation3 + $0x5d] sm:$0xff]
        %s3008 = scalar_lea.vmem %s6, 320
        %v3009 = vld [vmem:[%s3008] sm:$0xff]
        %v3010 = vld [vmem:[%s3008 + $0x8] sm:$0xff]
        %v3011 = vld [vmem:[%s3008 + $0x10] sm:$0xff]
        %v3012 = vld [vmem:[%s3008 + $0x18] sm:$0xff]
        %v3013 = vld [vmem:[%s3008 + $0x20] sm:$0xff]
        %v3014 = vld [vmem:[%s3008 + $0x28] sm:$0xff]
        %v3015 = vld [vmem:[%s3008 + $0x30] sm:$0xff]
        %v3016 = vld [vmem:[%s3008 + $0x38] sm:$0xff]
        %v3018 = vsel %vm2461, %v2998, 0
        %v3021 = vsel %vm2461, %v2999, 0
        %v3024 = vsel %vm2461, %v3000, 0
        %v3027 = vsel %vm2461, %v3001, 0
        %v3030 = vsel %vm2461, %v3002, 0
        %v3033 = vsel %vm2461, %v3003, 0
        %v3036 = vsel %vm2461, %v3004, 0
        %v3039 = vsel %vm2461, %v3005, 0
        %v3042 = vsel %vm2461, %v3006, 0
        %v3045 = vsel %vm2461, %v3007, 0
        %3047 = vmatpush.msra.mxu0 0.0
        %3048 = vmatpush.msra.mxu0 0.0
        %3049 = vmatpush.msra.mxu0 0.0
        %3050 = vmatpush.msra.mxu0 0.0
        %3051 = vmatpush.msra.mxu0 0.0
        %3052 = vmatpush.msra.mxu0 0.0
        %3053 = vmatpush.msra.mxu0 0.0
        %3054 = vmatpush.msra.mxu0 0.0
        %3055 = vmatpush.msra.mxu0 %v3016
        %3056 = vmatpush.msra.mxu0 %v3015
        %3057 = vmatpush.msra.mxu0 %v3014
        %3058 = vmatpush.msra.mxu0 %v3013
        %3059 = vmatpush.msra.mxu0 %v3012
        %3060 = vmatpush.msra.mxu0 %v3011
        %3061 = vmatpush.msra.mxu0 %v3010
        %3062 = vmatpush.msra.mxu0 %v3009
        %3063 = vmatmul.f32.gmra.mxu0 %v3018
        %v3064 = vpop.f32.mrf.mxu0
        %v3065 = vadd.f32 0.0, %v3064
        %3066 = vmatmul.f32.gmra.mxu0 %v3021
        %v3067 = vpop.f32.mrf.mxu0
        %v3068 = vadd.f32 0.0, %v3067
        %3069 = vmatmul.f32.gmra.mxu0 %v3024
        %v3070 = vpop.f32.mrf.mxu0
        %v3071 = vadd.f32 0.0, %v3070
        %3072 = vmatmul.f32.gmra.mxu0 %v3027
        %v3073 = vpop.f32.mrf.mxu0
        %v3074 = vadd.f32 0.0, %v3073
        %3075 = vmatmul.f32.gmra.mxu0 %v3030
        %v3076 = vpop.f32.mrf.mxu0
        %v3077 = vadd.f32 0.0, %v3076
        %3078 = vmatmul.f32.gmra.mxu0 %v3033
        %v3079 = vpop.f32.mrf.mxu0
        %v3080 = vadd.f32 0.0, %v3079
        %3081 = vmatmul.f32.gmra.mxu0 %v3036
        %v3082 = vpop.f32.mrf.mxu0
        %v3083 = vadd.f32 0.0, %v3082
        %3084 = vmatmul.f32.gmra.mxu0 %v3039
        %v3085 = vpop.f32.mrf.mxu0
        %v3086 = vadd.f32 0.0, %v3085
        %3087 = vmatmul.f32.gmra.mxu0 %v3042
        %v3088 = vpop.f32.mrf.mxu0
        %v3089 = vadd.f32 0.0, %v3088
        %3090 = vmatmul.f32.gmra.mxu0 %v3045
        %v3091 = vpop.f32.mrf.mxu0
        %v3092 = vadd.f32 0.0, %v3091
        %3093 = vdwg.mxu0
        %v3094 = vadd.f32 %v2988, %v3065
        %v3095 = vadd.f32 %v2989, %v3068
        %v3096 = vadd.f32 %v2990, %v3071
        %v3097 = vadd.f32 %v2991, %v3074
        %v3098 = vadd.f32 %v2992, %v3077
        %v3099 = vadd.f32 %v2993, %v3080
        %v3100 = vadd.f32 %v2994, %v3083
        %v3101 = vadd.f32 %v2995, %v3086
        %v3102 = vadd.f32 %v2996, %v3089
        %v3103 = vadd.f32 %v2997, %v3092
        %v3104 = vld [vmem:[#allocation3 + $0x1d] sm:$0xff]
        %v3105 = vld [vmem:[#allocation3 + $0x25] sm:$0xff]
        %v3106 = vld [vmem:[#allocation3 + $0x2d] sm:$0xff]
        %v3107 = vld [vmem:[#allocation3 + $0x35] sm:$0xff]
        %v3108 = vld [vmem:[#allocation3 + $0x3d] sm:$0xff]
        %v3109 = vld [vmem:[#allocation3 + $0x45] sm:$0xff]
        %v3110 = vld [vmem:[#allocation3 + $0x4d] sm:$0xff]
        %v3111 = vld [vmem:[#allocation3 + $0x55] sm:$0xff]
        %v3112 = vld [vmem:[#allocation3 + $0x5d] sm:$0xff]
        %v3113 = vld [vmem:[#allocation3 + $0x65] sm:$0xff]
        %s3114 = scalar_lea.vmem %s6, 384
        %v3115 = vld [vmem:[%s3114] sm:$0xff]
        %v3116 = vld [vmem:[%s3114 + $0x8] sm:$0xff]
        %v3117 = vld [vmem:[%s3114 + $0x10] sm:$0xff]
        %v3118 = vld [vmem:[%s3114 + $0x18] sm:$0xff]
        %v3119 = vld [vmem:[%s3114 + $0x20] sm:$0xff]
        %v3120 = vld [vmem:[%s3114 + $0x28] sm:$0xff]
        %v3121 = vld [vmem:[%s3114 + $0x30] sm:$0xff]
        %v3122 = vld [vmem:[%s3114 + $0x38] sm:$0xff]
        %v3124 = vsel %vm2461, %v3104, 0
        %v3127 = vsel %vm2461, %v3105, 0
        %v3130 = vsel %vm2461, %v3106, 0
        %v3133 = vsel %vm2461, %v3107, 0
        %v3136 = vsel %vm2461, %v3108, 0
        %v3139 = vsel %vm2461, %v3109, 0
        %v3142 = vsel %vm2461, %v3110, 0
        %v3145 = vsel %vm2461, %v3111, 0
        %v3148 = vsel %vm2461, %v3112, 0
        %v3151 = vsel %vm2461, %v3113, 0
        %3153 = vmatpush.msra.mxu0 0.0
        %3154 = vmatpush.msra.mxu0 0.0
        %3155 = vmatpush.msra.mxu0 0.0
        %3156 = vmatpush.msra.mxu0 0.0
        %3157 = vmatpush.msra.mxu0 0.0
        %3158 = vmatpush.msra.mxu0 0.0
        %3159 = vmatpush.msra.mxu0 0.0
        %3160 = vmatpush.msra.mxu0 0.0
        %3161 = vmatpush.msra.mxu0 %v3122
        %3162 = vmatpush.msra.mxu0 %v3121
        %3163 = vmatpush.msra.mxu0 %v3120
        %3164 = vmatpush.msra.mxu0 %v3119
        %3165 = vmatpush.msra.mxu0 %v3118
        %3166 = vmatpush.msra.mxu0 %v3117
        %3167 = vmatpush.msra.mxu0 %v3116
        %3168 = vmatpush.msra.mxu0 %v3115
        %3169 = vmatmul.f32.gmra.mxu0 %v3124
        %v3170 = vpop.f32.mrf.mxu0
        %v3171 = vadd.f32 0.0, %v3170
        %3172 = vmatmul.f32.gmra.mxu0 %v3127
        %v3173 = vpop.f32.mrf.mxu0
        %v3174 = vadd.f32 0.0, %v3173
        %3175 = vmatmul.f32.gmra.mxu0 %v3130
        %v3176 = vpop.f32.mrf.mxu0
        %v3177 = vadd.f32 0.0, %v3176
        %3178 = vmatmul.f32.gmra.mxu0 %v3133
        %v3179 = vpop.f32.mrf.mxu0
        %v3180 = vadd.f32 0.0, %v3179
        %3181 = vmatmul.f32.gmra.mxu0 %v3136
        %v3182 = vpop.f32.mrf.mxu0
        %v3183 = vadd.f32 0.0, %v3182
        %3184 = vmatmul.f32.gmra.mxu0 %v3139
        %v3185 = vpop.f32.mrf.mxu0
        %v3186 = vadd.f32 0.0, %v3185
        %3187 = vmatmul.f32.gmra.mxu0 %v3142
        %v3188 = vpop.f32.mrf.mxu0
        %v3189 = vadd.f32 0.0, %v3188
        %3190 = vmatmul.f32.gmra.mxu0 %v3145
        %v3191 = vpop.f32.mrf.mxu0
        %v3192 = vadd.f32 0.0, %v3191
        %3193 = vmatmul.f32.gmra.mxu0 %v3148
        %v3194 = vpop.f32.mrf.mxu0
        %v3195 = vadd.f32 0.0, %v3194
        %3196 = vmatmul.f32.gmra.mxu0 %v3151
        %v3197 = vpop.f32.mrf.mxu0
        %v3198 = vadd.f32 0.0, %v3197
        %3199 = vdwg.mxu0
        %v3200 = vadd.f32 %v3094, %v3171
        %v3201 = vadd.f32 %v3095, %v3174
        %v3202 = vadd.f32 %v3096, %v3177
        %v3203 = vadd.f32 %v3097, %v3180
        %v3204 = vadd.f32 %v3098, %v3183
        %v3205 = vadd.f32 %v3099, %v3186
        %v3206 = vadd.f32 %v3100, %v3189
        %v3207 = vadd.f32 %v3101, %v3192
        %v3208 = vadd.f32 %v3102, %v3195
        %v3209 = vadd.f32 %v3103, %v3198
        %v3210 = vld [vmem:[#allocation3 + $0x1e] sm:$0xff]
        %v3211 = vld [vmem:[#allocation3 + $0x26] sm:$0xff]
        %v3212 = vld [vmem:[#allocation3 + $0x2e] sm:$0xff]
        %v3213 = vld [vmem:[#allocation3 + $0x36] sm:$0xff]
        %v3214 = vld [vmem:[#allocation3 + $0x3e] sm:$0xff]
        %v3215 = vld [vmem:[#allocation3 + $0x46] sm:$0xff]
        %v3216 = vld [vmem:[#allocation3 + $0x4e] sm:$0xff]
        %v3217 = vld [vmem:[#allocation3 + $0x56] sm:$0xff]
        %v3218 = vld [vmem:[#allocation3 + $0x5e] sm:$0xff]
        %v3219 = vld [vmem:[#allocation3 + $0x66] sm:$0xff]
        %s3220 = scalar_lea.vmem %s6, 448
        %v3221 = vld [vmem:[%s3220] sm:$0xff]
        %v3222 = vld [vmem:[%s3220 + $0x8] sm:$0xff]
        %v3223 = vld [vmem:[%s3220 + $0x10] sm:$0xff]
        %v3224 = vld [vmem:[%s3220 + $0x18] sm:$0xff]
        %v3225 = vld [vmem:[%s3220 + $0x20] sm:$0xff]
        %v3226 = vld [vmem:[%s3220 + $0x28] sm:$0xff]
        %v3227 = vld [vmem:[%s3220 + $0x30] sm:$0xff]
        %v3228 = vld [vmem:[%s3220 + $0x38] sm:$0xff]
        %v3230 = vsel %vm2461, %v3210, 0
        %v3233 = vsel %vm2461, %v3211, 0
        %v3236 = vsel %vm2461, %v3212, 0
        %v3239 = vsel %vm2461, %v3213, 0
        %v3242 = vsel %vm2461, %v3214, 0
        %v3245 = vsel %vm2461, %v3215, 0
        %v3248 = vsel %vm2461, %v3216, 0
        %v3251 = vsel %vm2461, %v3217, 0
        %v3254 = vsel %vm2461, %v3218, 0
        %v3257 = vsel %vm2461, %v3219, 0
        %3259 = vmatpush.msra.mxu0 0.0
        %3260 = vmatpush.msra.mxu0 0.0
        %3261 = vmatpush.msra.mxu0 0.0
        %3262 = vmatpush.msra.mxu0 0.0
        %3263 = vmatpush.msra.mxu0 0.0
        %3264 = vmatpush.msra.mxu0 0.0
        %3265 = vmatpush.msra.mxu0 0.0
        %3266 = vmatpush.msra.mxu0 0.0
        %3267 = vmatpush.msra.mxu0 %v3228
        %3268 = vmatpush.msra.mxu0 %v3227
        %3269 = vmatpush.msra.mxu0 %v3226
        %3270 = vmatpush.msra.mxu0 %v3225
        %3271 = vmatpush.msra.mxu0 %v3224
        %3272 = vmatpush.msra.mxu0 %v3223
        %3273 = vmatpush.msra.mxu0 %v3222
        %3274 = vmatpush.msra.mxu0 %v3221
        %3275 = vmatmul.f32.gmra.mxu0 %v3230
        %v3276 = vpop.f32.mrf.mxu0
        %v3277 = vadd.f32 0.0, %v3276
        %3278 = vmatmul.f32.gmra.mxu0 %v3233
        %v3279 = vpop.f32.mrf.mxu0
        %v3280 = vadd.f32 0.0, %v3279
        %3281 = vmatmul.f32.gmra.mxu0 %v3236
        %v3282 = vpop.f32.mrf.mxu0
        %v3283 = vadd.f32 0.0, %v3282
        %3284 = vmatmul.f32.gmra.mxu0 %v3239
        %v3285 = vpop.f32.mrf.mxu0
        %v3286 = vadd.f32 0.0, %v3285
        %3287 = vmatmul.f32.gmra.mxu0 %v3242
        %v3288 = vpop.f32.mrf.mxu0
        %v3289 = vadd.f32 0.0, %v3288
        %3290 = vmatmul.f32.gmra.mxu0 %v3245
        %v3291 = vpop.f32.mrf.mxu0
        %v3292 = vadd.f32 0.0, %v3291
        %3293 = vmatmul.f32.gmra.mxu0 %v3248
        %v3294 = vpop.f32.mrf.mxu0
        %v3295 = vadd.f32 0.0, %v3294
        %3296 = vmatmul.f32.gmra.mxu0 %v3251
        %v3297 = vpop.f32.mrf.mxu0
        %v3298 = vadd.f32 0.0, %v3297
        %3299 = vmatmul.f32.gmra.mxu0 %v3254
        %v3300 = vpop.f32.mrf.mxu0
        %v3301 = vadd.f32 0.0, %v3300
        %3302 = vmatmul.f32.gmra.mxu0 %v3257
        %v3303 = vpop.f32.mrf.mxu0
        %v3304 = vadd.f32 0.0, %v3303
        %3305 = vdwg.mxu0
        %v3306 = vadd.f32 %v3200, %v3277
        %v3307 = vadd.f32 %v3201, %v3280
        %v3308 = vadd.f32 %v3202, %v3283
        %v3309 = vadd.f32 %v3203, %v3286
        %v3310 = vadd.f32 %v3204, %v3289
        %v3311 = vadd.f32 %v3205, %v3292
        %v3312 = vadd.f32 %v3206, %v3295
        %v3313 = vadd.f32 %v3207, %v3298
        %v3314 = vadd.f32 %v3208, %v3301
        %v3315 = vadd.f32 %v3209, %v3304
        %v3316 = vld [vmem:[#allocation3 + $0x1f] sm:$0xff]
        %v3317 = vld [vmem:[#allocation3 + $0x27] sm:$0xff]
        %v3318 = vld [vmem:[#allocation3 + $0x2f] sm:$0xff]
        %v3319 = vld [vmem:[#allocation3 + $0x37] sm:$0xff]
        %v3320 = vld [vmem:[#allocation3 + $0x3f] sm:$0xff]
        %v3321 = vld [vmem:[#allocation3 + $0x47] sm:$0xff]
        %v3322 = vld [vmem:[#allocation3 + $0x4f] sm:$0xff]
        %v3323 = vld [vmem:[#allocation3 + $0x57] sm:$0xff]
        %v3324 = vld [vmem:[#allocation3 + $0x5f] sm:$0xff]
        %v3325 = vld [vmem:[#allocation3 + $0x67] sm:$0xff]
        %s3326 = scalar_lea.vmem %s6, 512
        %v3327 = vld [vmem:[%s3326] sm:$0xff]
        %v3328 = vld [vmem:[%s3326 + $0x8] sm:$0xff]
        %v3329 = vld [vmem:[%s3326 + $0x10] sm:$0xff]
        %v3330 = vld [vmem:[%s3326 + $0x18] sm:$0xff]
        %v3331 = vld [vmem:[%s3326 + $0x20] sm:$0xff]
        %v3332 = vld [vmem:[%s3326 + $0x28] sm:$0xff]
        %v3333 = vld [vmem:[%s3326 + $0x30] sm:$0xff]
        %v3334 = vld [vmem:[%s3326 + $0x38] sm:$0xff]
        %v3336 = vsel %vm2461, %v3316, 0
        %v3339 = vsel %vm2461, %v3317, 0
        %v3342 = vsel %vm2461, %v3318, 0
        %v3345 = vsel %vm2461, %v3319, 0
        %v3348 = vsel %vm2461, %v3320, 0
        %v3351 = vsel %vm2461, %v3321, 0
        %v3354 = vsel %vm2461, %v3322, 0
        %v3357 = vsel %vm2461, %v3323, 0
        %v3360 = vsel %vm2461, %v3324, 0
        %v3363 = vsel %vm2461, %v3325, 0
        %3365 = vmatpush.msra.mxu0 0.0
        %3366 = vmatpush.msra.mxu0 0.0
        %3367 = vmatpush.msra.mxu0 0.0
        %3368 = vmatpush.msra.mxu0 0.0
        %3369 = vmatpush.msra.mxu0 0.0
        %3370 = vmatpush.msra.mxu0 0.0
        %3371 = vmatpush.msra.mxu0 0.0
        %3372 = vmatpush.msra.mxu0 0.0
        %3373 = vmatpush.msra.mxu0 %v3334
        %3374 = vmatpush.msra.mxu0 %v3333
        %3375 = vmatpush.msra.mxu0 %v3332
        %3376 = vmatpush.msra.mxu0 %v3331
        %3377 = vmatpush.msra.mxu0 %v3330
        %3378 = vmatpush.msra.mxu0 %v3329
        %3379 = vmatpush.msra.mxu0 %v3328
        %3380 = vmatpush.msra.mxu0 %v3327
        %3381 = vmatmul.f32.gmra.mxu0 %v3336
        %v3382 = vpop.f32.mrf.mxu0
        %v3383 = vadd.f32 0.0, %v3382
        %3384 = vmatmul.f32.gmra.mxu0 %v3339
        %v3385 = vpop.f32.mrf.mxu0
        %v3386 = vadd.f32 0.0, %v3385
        %3387 = vmatmul.f32.gmra.mxu0 %v3342
        %v3388 = vpop.f32.mrf.mxu0
        %v3389 = vadd.f32 0.0, %v3388
        %3390 = vmatmul.f32.gmra.mxu0 %v3345
        %v3391 = vpop.f32.mrf.mxu0
        %v3392 = vadd.f32 0.0, %v3391
        %3393 = vmatmul.f32.gmra.mxu0 %v3348
        %v3394 = vpop.f32.mrf.mxu0
        %v3395 = vadd.f32 0.0, %v3394
        %3396 = vmatmul.f32.gmra.mxu0 %v3351
        %v3397 = vpop.f32.mrf.mxu0
        %v3398 = vadd.f32 0.0, %v3397
        %3399 = vmatmul.f32.gmra.mxu0 %v3354
        %v3400 = vpop.f32.mrf.mxu0
        %v3401 = vadd.f32 0.0, %v3400
        %3402 = vmatmul.f32.gmra.mxu0 %v3357
        %v3403 = vpop.f32.mrf.mxu0
        %v3404 = vadd.f32 0.0, %v3403
        %3405 = vmatmul.f32.gmra.mxu0 %v3360
        %v3406 = vpop.f32.mrf.mxu0
        %v3407 = vadd.f32 0.0, %v3406
        %3408 = vmatmul.f32.gmra.mxu0 %v3363
        %v3409 = vpop.f32.mrf.mxu0
        %v3410 = vadd.f32 0.0, %v3409
        %3411 = vdwg.mxu0
        %v3412 = vadd.f32 %v3306, %v3383
        %v3413 = vadd.f32 %v3307, %v3386
        %v3414 = vadd.f32 %v3308, %v3389
        %v3415 = vadd.f32 %v3309, %v3392
        %v3416 = vadd.f32 %v3310, %v3395
        %v3417 = vadd.f32 %v3311, %v3398
        %v3418 = vadd.f32 %v3312, %v3401
        %v3419 = vadd.f32 %v3313, %v3404
        %v3420 = vadd.f32 %v3314, %v3407
        %v3421 = vadd.f32 %v3315, %v3410
        %v3422 = vld [vmem:[%s7] sm:$0x1]
        %v3424 = vperm.slane %v3422, 0
        %v3426 = vadd.f32 %v3412, %v3424
        %v3427 = vadd.f32 %v3413, %v3424
        %v3428 = vadd.f32 %v3414, %v3424
        %v3429 = vadd.f32 %v3415, %v3424
        %v3430 = vadd.f32 %v3416, %v3424
        %v3431 = vadd.f32 %v3417, %v3424
        %v3432 = vadd.f32 %v3418, %v3424
        %v3433 = vadd.f32 %v3419, %v3424
        %v3434 = vadd.f32 %v3420, %v3424
        %v3435 = vadd.f32 %v3421, %v3424
        %v3436 = vmax.f32 %v3426, 0.0
        %v3437 = vmax.f32 %v3427, 0.0
        %v3438 = vmax.f32 %v3428, 0.0
        %v3439 = vmax.f32 %v3429, 0.0
        %v3440 = vmax.f32 %v3430, 0.0
        %v3441 = vmax.f32 %v3431, 0.0
        %v3442 = vmax.f32 %v3432, 0.0
        %v3443 = vmax.f32 %v3433, 0.0
        %v3444 = vmax.f32 %v3434, 0.0
        %v3445 = vmax.f32 %v3435, 0.0
        %v3446 = vld [vmem:[%s8] sm:$0xff]
        %v3447 = vld [vmem:[%s8 + $0x8] sm:$0xff]
        %v3448 = vld [vmem:[%s8 + $0x10] sm:$0xff]
        %v3449 = vld [vmem:[%s8 + $0x18] sm:$0xff]
        %v3450 = vld [vmem:[%s8 + $0x20] sm:$0xff]
        %v3451 = vld [vmem:[%s8 + $0x28] sm:$0xff]
        %v3452 = vld [vmem:[%s8 + $0x30] sm:$0xff]
        %v3453 = vld [vmem:[%s8 + $0x38] sm:$0xff]
        %v3454 = vld [vmem:[%s8 + $0x40] sm:$0xff]
        %v3455 = vld [vmem:[%s8 + $0x48] sm:$0xff]
        %v3456 = vld [vmem:[%s8 + $0x50] sm:$0xff]
        %v3457 = vld [vmem:[%s8 + $0x58] sm:$0xff]
        %v3458 = vld [vmem:[%s8 + $0x60] sm:$0xff]
        %v3459 = vld [vmem:[%s8 + $0x68] sm:$0xff]
        %v3460 = vld [vmem:[%s8 + $0x70] sm:$0xff]
        %v3461 = vld [vmem:[%s8 + $0x78] sm:$0xff]
        %v3462 = vld [vmem:[%s9] sm:$0x1]
        %v3464 = vperm.slane %v3462, 0
        %3466 = vmatpush.msra.mxu0 %v3461
        %3467 = vmatpush.msra.mxu0 %v3460
        %3468 = vmatpush.msra.mxu0 %v3459
        %3469 = vmatpush.msra.mxu0 %v3458
        %3470 = vmatpush.msra.mxu0 %v3457
        %3471 = vmatpush.msra.mxu0 %v3456
        %3472 = vmatpush.msra.mxu0 %v3455
        %3473 = vmatpush.msra.mxu0 %v3454
        %3474 = vmatpush.msra.mxu0 %v3453
        %3475 = vmatpush.msra.mxu0 %v3452
        %3476 = vmatpush.msra.mxu0 %v3451
        %3477 = vmatpush.msra.mxu0 %v3450
        %3478 = vmatpush.msra.mxu0 %v3449
        %3479 = vmatpush.msra.mxu0 %v3448
        %3480 = vmatpush.msra.mxu0 %v3447
        %3481 = vmatpush.msra.mxu0 %v3446
        %3482 = vmatmul.f32.gmra.mxu0 %v3436
        %v3483 = vpop.f32.mrf.mxu0
        %v3484 = vadd.f32 %v3464, %v3483
        %3485 = vmatmul.f32.gmra.mxu0 %v3437
        %v3486 = vpop.f32.mrf.mxu0
        %v3487 = vadd.f32 %v3464, %v3486
        %3488 = vmatmul.f32.gmra.mxu0 %v3438
        %v3489 = vpop.f32.mrf.mxu0
        %v3490 = vadd.f32 %v3464, %v3489
        %3491 = vmatmul.f32.gmra.mxu0 %v3439
        %v3492 = vpop.f32.mrf.mxu0
        %v3493 = vadd.f32 %v3464, %v3492
        %3494 = vmatmul.f32.gmra.mxu0 %v3440
        %v3495 = vpop.f32.mrf.mxu0
        %v3496 = vadd.f32 %v3464, %v3495
        %3497 = vmatmul.f32.gmra.mxu0 %v3441
        %v3498 = vpop.f32.mrf.mxu0
        %v3499 = vadd.f32 %v3464, %v3498
        %3500 = vmatmul.f32.gmra.mxu0 %v3442
        %v3501 = vpop.f32.mrf.mxu0
        %v3502 = vadd.f32 %v3464, %v3501
        %3503 = vmatmul.f32.gmra.mxu0 %v3443
        %v3504 = vpop.f32.mrf.mxu0
        %v3505 = vadd.f32 %v3464, %v3504
        %3506 = vmatmul.f32.gmra.mxu0 %v3444
        %v3507 = vpop.f32.mrf.mxu0
        %v3508 = vadd.f32 %v3464, %v3507
        %3509 = vmatmul.f32.gmra.mxu0 %v3445
        %v3510 = vpop.f32.mrf.mxu0
        %v3511 = vadd.f32 %v3464, %v3510
        %3512 = vdwg.mxu0
        %v3513 = vmax.f32 %v3484, 0.0
        %v3514 = vmax.f32 %v3487, 0.0
        %v3515 = vmax.f32 %v3490, 0.0
        %v3516 = vmax.f32 %v3493, 0.0
        %v3517 = vmax.f32 %v3496, 0.0
        %v3518 = vmax.f32 %v3499, 0.0
        %v3519 = vmax.f32 %v3502, 0.0
        %v3520 = vmax.f32 %v3505, 0.0
        %v3521 = vmax.f32 %v3508, 0.0
        %v3522 = vmax.f32 %v3511, 0.0
        %v3523 = vld [vmem:[%s10] sm:$0xff]
        %v3524 = vld [vmem:[%s10 + $0x8] sm:$0xff]
        %v3525 = vld [vmem:[%s10 + $0x10] sm:$0xff]
        %v3526 = vld [vmem:[%s10 + $0x18] sm:$0xff]
        %v3527 = vld [vmem:[%s10 + $0x20] sm:$0xff]
        %v3528 = vld [vmem:[%s10 + $0x28] sm:$0xff]
        %v3529 = vld [vmem:[%s10 + $0x30] sm:$0xff]
        %v3530 = vld [vmem:[%s10 + $0x38] sm:$0xff]
        %v3531 = vld [vmem:[%s10 + $0x40] sm:$0xff]
        %v3532 = vld [vmem:[%s10 + $0x48] sm:$0xff]
        %3534 = vset.pattern.permute.xlu0 0
        %3535 = vperm.xlu0 %3534, %v3513
        %v3536 = vpop.permute.xlu0 %3535
        %3539 = vset.pattern.permute.xlu0 0
        %3540 = vperm.xlu0 %3539, %v3514
        %v3541 = vpop.permute.xlu0 %3540
        %3544 = vset.pattern.permute.xlu0 0
        %3545 = vperm.xlu0 %3544, %v3515
        %v3546 = vpop.permute.xlu0 %3545
        %3549 = vset.pattern.permute.xlu0 0
        %3550 = vperm.xlu0 %3549, %v3516
        %v3551 = vpop.permute.xlu0 %3550
        %3554 = vset.pattern.permute.xlu0 0
        %3555 = vperm.xlu0 %3554, %v3517
        %v3556 = vpop.permute.xlu0 %3555
        %3559 = vset.pattern.permute.xlu0 0
        %3560 = vperm.xlu0 %3559, %v3518
        %v3561 = vpop.permute.xlu0 %3560
        %3564 = vset.pattern.permute.xlu0 0
        %3565 = vperm.xlu0 %3564, %v3519
        %v3566 = vpop.permute.xlu0 %3565
        %3569 = vset.pattern.permute.xlu0 0
        %3570 = vperm.xlu0 %3569, %v3520
        %v3571 = vpop.permute.xlu0 %3570
        %3574 = vset.pattern.permute.xlu0 0
        %3575 = vperm.xlu0 %3574, %v3521
        %v3576 = vpop.permute.xlu0 %3575
        %3579 = vset.pattern.permute.xlu0 0
        %3580 = vperm.xlu0 %3579, %v3522
        %v3581 = vpop.permute.xlu0 %3580
        %v3583 = vmul.f32 %v3536, %v3523
        %v3584 = vmul.f32 %v3541, %v3524
        %v3585 = vmul.f32 %v3546, %v3525
        %v3586 = vmul.f32 %v3551, %v3526
        %v3587 = vmul.f32 %v3556, %v3527
        %v3588 = vmul.f32 %v3561, %v3528
        %v3589 = vmul.f32 %v3566, %v3529
        %v3590 = vmul.f32 %v3571, %v3530
        %v3591 = vmul.f32 %v3576, %v3531
        %v3592 = vmul.f32 %v3581, %v3532
        %s3593 = scalar_lea.vmem %s10, 80
        %v3594 = vld [vmem:[%s3593] sm:$0xff]
        %v3595 = vld [vmem:[%s3593 + $0x8] sm:$0xff]
        %v3596 = vld [vmem:[%s3593 + $0x10] sm:$0xff]
        %v3597 = vld [vmem:[%s3593 + $0x18] sm:$0xff]
        %v3598 = vld [vmem:[%s3593 + $0x20] sm:$0xff]
        %v3599 = vld [vmem:[%s3593 + $0x28] sm:$0xff]
        %v3600 = vld [vmem:[%s3593 + $0x30] sm:$0xff]
        %v3601 = vld [vmem:[%s3593 + $0x38] sm:$0xff]
        %v3602 = vld [vmem:[%s3593 + $0x40] sm:$0xff]
        %v3603 = vld [vmem:[%s3593 + $0x48] sm:$0xff]
        %3604 = vset.pattern.permute.xlu0 1
        %3605 = vperm.xlu0 %3604, %v3513
        %v3606 = vpop.permute.xlu0 %3605
        %3608 = vset.pattern.permute.xlu0 1
        %3609 = vperm.xlu0 %3608, %v3514
        %v3610 = vpop.permute.xlu0 %3609
        %3612 = vset.pattern.permute.xlu0 1
        %3613 = vperm.xlu0 %3612, %v3515
        %v3614 = vpop.permute.xlu0 %3613
        %3616 = vset.pattern.permute.xlu0 1
        %3617 = vperm.xlu0 %3616, %v3516
        %v3618 = vpop.permute.xlu0 %3617
        %3620 = vset.pattern.permute.xlu0 1
        %3621 = vperm.xlu0 %3620, %v3517
        %v3622 = vpop.permute.xlu0 %3621
        %3624 = vset.pattern.permute.xlu0 1
        %3625 = vperm.xlu0 %3624, %v3518
        %v3626 = vpop.permute.xlu0 %3625
        %3628 = vset.pattern.permute.xlu0 1
        %3629 = vperm.xlu0 %3628, %v3519
        %v3630 = vpop.permute.xlu0 %3629
        %3632 = vset.pattern.permute.xlu0 1
        %3633 = vperm.xlu0 %3632, %v3520
        %v3634 = vpop.permute.xlu0 %3633
        %3636 = vset.pattern.permute.xlu0 1
        %3637 = vperm.xlu0 %3636, %v3521
        %v3638 = vpop.permute.xlu0 %3637
        %3640 = vset.pattern.permute.xlu0 1
        %3641 = vperm.xlu0 %3640, %v3522
        %v3642 = vpop.permute.xlu0 %3641
        %v3644 = vmul.f32 %v3606, %v3594
        %v3645 = vmul.f32 %v3610, %v3595
        %v3646 = vmul.f32 %v3614, %v3596
        %v3647 = vmul.f32 %v3618, %v3597
        %v3648 = vmul.f32 %v3622, %v3598
        %v3649 = vmul.f32 %v3626, %v3599
        %v3650 = vmul.f32 %v3630, %v3600
        %v3651 = vmul.f32 %v3634, %v3601
        %v3652 = vmul.f32 %v3638, %v3602
        %v3653 = vmul.f32 %v3642, %v3603
        %v3654 = vadd.f32 %v3583, %v3644
        %v3655 = vadd.f32 %v3584, %v3645
        %v3656 = vadd.f32 %v3585, %v3646
        %v3657 = vadd.f32 %v3586, %v3647
        %v3658 = vadd.f32 %v3587, %v3648
        %v3659 = vadd.f32 %v3588, %v3649
        %v3660 = vadd.f32 %v3589, %v3650
        %v3661 = vadd.f32 %v3590, %v3651
        %v3662 = vadd.f32 %v3591, %v3652
        %v3663 = vadd.f32 %v3592, %v3653
        %s3664 = scalar_lea.vmem %s10, 160
        %v3665 = vld [vmem:[%s3664] sm:$0xff]
        %v3666 = vld [vmem:[%s3664 + $0x8] sm:$0xff]
        %v3667 = vld [vmem:[%s3664 + $0x10] sm:$0xff]
        %v3668 = vld [vmem:[%s3664 + $0x18] sm:$0xff]
        %v3669 = vld [vmem:[%s3664 + $0x20] sm:$0xff]
        %v3670 = vld [vmem:[%s3664 + $0x28] sm:$0xff]
        %v3671 = vld [vmem:[%s3664 + $0x30] sm:$0xff]
        %v3672 = vld [vmem:[%s3664 + $0x38] sm:$0xff]
        %v3673 = vld [vmem:[%s3664 + $0x40] sm:$0xff]
        %v3674 = vld [vmem:[%s3664 + $0x48] sm:$0xff]
        %3675 = vset.pattern.permute.xlu0 2
        %3676 = vperm.xlu0 %3675, %v3513
        %v3677 = vpop.permute.xlu0 %3676
        %3679 = vset.pattern.permute.xlu0 2
        %3680 = vperm.xlu0 %3679, %v3514
        %v3681 = vpop.permute.xlu0 %3680
        %3683 = vset.pattern.permute.xlu0 2
        %3684 = vperm.xlu0 %3683, %v3515
        %v3685 = vpop.permute.xlu0 %3684
        %3687 = vset.pattern.permute.xlu0 2
        %3688 = vperm.xlu0 %3687, %v3516
        %v3689 = vpop.permute.xlu0 %3688
        %3691 = vset.pattern.permute.xlu0 2
        %3692 = vperm.xlu0 %3691, %v3517
        %v3693 = vpop.permute.xlu0 %3692
        %3695 = vset.pattern.permute.xlu0 2
        %3696 = vperm.xlu0 %3695, %v3518
        %v3697 = vpop.permute.xlu0 %3696
        %3699 = vset.pattern.permute.xlu0 2
        %3700 = vperm.xlu0 %3699, %v3519
        %v3701 = vpop.permute.xlu0 %3700
        %3703 = vset.pattern.permute.xlu0 2
        %3704 = vperm.xlu0 %3703, %v3520
        %v3705 = vpop.permute.xlu0 %3704
        %3707 = vset.pattern.permute.xlu0 2
        %3708 = vperm.xlu0 %3707, %v3521
        %v3709 = vpop.permute.xlu0 %3708
        %3711 = vset.pattern.permute.xlu0 2
        %3712 = vperm.xlu0 %3711, %v3522
        %v3713 = vpop.permute.xlu0 %3712
        %v3715 = vmul.f32 %v3677, %v3665
        %v3716 = vmul.f32 %v3681, %v3666
        %v3717 = vmul.f32 %v3685, %v3667
        %v3718 = vmul.f32 %v3689, %v3668
        %v3719 = vmul.f32 %v3693, %v3669
        %v3720 = vmul.f32 %v3697, %v3670
        %v3721 = vmul.f32 %v3701, %v3671
        %v3722 = vmul.f32 %v3705, %v3672
        %v3723 = vmul.f32 %v3709, %v3673
        %v3724 = vmul.f32 %v3713, %v3674
        %v3725 = vadd.f32 %v3654, %v3715
        %v3726 = vadd.f32 %v3655, %v3716
        %v3727 = vadd.f32 %v3656, %v3717
        %v3728 = vadd.f32 %v3657, %v3718
        %v3729 = vadd.f32 %v3658, %v3719
        %v3730 = vadd.f32 %v3659, %v3720
        %v3731 = vadd.f32 %v3660, %v3721
        %v3732 = vadd.f32 %v3661, %v3722
        %v3733 = vadd.f32 %v3662, %v3723
        %v3734 = vadd.f32 %v3663, %v3724
        %s3735 = scalar_lea.vmem %s10, 240
        %v3736 = vld [vmem:[%s3735] sm:$0xff]
        %v3737 = vld [vmem:[%s3735 + $0x8] sm:$0xff]
        %v3738 = vld [vmem:[%s3735 + $0x10] sm:$0xff]
        %v3739 = vld [vmem:[%s3735 + $0x18] sm:$0xff]
        %v3740 = vld [vmem:[%s3735 + $0x20] sm:$0xff]
        %v3741 = vld [vmem:[%s3735 + $0x28] sm:$0xff]
        %v3742 = vld [vmem:[%s3735 + $0x30] sm:$0xff]
        %v3743 = vld [vmem:[%s3735 + $0x38] sm:$0xff]
        %v3744 = vld [vmem:[%s3735 + $0x40] sm:$0xff]
        %v3745 = vld [vmem:[%s3735 + $0x48] sm:$0xff]
        %3746 = vset.pattern.permute.xlu0 3
        %3747 = vperm.xlu0 %3746, %v3513
        %v3748 = vpop.permute.xlu0 %3747
        %3750 = vset.pattern.permute.xlu0 3
        %3751 = vperm.xlu0 %3750, %v3514
        %v3752 = vpop.permute.xlu0 %3751
        %3754 = vset.pattern.permute.xlu0 3
        %3755 = vperm.xlu0 %3754, %v3515
        %v3756 = vpop.permute.xlu0 %3755
        %3758 = vset.pattern.permute.xlu0 3
        %3759 = vperm.xlu0 %3758, %v3516
        %v3760 = vpop.permute.xlu0 %3759
        %3762 = vset.pattern.permute.xlu0 3
        %3763 = vperm.xlu0 %3762, %v3517
        %v3764 = vpop.permute.xlu0 %3763
        %3766 = vset.pattern.permute.xlu0 3
        %3767 = vperm.xlu0 %3766, %v3518
        %v3768 = vpop.permute.xlu0 %3767
        %3770 = vset.pattern.permute.xlu0 3
        %3771 = vperm.xlu0 %3770, %v3519
        %v3772 = vpop.permute.xlu0 %3771
        %3774 = vset.pattern.permute.xlu0 3
        %3775 = vperm.xlu0 %3774, %v3520
        %v3776 = vpop.permute.xlu0 %3775
        %3778 = vset.pattern.permute.xlu0 3
        %3779 = vperm.xlu0 %3778, %v3521
        %v3780 = vpop.permute.xlu0 %3779
        %3782 = vset.pattern.permute.xlu0 3
        %3783 = vperm.xlu0 %3782, %v3522
        %v3784 = vpop.permute.xlu0 %3783
        %v3786 = vmul.f32 %v3748, %v3736
        %v3787 = vmul.f32 %v3752, %v3737
        %v3788 = vmul.f32 %v3756, %v3738
        %v3789 = vmul.f32 %v3760, %v3739
        %v3790 = vmul.f32 %v3764, %v3740
        %v3791 = vmul.f32 %v3768, %v3741
        %v3792 = vmul.f32 %v3772, %v3742
        %v3793 = vmul.f32 %v3776, %v3743
        %v3794 = vmul.f32 %v3780, %v3744
        %v3795 = vmul.f32 %v3784, %v3745
        %v3796 = vadd.f32 %v3725, %v3786
        %v3797 = vadd.f32 %v3726, %v3787
        %v3798 = vadd.f32 %v3727, %v3788
        %v3799 = vadd.f32 %v3728, %v3789
        %v3800 = vadd.f32 %v3729, %v3790
        %v3801 = vadd.f32 %v3730, %v3791
        %v3802 = vadd.f32 %v3731, %v3792
        %v3803 = vadd.f32 %v3732, %v3793
        %v3804 = vadd.f32 %v3733, %v3794
        %v3805 = vadd.f32 %v3734, %v3795
        %v3806 = vsel %vm2461, %v3796, 0.0
        %v3807 = vsel %vm2461, %v3797, 0.0
        %v3808 = vadd.f32 %v3806, %v3807
        %v3809 = vsel %vm2461, %v3798, 0.0
        %v3810 = vadd.f32 %v3808, %v3809
        %v3811 = vsel %vm2461, %v3799, 0.0
        %v3812 = vadd.f32 %v3810, %v3811
        %v3813 = vsel %vm2461, %v3800, 0.0
        %v3814 = vadd.f32 %v3812, %v3813
        %v3815 = vsel %vm2461, %v3801, 0.0
        %v3816 = vadd.f32 %v3814, %v3815
        %v3817 = vsel %vm2461, %v3802, 0.0
        %v3818 = vadd.f32 %v3816, %v3817
        %v3819 = vsel %vm2461, %v3803, 0.0
        %v3820 = vadd.f32 %v3818, %v3819
        %v3821 = vsel %vm2461, %v3804, 0.0
        %v3822 = vadd.f32 %v3820, %v3821
        %v3823 = vsel %vm2461, %v3805, 0.0
        %v3824 = vadd.f32 %v3822, %v3823
        %v3825 = vrot.slane %v3824, 4
        %v3826 = vadd.f32 %v3824, %v3825
        %v3827 = vrot.slane %v3826, 2
        %v3828 = vadd.f32 %v3826, %v3827
        %v3829 = vrot.slane %v3828, 1
        %v3830 = vadd.f32 %v3828, %v3829
        %v3831 = vld [vmem:[%s11] sm:$0x1]
        %v3832 = vadd.f32 %v3830, %v3831
        %vm3833 = vcmask 516096
        %v3834 = vsel %vm3833, %v3832, -inf
        %3835 = vmax.xlane.f32.xlu0 %v3834
        %v3836 = vpop.xlane.xlu0 %3835
        %v3837 = vsub.f32 %v3832, %v3836
        %v3838 = vmul.f32 %v3837, 1.442695
        %v3839 = vpow.pop %v3838
        %v3840 = vsel %vm3833, %v3839, 0.0
        %3841 = vadd.xlane.f32.xlu0 %v3840
        %v3842 = vpop.xlane.xlu0 %3841
        %v3843 = vlog2.pop %v3842
        %v3844 = vmul.f32 %v3843, 0.6931472
        %v3845 = vsub.f32 %v3837, %v3844
        %3846 = vst.msk [vmem:[%s543] sm:$0x1] %vm3833, %v3845
        %v3847 = vld [vmem:[%s12] sm:$0xff]
        %v3848 = vld [vmem:[%s12 + $0x8] sm:$0xff]
        %v3849 = vld [vmem:[%s12 + $0x10] sm:$0xff]
        %v3850 = vld [vmem:[%s12 + $0x18] sm:$0xff]
        %v3851 = vld [vmem:[%s12 + $0x20] sm:$0xff]
        %v3852 = vld [vmem:[%s12 + $0x28] sm:$0xff]
        %v3853 = vld [vmem:[%s12 + $0x30] sm:$0xff]
        %v3854 = vld [vmem:[%s12 + $0x38] sm:$0xff]
        %v3855 = vld [vmem:[%s12 + $0x40] sm:$0xff]
        %v3856 = vld [vmem:[%s12 + $0x48] sm:$0xff]
        %3857 = vset.pattern.permute.xlu0 4
        %3858 = vperm.xlu0 %3857, %v3513
        %v3859 = vpop.permute.xlu0 %3858
        %3861 = vset.pattern.permute.xlu0 4
        %3862 = vperm.xlu0 %3861, %v3514
        %v3863 = vpop.permute.xlu0 %3862
        %3865 = vset.pattern.permute.xlu0 4
        %3866 = vperm.xlu0 %3865, %v3515
        %v3867 = vpop.permute.xlu0 %3866
        %3869 = vset.pattern.permute.xlu0 4
        %3870 = vperm.xlu0 %3869, %v3516
        %v3871 = vpop.permute.xlu0 %3870
        %3873 = vset.pattern.permute.xlu0 4
        %3874 = vperm.xlu0 %3873, %v3517
        %v3875 = vpop.permute.xlu0 %3874
        %3877 = vset.pattern.permute.xlu0 4
        %3878 = vperm.xlu0 %3877, %v3518
        %v3879 = vpop.permute.xlu0 %3878
        %3881 = vset.pattern.permute.xlu0 4
        %3882 = vperm.xlu0 %3881, %v3519
        %v3883 = vpop.permute.xlu0 %3882
        %3885 = vset.pattern.permute.xlu0 4
        %3886 = vperm.xlu0 %3885, %v3520
        %v3887 = vpop.permute.xlu0 %3886
        %3889 = vset.pattern.permute.xlu0 4
        %3890 = vperm.xlu0 %3889, %v3521
        %v3891 = vpop.permute.xlu0 %3890
        %3893 = vset.pattern.permute.xlu0 4
        %3894 = vperm.xlu0 %3893, %v3522
        %v3895 = vpop.permute.xlu0 %3894
        %v3897 = vmul.f32 %v3859, %v3847
        %v3898 = vmul.f32 %v3863, %v3848
        %v3899 = vmul.f32 %v3867, %v3849
        %v3900 = vmul.f32 %v3871, %v3850
        %v3901 = vmul.f32 %v3875, %v3851
        %v3902 = vmul.f32 %v3879, %v3852
        %v3903 = vmul.f32 %v3883, %v3853
        %v3904 = vmul.f32 %v3887, %v3854
        %v3905 = vmul.f32 %v3891, %v3855
        %v3906 = vmul.f32 %v3895, %v3856
        %s3907 = scalar_lea.vmem %s12, 80
        %v3908 = vld [vmem:[%s3907] sm:$0xff]
        %v3909 = vld [vmem:[%s3907 + $0x8] sm:$0xff]
        %v3910 = vld [vmem:[%s3907 + $0x10] sm:$0xff]
        %v3911 = vld [vmem:[%s3907 + $0x18] sm:$0xff]
        %v3912 = vld [vmem:[%s3907 + $0x20] sm:$0xff]
        %v3913 = vld [vmem:[%s3907 + $0x28] sm:$0xff]
        %v3914 = vld [vmem:[%s3907 + $0x30] sm:$0xff]
        %v3915 = vld [vmem:[%s3907 + $0x38] sm:$0xff]
        %v3916 = vld [vmem:[%s3907 + $0x40] sm:$0xff]
        %v3917 = vld [vmem:[%s3907 + $0x48] sm:$0xff]
        %3918 = vset.pattern.permute.xlu0 5
        %3919 = vperm.xlu0 %3918, %v3513
        %v3920 = vpop.permute.xlu0 %3919
        %3922 = vset.pattern.permute.xlu0 5
        %3923 = vperm.xlu0 %3922, %v3514
        %v3924 = vpop.permute.xlu0 %3923
        %3926 = vset.pattern.permute.xlu0 5
        %3927 = vperm.xlu0 %3926, %v3515
        %v3928 = vpop.permute.xlu0 %3927
        %3930 = vset.pattern.permute.xlu0 5
        %3931 = vperm.xlu0 %3930, %v3516
        %v3932 = vpop.permute.xlu0 %3931
        %3934 = vset.pattern.permute.xlu0 5
        %3935 = vperm.xlu0 %3934, %v3517
        %v3936 = vpop.permute.xlu0 %3935
        %3938 = vset.pattern.permute.xlu0 5
        %3939 = vperm.xlu0 %3938, %v3518
        %v3940 = vpop.permute.xlu0 %3939
        %3942 = vset.pattern.permute.xlu0 5
        %3943 = vperm.xlu0 %3942, %v3519
        %v3944 = vpop.permute.xlu0 %3943
        %3946 = vset.pattern.permute.xlu0 5
        %3947 = vperm.xlu0 %3946, %v3520
        %v3948 = vpop.permute.xlu0 %3947
        %3950 = vset.pattern.permute.xlu0 5
        %3951 = vperm.xlu0 %3950, %v3521
        %v3952 = vpop.permute.xlu0 %3951
        %3954 = vset.pattern.permute.xlu0 5
        %3955 = vperm.xlu0 %3954, %v3522
        %v3956 = vpop.permute.xlu0 %3955
        %v3958 = vmul.f32 %v3920, %v3908
        %v3959 = vmul.f32 %v3924, %v3909
        %v3960 = vmul.f32 %v3928, %v3910
        %v3961 = vmul.f32 %v3932, %v3911
        %v3962 = vmul.f32 %v3936, %v3912
        %v3963 = vmul.f32 %v3940, %v3913
        %v3964 = vmul.f32 %v3944, %v3914
        %v3965 = vmul.f32 %v3948, %v3915
        %v3966 = vmul.f32 %v3952, %v3916
        %v3967 = vmul.f32 %v3956, %v3917
        %v3968 = vadd.f32 %v3897, %v3958
        %v3969 = vadd.f32 %v3898, %v3959
        %v3970 = vadd.f32 %v3899, %v3960
        %v3971 = vadd.f32 %v3900, %v3961
        %v3972 = vadd.f32 %v3901, %v3962
        %v3973 = vadd.f32 %v3902, %v3963
        %v3974 = vadd.f32 %v3903, %v3964
        %v3975 = vadd.f32 %v3904, %v3965
        %v3976 = vadd.f32 %v3905, %v3966
        %v3977 = vadd.f32 %v3906, %v3967
        %v3978 = vsel %vm2461, %v3968, 0.0
        %v3979 = vsel %vm2461, %v3969, 0.0
        %v3980 = vadd.f32 %v3978, %v3979
        %v3981 = vsel %vm2461, %v3970, 0.0
        %v3982 = vadd.f32 %v3980, %v3981
        %v3983 = vsel %vm2461, %v3971, 0.0
        %v3984 = vadd.f32 %v3982, %v3983
        %v3985 = vsel %vm2461, %v3972, 0.0
        %v3986 = vadd.f32 %v3984, %v3985
        %v3987 = vsel %vm2461, %v3973, 0.0
        %v3988 = vadd.f32 %v3986, %v3987
        %v3989 = vsel %vm2461, %v3974, 0.0
        %v3990 = vadd.f32 %v3988, %v3989
        %v3991 = vsel %vm2461, %v3975, 0.0
        %v3992 = vadd.f32 %v3990, %v3991
        %v3993 = vsel %vm2461, %v3976, 0.0
        %v3994 = vadd.f32 %v3992, %v3993
        %v3995 = vsel %vm2461, %v3977, 0.0
        %v3996 = vadd.f32 %v3994, %v3995
        %v3997 = vrot.slane %v3996, 4
        %v3998 = vadd.f32 %v3996, %v3997
        %v3999 = vrot.slane %v3998, 2
        %v4000 = vadd.f32 %v3998, %v3999
        %v4001 = vrot.slane %v4000, 1
        %v4002 = vadd.f32 %v4000, %v4001
        %v4003 = vld [vmem:[%s13] sm:$0x1]
        %v4004 = vadd.f32 %v4002, %v4003
        %v4005 = vmax.f32 %v4004, 0.0
        %v4006 = vld [vmem:[%s14] sm:$0x1]
        %v4007 = vmul.f32 %v4005, %v4006
        %v4008 = vsel %vm3833, %v4007, 0.0
        %4009 = vadd.xlane.f32.xlu0 %v4008
        %v4010 = vpop.xlane.xlu0 %4009
        %v4011 = vld [vmem:[#allocation4] sm:$0x1]
        %v4012 = vadd.f32 %v4010, %v4011
        %v4013 = vtanh.pop %v4012
        %vm4014 = vcmask 0
        %4015 = vst.msk [vmem:[%s556] sm:$0x1] %vm4014, %v4013
        %s4016 = sand.u32 %s383, 1
        %s4017 = scalar_lea.sflag [#allocation6], %s4016
        %s4018 = sand.u32 %s383, 1
        %s4019 = scalar_lea.vmem [#allocation5], %s4018
        %p4020 = scmp.lt.s32.totalorder %s34, 1
        %s4021 = scalar_select %p4020, %s34, 1
        %s4022 = scalar_lea.vmem %s17, %s4021
        // Predicated region
        $region85: #{ac_forward.1} parent=83 // pred_check
          %p4023 = pneg %p393
        $region86: #{ac_forward.1} parent=83 // pred_check_branch
          %4025 = sbr.rel (%p4023) target = $region88
        $region87: #{ac_forward.1} parent=83 // pred_region
          %4027 = vsyncadd %s4017, 0
          %s4028 = scalar_lea.hbm %s16, %s34
          %s4030 = sshll.u32 %s4019, 4
          %s4031 = int_to_ptr.vmem [resolvable:$true] %s4030
          %s4032 = sshll.u32 %s4028, 4
          %s4033 = int_to_ptr.hbm [resolvable:$true] %s4032
          %4035 = dma.vmem_to_hbm [thread:$0]  %s4031, 16, %s4033, %s4017
        $region88: #{ac_forward.1} parent=83 // pred_fallthru
          _
        // Predicated region
        $region89: #{ac_forward.1} parent=83 // pred_check
          %p4036 = pneg %p419
        $region90: #{ac_forward.1} parent=83 // pred_check_branch
          %4038 = sbr.rel (%p4036) target = $region92
        $region91: #{ac_forward.1} parent=83 // pred_region
          _
        $region92: #{ac_forward.1} parent=83 // pred_fallthru
          _
      $region84: #{ac_forward.1} parent=5 // pred_fallthru
        _
      %p4039 = scmp.le.s32.totalorder 2, %s29
      // Predicated region
      $region93: #{ac_forward.1} parent=5 // pred_check
        %p4040 = pneg %p4039
      $region94: #{ac_forward.1} parent=5 // pred_check_branch
        %4042 = sbr.rel (%p4040) target = $region96
      $region95: #{ac_forward.1} parent=5 // pred_region
        %s4043 = ssub.s32 %s29, 2
        // Predicated region
        $region97: #{ac_forward.1} parent=95 // pred_check
          %p4044 = pneg %p399
        $region98: #{ac_forward.1} parent=95 // pred_check_branch
          %4046 = sbr.rel (%p4044) target = $region100
        $region99: #{ac_forward.1} parent=95 // pred_region
          %s4047 = sand.u32 %s384, 1
          %s4048 = scalar_lea.sflag [#allocation6], %s4047
          %s4049 = sand.u32 %s384, 1
          %s4050 = scalar_lea.vmem [#allocation5], %s4049
          %4052 = dma.done %s4048, 16
        $region100: #{ac_forward.1} parent=95 // pred_fallthru
          _
        // Predicated region
        $region101: #{ac_forward.1} parent=95 // pred_check
          %p4053 = pneg %p425
        $region102: #{ac_forward.1} parent=95 // pred_check_branch
          %4055 = sbr.rel (%p4053) target = $region104
        $region103: #{ac_forward.1} parent=95 // pred_region
          %p4056 = scmp.lt.s32.totalorder %s35, 1
          %s4057 = scalar_select %p4056, %s35, 1
          %s4058 = scalar_lea.vmem %s17, %s4057
        $region104: #{ac_forward.1} parent=95 // pred_fallthru
          _
      $region96: #{ac_forward.1} parent=5 // pred_fallthru
        _
    $region6: #{ac_forward.1} parent=1 // loop_footer
      %s33 = sadd.s32 1, %s29
    $region7: #{ac_forward.1} parent=1 // loop_footer_branch
      %28 = sbr.rel target = $region3
    $region8: #{ac_forward.1} parent=1 // loop_exit
      _
    %4059 = vsyncpa [#allocation6], 1
    %s4060 = scalar_lea.sflag [#allocation6], 1
    %4061 = vsyncpa %s4060, 1

</llo_original>
